<compile_context>
chip_gen: v7x
topology: tpu7x:2x2x1
jax: 0.10.0
libtpu: 0.0.40
codegen_flags: <defaults>
</compile_context>

<pallas_src>
import math
import functools

import jax
import jax.numpy as jnp
from jax import lax
from jax.experimental import pallas as pl
from jax.experimental.pallas import tpu as pltpu


def self_attention_kernel(x_ref, w_qkv_ref, b_qkv_ref, o_ref, qkv_ref, *,
                          batch, seq, seq_pad, d_model):
    B, S, SP, D = batch, seq, seq_pad, d_model

    # Fused QKV projection over all (padded) batch rows at once:
    #   (B*SP, D) bf16 @ (D, 3D) bf16 -> (B*SP, 3D) f32 on the MXU,
    # landed in an explicit VMEM scratch (fixed home, cheap re-reads).
    qkv_ref[...] = (
        jnp.dot(x_ref[...], w_qkv_ref[...], preferred_element_type=jnp.float32)
        + b_qkv_ref[...]
    )

    scale = 1.0 / math.sqrt(D)

    # Per-batch scaled dot-product attention; B is tiny -> unrolled Python loop.
    for b in range(B):
        r0 = b * SP  # sublane-aligned start (SP is a multiple of 8)
        q = qkv_ref[pl.ds(r0, S), pl.ds(0 * D, D)]            # (S, D) f32
        k = qkv_ref[pl.ds(r0, S), pl.ds(1 * D, D)]            # (S, D) f32
        v = qkv_ref[pl.ds(r0, S), pl.ds(2 * D, D)]            # (S, D) f32

        # q @ k^T as a contraction over the last dims (no materialized k^T).
        scores = lax.dot_general(
            q, k, dimension_numbers=(((1,), (1,)), ((), ())),
            preferred_element_type=jnp.float32) * scale       # (S, S)

        # Numerically stable softmax over the key axis.
        m = jnp.max(scores, axis=-1, keepdims=True)
        e = jnp.exp(scores - m)
        denom = jnp.sum(e, axis=-1, keepdims=True)
        # approx reciprocal (EUP slot): ~2e-4 relative error, denom >= 1 after
        # max-subtraction, well inside the test tolerance.
        attn = e * pl.reciprocal(denom, approx=True)

        ctx = jnp.dot(attn, v, preferred_element_type=jnp.float32)  # (S, D)
        o_ref[b] = ctx.astype(o_ref.dtype)


def self_attention(x, w_qkv, b_qkv):
    """x: (B, S, D) f32; w_qkv: (D, 3D) bf16; b_qkv: (3D,) f32."""
    B, S, D = x.shape
    assert w_qkv.shape == (D, 3 * D)
    assert b_qkv.shape == (3 * D,)

    # Pad the per-batch row stride up to a multiple of 8 sublanes so every
    # per-batch slice in the kernel starts on an (8,128) tile boundary.
    S_PAD = -(-S // 8) * 8
    x_bf16 = x.astype(jnp.bfloat16)
    x_pad = jnp.pad(x_bf16, ((0, 0), (0, S_PAD - S), (0, 0)))
    x2d = x_pad.reshape(B * S_PAD, D)                    # (B*S_PAD, D) bf16
    b2d = b_qkv.reshape(1, 3 * D).astype(jnp.float32)    # (1, 3D) f32

    kernel = functools.partial(self_attention_kernel,
                               batch=B, seq=S, seq_pad=S_PAD, d_model=D)

    proj_flops = 2 * (B * S_PAD) * D * (3 * D)
    attn_flops = 4 * B * S * S * D
    bytes_accessed = (x2d.size * 2 + w_qkv.size * 2 + b2d.size * 4
                      + B * S * D * 4)

    return pl.pallas_call(
        kernel,
        out_shape=jax.ShapeDtypeStruct((B, S, D), x.dtype),
        in_specs=[
            pl.BlockSpec(memory_space=pltpu.MemorySpace.VMEM),   # x2d
            pl.BlockSpec(memory_space=pltpu.MemorySpace.VMEM),   # w_qkv
            pl.BlockSpec(memory_space=pltpu.MemorySpace.VMEM),   # b_qkv
        ],
        out_specs=pl.BlockSpec(memory_space=pltpu.MemorySpace.VMEM),
        scratch_shapes=[pltpu.VMEM((B * S_PAD, 3 * D), jnp.float32)],
        cost_estimate=pl.CostEstimate(flops=proj_flops + attn_flops,
                                      transcendentals=B * S * S,
                                      bytes_accessed=bytes_accessed),
    )(x2d, w_qkv, b2d)


def self_attention_ref(x, w_qkv, b_qkv):
    """Pure-JAX reference (f32 math, HIGHEST precision).

    Call with the same bf16-rounded x / w values the kernel consumes (upcast
    to f32) so the only differences are MXU pass/accumulation order and the
    approximate reciprocal.
    """
    D = x.shape[-1]
    qkv = jnp.einsum("bsd,de->bse", x, w_qkv,
                     precision=lax.Precision.HIGHEST) + b_qkv
    q, k, v = qkv[..., :D], qkv[..., D:2 * D], qkv[..., 2 * D:]
    scores = jnp.einsum("bsd,btd->bst", q, k,
                        precision=lax.Precision.HIGHEST) / math.sqrt(D)
    attn = jax.nn.softmax(scores, axis=-1)
    return jnp.einsum("bst,btd->bsd", attn, v,
                      precision=lax.Precision.HIGHEST)


if __name__ == "__main__":
    # Shapes implied by the module's usage: batch=3, n_seq=10, d_model=512.
    batch_size, n_seq, d_model = 3, 10, 512

    key = jax.random.PRNGKey(0)
    kx, kwq, kwk, kwv, kbq, kbk, kbv = jax.random.split(key, 7)

    x = jax.random.normal(kx, (batch_size, n_seq, d_model), dtype=jnp.float32)

    # Deterministic synthetic parameters (nn.Linear(d_model, d_model) x 3).
    lim = 1.0 / math.sqrt(d_model)
    wq = jax.random.uniform(kwq, (d_model, d_model), jnp.float32, -lim, lim)
    wk = jax.random.uniform(kwk, (d_model, d_model), jnp.float32, -lim, lim)
    wv = jax.random.uniform(kwv, (d_model, d_model), jnp.float32, -lim, lim)
    bq = jax.random.uniform(kbq, (d_model,), jnp.float32, -lim, lim)
    bk = jax.random.uniform(kbk, (d_model,), jnp.float32, -lim, lim)
    bv = jax.random.uniform(kbv, (d_model,), jnp.float32, -lim, lim)

    # Fuse Wq/Wk/Wv into one (D, 3D) bf16 weight, biases into one (3D,) f32.
    w_qkv = jnp.concatenate([wq, wk, wv], axis=1).astype(jnp.bfloat16)
    b_qkv = jnp.concatenate([bq, bk, bv], axis=0)

    out = self_attention(x, w_qkv, b_qkv)
    out = jax.block_until_ready(out)

    # Reference uses the SAME bf16-rounded activations and weights (upcast to
    # f32, HIGHEST precision), so the comparison only sees MXU rounding /
    # accumulation order / approx-reciprocal differences.
    x_rounded = x.astype(jnp.bfloat16).astype(jnp.float32)
    ref = self_attention_ref(x_rounded, w_qkv.astype(jnp.float32), b_qkv)

    assert out.shape == (batch_size, n_seq, d_model)
    assert jnp.allclose(out, ref, atol=2e-2, rtol=2e-2), (
        "mismatch vs reference; max abs err = "
        f"{float(jnp.max(jnp.abs(out - ref)))}")

    print("KERNEL_OK")
</pallas_src>

<mosaic_0001>
module attributes {stable_mosaic.version = 11 : i64} {
  func.func @self_attention_kernel(%arg0: memref<48x512xbf16, #tpu.memory_space<vmem>>, %arg1: memref<512x1536xbf16, #tpu.memory_space<vmem>>, %arg2: memref<1x1536xf32, #tpu.memory_space<vmem>>, %arg3: memref<3x10x512xf32, #tpu.memory_space<vmem>>, %arg4: memref<48x1536xf32, #tpu.memory_space<vmem>>) attributes {dimension_semantics = [], scalar_prefetch = 0 : i64, scratch_operands = 1 : i64, tpu.core_type = #tpu.core_type<tc>} {
    %c0 = arith.constant 0 : index
    %c0_0 = arith.constant 0 : index
    %0 = vector.load %arg0[%c0, %c0_0] : memref<48x512xbf16, #tpu.memory_space<vmem>>, vector<48x512xbf16>
    %c0_1 = arith.constant 0 : index
    %c0_2 = arith.constant 0 : index
    %1 = vector.load %arg1[%c0_1, %c0_2] : memref<512x1536xbf16, #tpu.memory_space<vmem>>, vector<512x1536xbf16>
    %cst = arith.constant dense<0.000000e+00> : vector<48x1536xf32>
    %2 = tpu.matmul %0, %1, %cst {dimension_numbers = #tpu.dot_dimension_numbers<[1], [0], [0], [1], [0, 0, 1, 1], [], []>} : vector<48x512xbf16>, vector<512x1536xbf16>, vector<48x1536xf32> -> vector<48x1536xf32>
    %c0_3 = arith.constant 0 : index
    %c0_4 = arith.constant 0 : index
    %3 = vector.load %arg2[%c0_3, %c0_4] : memref<1x1536xf32, #tpu.memory_space<vmem>>, vector<1x1536xf32>
    %4 = vector.broadcast %3 : vector<1x1536xf32> to vector<48x1536xf32>
    %5 = arith.addf %2, %4 : vector<48x1536xf32>
    %c0_5 = arith.constant 0 : index
    %c0_6 = arith.constant 0 : index
    %6 = vector.load %arg4[%c0_5, %c0_6] : memref<48x1536xf32, #tpu.memory_space<vmem>>, vector<48x1536xf32>
    tpu.vector_store %arg4[%c0_5, %c0_6], %5 {strides = array<i32>} : memref<48x1536xf32, #tpu.memory_space<vmem>>, vector<48x1536xf32>,
    %c0_7 = arith.constant 0 : index
    %c0_8 = arith.constant 0 : index
    %7 = vector.load %arg4[%c0_7, %c0_8] : memref<48x1536xf32, #tpu.memory_space<vmem>>, vector<10x512xf32>
    %c0_9 = arith.constant 0 : index
    %c512 = arith.constant 512 : index
    %8 = vector.load %arg4[%c0_9, %c512] : memref<48x1536xf32, #tpu.memory_space<vmem>>, vector<10x512xf32>
    %c0_10 = arith.constant 0 : index
    %c1024 = arith.constant 1024 : index
    %9 = vector.load %arg4[%c0_10, %c1024] : memref<48x1536xf32, #tpu.memory_space<vmem>>, vector<10x512xf32>
    %cst_11 = arith.constant dense<0.000000e+00> : vector<10x10xf32>
    %10 = tpu.matmul %7, %8, %cst_11 {dimension_numbers = #tpu.dot_dimension_numbers<[1], [1], [0], [0], [0, 0, 1, 0], [], []>} : vector<10x512xf32>, vector<10x512xf32>, vector<10x10xf32> -> vector<10x10xf32>
    %cst_12 = arith.constant 0.0441941731 : f32
    %11 = vector.broadcast %cst_12 : f32 to vector<10x10xf32>
    %12 = arith.mulf %10, %11 : vector<10x10xf32>
    %cst_13 = arith.constant dense<0xFF800000> : vector<10xf32>
    %13 = vector.multi_reduction <maximumf>, %12, %cst_13 [1] : vector<10x10xf32> to vector<10xf32>
    %14 = vector.shape_cast %13 : vector<10xf32> to vector<10x1xf32>
    %15 = vector.broadcast %14 : vector<10x1xf32> to vector<10x10xf32>
    %16 = arith.subf %12, %15 : vector<10x10xf32>
    %17 = math.exp %16 : vector<10x10xf32>
    %cst_14 = arith.constant dense<0.000000e+00> : vector<10xf32>
    %18 = vector.multi_reduction <add>, %17, %cst_14 [1] : vector<10x10xf32> to vector<10xf32>
    %19 = vector.shape_cast %18 : vector<10xf32> to vector<10x1xf32>
    %20 = tpu.reciprocal %19 {approx = true} : vector<10x1xf32> -> vector<10x1xf32>
    %21 = vector.broadcast %20 : vector<10x1xf32> to vector<10x10xf32>
    %22 = arith.mulf %17, %21 : vector<10x10xf32>
    %cst_15 = arith.constant dense<0.000000e+00> : vector<10x512xf32>
    %23 = tpu.matmul %22, %9, %cst_15 {dimension_numbers = #tpu.dot_dimension_numbers<[1], [0], [0], [1], [0, 0, 1, 1], [], []>} : vector<10x10xf32>, vector<10x512xf32>, vector<10x512xf32> -> vector<10x512xf32>
    %c0_16 = arith.constant 0 : index
    %c0_17 = arith.constant 0 : index
    %c0_18 = arith.constant 0 : index
    %24 = vector.load %arg3[%c0_16, %c0_17, %c0_18] : memref<3x10x512xf32, #tpu.memory_space<vmem>>, vector<1x10x512xf32>
    %25 = vector.shape_cast %24 : vector<1x10x512xf32> to vector<10x512xf32>
    %26 = vector.shape_cast %23 : vector<10x512xf32> to vector<1x10x512xf32>
    tpu.vector_store %arg3[%c0_16, %c0_17, %c0_18], %26 {strides = array<i32>} : memref<3x10x512xf32, #tpu.memory_space<vmem>>, vector<1x10x512xf32>,
    %c16 = arith.constant 16 : index
    %c0_19 = arith.constant 0 : index
    %27 = vector.load %arg4[%c16, %c0_19] : memref<48x1536xf32, #tpu.memory_space<vmem>>, vector<10x512xf32>
    %c16_20 = arith.constant 16 : index
    %c512_21 = arith.constant 512 : index
    %28 = vector.load %arg4[%c16_20, %c512_21] : memref<48x1536xf32, #tpu.memory_space<vmem>>, vector<10x512xf32>
    %c16_22 = arith.constant 16 : index
    %c1024_23 = arith.constant 1024 : index
    %29 = vector.load %arg4[%c16_22, %c1024_23] : memref<48x1536xf32, #tpu.memory_space<vmem>>, vector<10x512xf32>
    %cst_24 = arith.constant dense<0.000000e+00> : vector<10x10xf32>
    %30 = tpu.matmul %27, %28, %cst_24 {dimension_numbers = #tpu.dot_dimension_numbers<[1], [1], [0], [0], [0, 0, 1, 0], [], []>} : vector<10x512xf32>, vector<10x512xf32>, vector<10x10xf32> -> vector<10x10xf32>
    %cst_25 = arith.constant 0.0441941731 : f32
    %31 = vector.broadcast %cst_25 : f32 to vector<10x10xf32>
    %32 = arith.mulf %30, %31 : vector<10x10xf32>
    %cst_26 = arith.constant dense<0xFF800000> : vector<10xf32>
    %33 = vector.multi_reduction <maximumf>, %32, %cst_26 [1] : vector<10x10xf32> to vector<10xf32>
    %34 = vector.shape_cast %33 : vector<10xf32> to vector<10x1xf32>
    %35 = vector.broadcast %34 : vector<10x1xf32> to vector<10x10xf32>
    %36 = arith.subf %32, %35 : vector<10x10xf32>
    %37 = math.exp %36 : vector<10x10xf32>
    %cst_27 = arith.constant dense<0.000000e+00> : vector<10xf32>
    %38 = vector.multi_reduction <add>, %37, %cst_27 [1] : vector<10x10xf32> to vector<10xf32>
    %39 = vector.shape_cast %38 : vector<10xf32> to vector<10x1xf32>
    %40 = tpu.reciprocal %39 {approx = true} : vector<10x1xf32> -> vector<10x1xf32>
    %41 = vector.broadcast %40 : vector<10x1xf32> to vector<10x10xf32>
    %42 = arith.mulf %37, %41 : vector<10x10xf32>
    %cst_28 = arith.constant dense<0.000000e+00> : vector<10x512xf32>
    %43 = tpu.matmul %42, %29, %cst_28 {dimension_numbers = #tpu.dot_dimension_numbers<[1], [0], [0], [1], [0, 0, 1, 1], [], []>} : vector<10x10xf32>, vector<10x512xf32>, vector<10x512xf32> -> vector<10x512xf32>
    %c1 = arith.constant 1 : index
    %c0_29 = arith.constant 0 : index
    %c0_30 = arith.constant 0 : index
    %44 = vector.load %arg3[%c1, %c0_29, %c0_30] : memref<3x10x512xf32, #tpu.memory_space<vmem>>, vector<1x10x512xf32>
    %45 = vector.shape_cast %44 : vector<1x10x512xf32> to vector<10x512xf32>
    %46 = vector.shape_cast %43 : vector<10x512xf32> to vector<1x10x512xf32>
    tpu.vector_store %arg3[%c1, %c0_29, %c0_30], %46 {strides = array<i32>} : memref<3x10x512xf32, #tpu.memory_space<vmem>>, vector<1x10x512xf32>,
    %c32 = arith.constant 32 : index
    %c0_31 = arith.constant 0 : index
    %47 = vector.load %arg4[%c32, %c0_31] : memref<48x1536xf32, #tpu.memory_space<vmem>>, vector<10x512xf32>
    %c32_32 = arith.constant 32 : index
    %c512_33 = arith.constant 512 : index
    %48 = vector.load %arg4[%c32_32, %c512_33] : memref<48x1536xf32, #tpu.memory_space<vmem>>, vector<10x512xf32>
    %c32_34 = arith.constant 32 : index
    %c1024_35 = arith.constant 1024 : index
    %49 = vector.load %arg4[%c32_34, %c1024_35] : memref<48x1536xf32, #tpu.memory_space<vmem>>, vector<10x512xf32>
    %cst_36 = arith.constant dense<0.000000e+00> : vector<10x10xf32>
    %50 = tpu.matmul %47, %48, %cst_36 {dimension_numbers = #tpu.dot_dimension_numbers<[1], [1], [0], [0], [0, 0, 1, 0], [], []>} : vector<10x512xf32>, vector<10x512xf32>, vector<10x10xf32> -> vector<10x10xf32>
    %cst_37 = arith.constant 0.0441941731 : f32
    %51 = vector.broadcast %cst_37 : f32 to vector<10x10xf32>
    %52 = arith.mulf %50, %51 : vector<10x10xf32>
    %cst_38 = arith.constant dense<0xFF800000> : vector<10xf32>
    %53 = vector.multi_reduction <maximumf>, %52, %cst_38 [1] : vector<10x10xf32> to vector<10xf32>
    %54 = vector.shape_cast %53 : vector<10xf32> to vector<10x1xf32>
    %55 = vector.broadcast %54 : vector<10x1xf32> to vector<10x10xf32>
    %56 = arith.subf %52, %55 : vector<10x10xf32>
    %57 = math.exp %56 : vector<10x10xf32>
    %cst_39 = arith.constant dense<0.000000e+00> : vector<10xf32>
    %58 = vector.multi_reduction <add>, %57, %cst_39 [1] : vector<10x10xf32> to vector<10xf32>
    %59 = vector.shape_cast %58 : vector<10xf32> to vector<10x1xf32>
    %60 = tpu.reciprocal %59 {approx = true} : vector<10x1xf32> -> vector<10x1xf32>
    %61 = vector.broadcast %60 : vector<10x1xf32> to vector<10x10xf32>
    %62 = arith.mulf %57, %61 : vector<10x10xf32>
    %cst_40 = arith.constant dense<0.000000e+00> : vector<10x512xf32>
    %63 = tpu.matmul %62, %49, %cst_40 {dimension_numbers = #tpu.dot_dimension_numbers<[1], [0], [0], [1], [0, 0, 1, 1], [], []>} : vector<10x10xf32>, vector<10x512xf32>, vector<10x512xf32> -> vector<10x512xf32>
    %c2 = arith.constant 2 : index
    %c0_41 = arith.constant 0 : index
    %c0_42 = arith.constant 0 : index
    %64 = vector.load %arg3[%c2, %c0_41, %c0_42] : memref<3x10x512xf32, #tpu.memory_space<vmem>>, vector<1x10x512xf32>
    %65 = vector.shape_cast %64 : vector<1x10x512xf32> to vector<10x512xf32>
    %66 = vector.shape_cast %63 : vector<10x512xf32> to vector<1x10x512xf32>
    tpu.vector_store %arg3[%c2, %c0_41, %c0_42], %66 {strides = array<i32>} : memref<3x10x512xf32, #tpu.memory_space<vmem>>, vector<1x10x512xf32>,
    return
  }
}

</mosaic_0001>

<llo_original>
// kernel: tpu_custom_call.1
$region0: #{tpu_custom_call.1}
  #allocation0 [shape = 'u32[]', space=smem, size = 0x4, offset = 0x4, fixed_abs, tag = 'smem constant byte address 0x4 - core index']
  #allocation1 [shape = 'u32[144,128]{1,0:T(1,128)}', space=vmem, size = 0x12000, scoped, tag = 'internal scratch']
  #allocation2 [shape = 'f32[48,1536]{1,0:T(8,128)}', space=vmem, size = 0x48000, scoped, tag = 'scratch operand']
  %s0 = inlined_call_operand.hbm [shape: bf16[48,512], index: 0, kind: input, shape index: {}]
  %s1 = inlined_call_operand.hbm [shape: bf16[512,1536], index: 1, kind: input, shape index: {}]
  %s2 = inlined_call_operand.hbm [shape: f32[1,1536], index: 2, kind: input, shape index: {}]
  %s3 = inlined_call_operand.vmem [shape: f32[3,10,512], index: 3, kind: output, shape index: {}]
  %s4 = sld [smem:[#allocation0]]
  $region34: #{tpu_custom_call.1} parent=0
    _
  %s6 = ssub.s32 1, %s4
  %s7 = scalar_select 0, %s6, %s4
  $region1: #{tpu_custom_call.1} parent=0
    #allocation3 [shape = 'u8[49152]{0}', space=vmem, size = 0xc000, scoped, tag = 'input window, operand 0, single buffered']
    #allocation4 [shape = 's32[1]{0}', space=sflag, size = 0x4, scoped, tag = 'scoped memory for tpu_custom_call.1']
    #allocation5 [shape = 'u8[1572864]{0}', space=vmem, size = 0x180000, scoped, tag = 'input window, operand 1, single buffered']
    #allocation6 [shape = 's32[1]{0}', space=sflag, size = 0x4, scoped, tag = 'scoped memory for tpu_custom_call.1']
    #allocation7 [shape = 'u8[6144]{0}', space=vmem, size = 0x1800, scoped, tag = 'input window, operand 2, single buffered']
    %8 = vsyncpa [#allocation4], 0
    %9 = vsyncpa [#allocation6], 0
    // Predicated region
    $region2: #{tpu_custom_call.1} parent=1 // pred_check
      _
    $region3: #{tpu_custom_call.1} parent=1 // pred_check_branch
      %11 = sbr.rel (0) target = $region5
    $region4: #{tpu_custom_call.1} parent=1 // pred_region
      %s13 = ssub.s32 1536, 1536
      %14 = vsyncadd [#allocation4], %s13
      %s15 = sshll.u32 [#allocation3], 4
      %s16 = int_to_ptr.vmem [resolvable:$true] %s15
      %21 = dma.hbm_to_vmem [thread:$0]  %s0, 1536, %s16, [#allocation4], 256, 256, 16
    $region5: #{tpu_custom_call.1} parent=1 // pred_fallthru
      _
    // Predicated region
    $region6: #{tpu_custom_call.1} parent=1 // pred_check
      _
    $region7: #{tpu_custom_call.1} parent=1 // pred_check_branch
      %23 = sbr.rel (0) target = $region9
    $region8: #{tpu_custom_call.1} parent=1 // pred_region
      %s25 = ssub.s32 49152, 49152
      %26 = vsyncadd [#allocation6], %s25
      %s27 = sshll.u32 [#allocation5], 4
      %s28 = int_to_ptr.vmem [resolvable:$true] %s27
      %33 = dma.hbm_to_vmem [thread:$0]  %s1, 49152, %s28, [#allocation6], 768, 768, 48
    $region9: #{tpu_custom_call.1} parent=1 // pred_fallthru
      _
    // Predicated region
    $region10: #{tpu_custom_call.1} parent=1 // pred_check
      _
    $region11: #{tpu_custom_call.1} parent=1 // pred_check_branch
      %35 = sbr.rel (0) target = $region13
    $region12: #{tpu_custom_call.1} parent=1 // pred_region
      %s37 = ssub.s32 192, 192
      %38 = vsyncadd [#allocation6], %s37
      %s40 = sshll.u32 [#allocation7], 4
      %s41 = int_to_ptr.vmem [resolvable:$true] %s40
      %43 = dma.hbm_to_vmem [thread:$0]  %s2, 192, %s41, [#allocation6]
    $region13: #{tpu_custom_call.1} parent=1 // pred_fallthru
      _
    // Predicated region
    $region14: #{tpu_custom_call.1} parent=1 // pred_check
      _
    $region15: #{tpu_custom_call.1} parent=1 // pred_check_branch
      %45 = sbr.rel (0) target = $region17
    $region16: #{tpu_custom_call.1} parent=1 // pred_region
      %46 = dma.done [#allocation4], 1536
    $region17: #{tpu_custom_call.1} parent=1 // pred_fallthru
      _
    // Predicated region
    $region18: #{tpu_custom_call.1} parent=1 // pred_check
      _
    $region19: #{tpu_custom_call.1} parent=1 // pred_check_branch
      %48 = sbr.rel (0) target = $region21
    $region20: #{tpu_custom_call.1} parent=1 // pred_region
      %49 = dma.done [#allocation6], 49152
    $region21: #{tpu_custom_call.1} parent=1 // pred_fallthru
      _
    // Predicated region
    $region22: #{tpu_custom_call.1} parent=1 // pred_check
      _
    $region23: #{tpu_custom_call.1} parent=1 // pred_check_branch
      %51 = sbr.rel (0) target = $region25
    $region24: #{tpu_custom_call.1} parent=1 // pred_region
      %52 = dma.done [#allocation6], 192
    $region25: #{tpu_custom_call.1} parent=1 // pred_fallthru
      _
    %v53 = vld [vmem:[#allocation3] sm:$0xff]
    %v54 = vld [vmem:[#allocation3 + $0x8] sm:$0xff]
    %v55 = vld [vmem:[#allocation3 + $0x10] sm:$0xff]
    %v56 = vld [vmem:[#allocation3 + $0x18] sm:$0xff]
    %v57 = vld [vmem:[#allocation3 + $0x20] sm:$0xff]
    %v58 = vld [vmem:[#allocation3 + $0x28] sm:$0xff]
    %v59 = vld [vmem:[#allocation3 + $0x30] sm:$0xff]
    %v60 = vld [vmem:[#allocation3 + $0x38] sm:$0xff]
    %v61 = vld [vmem:[#allocation3 + $0x40] sm:$0xff]
    %v62 = vld [vmem:[#allocation3 + $0x48] sm:$0xff]
    %v63 = vld [vmem:[#allocation3 + $0x50] sm:$0xff]
    %v64 = vld [vmem:[#allocation3 + $0x58] sm:$0xff]
    %v65 = vld [vmem:[#allocation5] sm:$0xff]
    %v66 = vld [vmem:[#allocation5 + $0x8] sm:$0xff]
    %v67 = vld [vmem:[#allocation5 + $0x10] sm:$0xff]
    %v68 = vld [vmem:[#allocation5 + $0x18] sm:$0xff]
    %v69 = vld [vmem:[#allocation5 + $0x20] sm:$0xff]
    %v70 = vld [vmem:[#allocation5 + $0x28] sm:$0xff]
    %v71 = vld [vmem:[#allocation5 + $0x30] sm:$0xff]
    %v72 = vld [vmem:[#allocation5 + $0x38] sm:$0xff]
    %v73 = vld [vmem:[#allocation5 + $0x40] sm:$0xff]
    %v74 = vld [vmem:[#allocation5 + $0x48] sm:$0xff]
    %v75 = vld [vmem:[#allocation5 + $0x50] sm:$0xff]
    %v76 = vld [vmem:[#allocation5 + $0x58] sm:$0xff]
    %v77 = vld [vmem:[#allocation5 + $0x60] sm:$0xff]
    %v78 = vld [vmem:[#allocation5 + $0x68] sm:$0xff]
    %v79 = vld [vmem:[#allocation5 + $0x70] sm:$0xff]
    %v80 = vld [vmem:[#allocation5 + $0x78] sm:$0xff]
    %v81 = vld [vmem:[#allocation5 + $0x80] sm:$0xff]
    %v82 = vld [vmem:[#allocation5 + $0x88] sm:$0xff]
    %v83 = vld [vmem:[#allocation5 + $0x90] sm:$0xff]
    %v84 = vld [vmem:[#allocation5 + $0x98] sm:$0xff]
    %v85 = vld [vmem:[#allocation5 + $0xa0] sm:$0xff]
    %v86 = vld [vmem:[#allocation5 + $0xa8] sm:$0xff]
    %v87 = vld [vmem:[#allocation5 + $0xb0] sm:$0xff]
    %v88 = vld [vmem:[#allocation5 + $0xb8] sm:$0xff]
    %v89 = vld [vmem:[#allocation5 + $0xc0] sm:$0xff]
    %v90 = vld [vmem:[#allocation5 + $0xc8] sm:$0xff]
    %v91 = vld [vmem:[#allocation5 + $0xd0] sm:$0xff]
    %v92 = vld [vmem:[#allocation5 + $0xd8] sm:$0xff]
    %v93 = vld [vmem:[#allocation5 + $0xe0] sm:$0xff]
    %v94 = vld [vmem:[#allocation5 + $0xe8] sm:$0xff]
    %v95 = vld [vmem:[#allocation5 + $0xf0] sm:$0xff]
    %v96 = vld [vmem:[#allocation5 + $0xf8] sm:$0xff]
    %v97 = vld [vmem:[#allocation5 + $0x100] sm:$0xff]
    %v98 = vld [vmem:[#allocation5 + $0x108] sm:$0xff]
    %v99 = vld [vmem:[#allocation5 + $0x110] sm:$0xff]
    %v100 = vld [vmem:[#allocation5 + $0x118] sm:$0xff]
    %v101 = vld [vmem:[#allocation5 + $0x120] sm:$0xff]
    %v102 = vld [vmem:[#allocation5 + $0x128] sm:$0xff]
    %v103 = vld [vmem:[#allocation5 + $0x130] sm:$0xff]
    %v104 = vld [vmem:[#allocation5 + $0x138] sm:$0xff]
    %v105 = vld [vmem:[#allocation5 + $0x140] sm:$0xff]
    %v106 = vld [vmem:[#allocation5 + $0x148] sm:$0xff]
    %v107 = vld [vmem:[#allocation5 + $0x150] sm:$0xff]
    %v108 = vld [vmem:[#allocation5 + $0x158] sm:$0xff]
    %v109 = vld [vmem:[#allocation5 + $0x160] sm:$0xff]
    %v110 = vld [vmem:[#allocation5 + $0x168] sm:$0xff]
    %v111 = vld [vmem:[#allocation5 + $0x170] sm:$0xff]
    %v112 = vld [vmem:[#allocation5 + $0x178] sm:$0xff]
    %v113 = vld [vmem:[#allocation5 + $0x180] sm:$0xff]
    %v114 = vld [vmem:[#allocation5 + $0x188] sm:$0xff]
    %v115 = vld [vmem:[#allocation5 + $0x190] sm:$0xff]
    %v116 = vld [vmem:[#allocation5 + $0x198] sm:$0xff]
    %v117 = vld [vmem:[#allocation5 + $0x1a0] sm:$0xff]
    %v118 = vld [vmem:[#allocation5 + $0x1a8] sm:$0xff]
    %v119 = vld [vmem:[#allocation5 + $0x1b0] sm:$0xff]
    %v120 = vld [vmem:[#allocation5 + $0x1b8] sm:$0xff]
    %v121 = vld [vmem:[#allocation5 + $0x1c0] sm:$0xff]
    %v122 = vld [vmem:[#allocation5 + $0x1c8] sm:$0xff]
    %v123 = vld [vmem:[#allocation5 + $0x1d0] sm:$0xff]
    %v124 = vld [vmem:[#allocation5 + $0x1d8] sm:$0xff]
    %v125 = vld [vmem:[#allocation5 + $0x1e0] sm:$0xff]
    %v126 = vld [vmem:[#allocation5 + $0x1e8] sm:$0xff]
    %v127 = vld [vmem:[#allocation5 + $0x1f0] sm:$0xff]
    %v128 = vld [vmem:[#allocation5 + $0x1f8] sm:$0xff]
    %v129 = vld [vmem:[#allocation5 + $0x200] sm:$0xff]
    %v130 = vld [vmem:[#allocation5 + $0x208] sm:$0xff]
    %v131 = vld [vmem:[#allocation5 + $0x210] sm:$0xff]
    %v132 = vld [vmem:[#allocation5 + $0x218] sm:$0xff]
    %v133 = vld [vmem:[#allocation5 + $0x220] sm:$0xff]
    %v134 = vld [vmem:[#allocation5 + $0x228] sm:$0xff]
    %v135 = vld [vmem:[#allocation5 + $0x230] sm:$0xff]
    %v136 = vld [vmem:[#allocation5 + $0x238] sm:$0xff]
    %v137 = vld [vmem:[#allocation5 + $0x240] sm:$0xff]
    %v138 = vld [vmem:[#allocation5 + $0x248] sm:$0xff]
    %v139 = vld [vmem:[#allocation5 + $0x250] sm:$0xff]
    %v140 = vld [vmem:[#allocation5 + $0x258] sm:$0xff]
    %v141 = vld [vmem:[#allocation5 + $0x260] sm:$0xff]
    %v142 = vld [vmem:[#allocation5 + $0x268] sm:$0xff]
    %v143 = vld [vmem:[#allocation5 + $0x270] sm:$0xff]
    %v144 = vld [vmem:[#allocation5 + $0x278] sm:$0xff]
    %v145 = vld [vmem:[#allocation5 + $0x280] sm:$0xff]
    %v146 = vld [vmem:[#allocation5 + $0x288] sm:$0xff]
    %v147 = vld [vmem:[#allocation5 + $0x290] sm:$0xff]
    %v148 = vld [vmem:[#allocation5 + $0x298] sm:$0xff]
    %v149 = vld [vmem:[#allocation5 + $0x2a0] sm:$0xff]
    %v150 = vld [vmem:[#allocation5 + $0x2a8] sm:$0xff]
    %v151 = vld [vmem:[#allocation5 + $0x2b0] sm:$0xff]
    %v152 = vld [vmem:[#allocation5 + $0x2b8] sm:$0xff]
    %v153 = vld [vmem:[#allocation5 + $0x2c0] sm:$0xff]
    %v154 = vld [vmem:[#allocation5 + $0x2c8] sm:$0xff]
    %v155 = vld [vmem:[#allocation5 + $0x2d0] sm:$0xff]
    %v156 = vld [vmem:[#allocation5 + $0x2d8] sm:$0xff]
    %v157 = vld [vmem:[#allocation5 + $0x2e0] sm:$0xff]
    %v158 = vld [vmem:[#allocation5 + $0x2e8] sm:$0xff]
    %v159 = vld [vmem:[#allocation5 + $0x2f0] sm:$0xff]
    %v160 = vld [vmem:[#allocation5 + $0x2f8] sm:$0xff]
    %v161 = vld [vmem:[#allocation5 + $0x300] sm:$0xff]
    %v162 = vld [vmem:[#allocation5 + $0x308] sm:$0xff]
    %v163 = vld [vmem:[#allocation5 + $0x310] sm:$0xff]
    %v164 = vld [vmem:[#allocation5 + $0x318] sm:$0xff]
    %v165 = vld [vmem:[#allocation5 + $0x320] sm:$0xff]
    %v166 = vld [vmem:[#allocation5 + $0x328] sm:$0xff]
    %v167 = vld [vmem:[#allocation5 + $0x330] sm:$0xff]
    %v168 = vld [vmem:[#allocation5 + $0x338] sm:$0xff]
    %v169 = vld [vmem:[#allocation5 + $0x340] sm:$0xff]
    %v170 = vld [vmem:[#allocation5 + $0x348] sm:$0xff]
    %v171 = vld [vmem:[#allocation5 + $0x350] sm:$0xff]
    %v172 = vld [vmem:[#allocation5 + $0x358] sm:$0xff]
    %v173 = vld [vmem:[#allocation5 + $0x360] sm:$0xff]
    %v174 = vld [vmem:[#allocation5 + $0x368] sm:$0xff]
    %v175 = vld [vmem:[#allocation5 + $0x370] sm:$0xff]
    %v176 = vld [vmem:[#allocation5 + $0x378] sm:$0xff]
    %v177 = vld [vmem:[#allocation5 + $0x380] sm:$0xff]
    %v178 = vld [vmem:[#allocation5 + $0x388] sm:$0xff]
    %v179 = vld [vmem:[#allocation5 + $0x390] sm:$0xff]
    %v180 = vld [vmem:[#allocation5 + $0x398] sm:$0xff]
    %v181 = vld [vmem:[#allocation5 + $0x3a0] sm:$0xff]
    %v182 = vld [vmem:[#allocation5 + $0x3a8] sm:$0xff]
    %v183 = vld [vmem:[#allocation5 + $0x3b0] sm:$0xff]
    %v184 = vld [vmem:[#allocation5 + $0x3b8] sm:$0xff]
    %v185 = vld [vmem:[#allocation5 + $0x3c0] sm:$0xff]
    %v186 = vld [vmem:[#allocation5 + $0x3c8] sm:$0xff]
    %v187 = vld [vmem:[#allocation5 + $0x3d0] sm:$0xff]
    %v188 = vld [vmem:[#allocation5 + $0x3d8] sm:$0xff]
    %v189 = vld [vmem:[#allocation5 + $0x3e0] sm:$0xff]
    %v190 = vld [vmem:[#allocation5 + $0x3e8] sm:$0xff]
    %v191 = vld [vmem:[#allocation5 + $0x3f0] sm:$0xff]
    %v192 = vld [vmem:[#allocation5 + $0x3f8] sm:$0xff]
    %v193 = vld [vmem:[#allocation5 + $0x400] sm:$0xff]
    %v194 = vld [vmem:[#allocation5 + $0x408] sm:$0xff]
    %v195 = vld [vmem:[#allocation5 + $0x410] sm:$0xff]
    %v196 = vld [vmem:[#allocation5 + $0x418] sm:$0xff]
    %v197 = vld [vmem:[#allocation5 + $0x420] sm:$0xff]
    %v198 = vld [vmem:[#allocation5 + $0x428] sm:$0xff]
    %v199 = vld [vmem:[#allocation5 + $0x430] sm:$0xff]
    %v200 = vld [vmem:[#allocation5 + $0x438] sm:$0xff]
    %v201 = vld [vmem:[#allocation5 + $0x440] sm:$0xff]
    %v202 = vld [vmem:[#allocation5 + $0x448] sm:$0xff]
    %v203 = vld [vmem:[#allocation5 + $0x450] sm:$0xff]
    %v204 = vld [vmem:[#allocation5 + $0x458] sm:$0xff]
    %v205 = vld [vmem:[#allocation5 + $0x460] sm:$0xff]
    %v206 = vld [vmem:[#allocation5 + $0x468] sm:$0xff]
    %v207 = vld [vmem:[#allocation5 + $0x470] sm:$0xff]
    %v208 = vld [vmem:[#allocation5 + $0x478] sm:$0xff]
    %v209 = vld [vmem:[#allocation5 + $0x480] sm:$0xff]
    %v210 = vld [vmem:[#allocation5 + $0x488] sm:$0xff]
    %v211 = vld [vmem:[#allocation5 + $0x490] sm:$0xff]
    %v212 = vld [vmem:[#allocation5 + $0x498] sm:$0xff]
    %v213 = vld [vmem:[#allocation5 + $0x4a0] sm:$0xff]
    %v214 = vld [vmem:[#allocation5 + $0x4a8] sm:$0xff]
    %v215 = vld [vmem:[#allocation5 + $0x4b0] sm:$0xff]
    %v216 = vld [vmem:[#allocation5 + $0x4b8] sm:$0xff]
    %v217 = vld [vmem:[#allocation5 + $0x4c0] sm:$0xff]
    %v218 = vld [vmem:[#allocation5 + $0x4c8] sm:$0xff]
    %v219 = vld [vmem:[#allocation5 + $0x4d0] sm:$0xff]
    %v220 = vld [vmem:[#allocation5 + $0x4d8] sm:$0xff]
    %v221 = vld [vmem:[#allocation5 + $0x4e0] sm:$0xff]
    %v222 = vld [vmem:[#allocation5 + $0x4e8] sm:$0xff]
    %v223 = vld [vmem:[#allocation5 + $0x4f0] sm:$0xff]
    %v224 = vld [vmem:[#allocation5 + $0x4f8] sm:$0xff]
    %v225 = vld [vmem:[#allocation5 + $0x500] sm:$0xff]
    %v226 = vld [vmem:[#allocation5 + $0x508] sm:$0xff]
    %v227 = vld [vmem:[#allocation5 + $0x510] sm:$0xff]
    %v228 = vld [vmem:[#allocation5 + $0x518] sm:$0xff]
    %v229 = vld [vmem:[#allocation5 + $0x520] sm:$0xff]
    %v230 = vld [vmem:[#allocation5 + $0x528] sm:$0xff]
    %v231 = vld [vmem:[#allocation5 + $0x530] sm:$0xff]
    %v232 = vld [vmem:[#allocation5 + $0x538] sm:$0xff]
    %v233 = vld [vmem:[#allocation5 + $0x540] sm:$0xff]
    %v234 = vld [vmem:[#allocation5 + $0x548] sm:$0xff]
    %v235 = vld [vmem:[#allocation5 + $0x550] sm:$0xff]
    %v236 = vld [vmem:[#allocation5 + $0x558] sm:$0xff]
    %v237 = vld [vmem:[#allocation5 + $0x560] sm:$0xff]
    %v238 = vld [vmem:[#allocation5 + $0x568] sm:$0xff]
    %v239 = vld [vmem:[#allocation5 + $0x570] sm:$0xff]
    %v240 = vld [vmem:[#allocation5 + $0x578] sm:$0xff]
    %v241 = vld [vmem:[#allocation5 + $0x580] sm:$0xff]
    %v242 = vld [vmem:[#allocation5 + $0x588] sm:$0xff]
    %v243 = vld [vmem:[#allocation5 + $0x590] sm:$0xff]
    %v244 = vld [vmem:[#allocation5 + $0x598] sm:$0xff]
    %v245 = vld [vmem:[#allocation5 + $0x5a0] sm:$0xff]
    %v246 = vld [vmem:[#allocation5 + $0x5a8] sm:$0xff]
    %v247 = vld [vmem:[#allocation5 + $0x5b0] sm:$0xff]
    %v248 = vld [vmem:[#allocation5 + $0x5b8] sm:$0xff]
    %v249 = vld [vmem:[#allocation5 + $0x5c0] sm:$0xff]
    %v250 = vld [vmem:[#allocation5 + $0x5c8] sm:$0xff]
    %v251 = vld [vmem:[#allocation5 + $0x5d0] sm:$0xff]
    %v252 = vld [vmem:[#allocation5 + $0x5d8] sm:$0xff]
    %v253 = vld [vmem:[#allocation5 + $0x5e0] sm:$0xff]
    %v254 = vld [vmem:[#allocation5 + $0x5e8] sm:$0xff]
    %v255 = vld [vmem:[#allocation5 + $0x5f0] sm:$0xff]
    %v256 = vld [vmem:[#allocation5 + $0x5f8] sm:$0xff]
    %v257 = vld [vmem:[#allocation5 + $0x600] sm:$0xff]
    %v258 = vld [vmem:[#allocation5 + $0x608] sm:$0xff]
    %v259 = vld [vmem:[#allocation5 + $0x610] sm:$0xff]
    %v260 = vld [vmem:[#allocation5 + $0x618] sm:$0xff]
    %v261 = vld [vmem:[#allocation5 + $0x620] sm:$0xff]
    %v262 = vld [vmem:[#allocation5 + $0x628] sm:$0xff]
    %v263 = vld [vmem:[#allocation5 + $0x630] sm:$0xff]
    %v264 = vld [vmem:[#allocation5 + $0x638] sm:$0xff]
    %v265 = vld [vmem:[#allocation5 + $0x640] sm:$0xff]
    %v266 = vld [vmem:[#allocation5 + $0x648] sm:$0xff]
    %v267 = vld [vmem:[#allocation5 + $0x650] sm:$0xff]
    %v268 = vld [vmem:[#allocation5 + $0x658] sm:$0xff]
    %v269 = vld [vmem:[#allocation5 + $0x660] sm:$0xff]
    %v270 = vld [vmem:[#allocation5 + $0x668] sm:$0xff]
    %v271 = vld [vmem:[#allocation5 + $0x670] sm:$0xff]
    %v272 = vld [vmem:[#allocation5 + $0x678] sm:$0xff]
    %v273 = vld [vmem:[#allocation5 + $0x680] sm:$0xff]
    %v274 = vld [vmem:[#allocation5 + $0x688] sm:$0xff]
    %v275 = vld [vmem:[#allocation5 + $0x690] sm:$0xff]
    %v276 = vld [vmem:[#allocation5 + $0x698] sm:$0xff]
    %v277 = vld [vmem:[#allocation5 + $0x6a0] sm:$0xff]
    %v278 = vld [vmem:[#allocation5 + $0x6a8] sm:$0xff]
    %v279 = vld [vmem:[#allocation5 + $0x6b0] sm:$0xff]
    %v280 = vld [vmem:[#allocation5 + $0x6b8] sm:$0xff]
    %v281 = vld [vmem:[#allocation5 + $0x6c0] sm:$0xff]
    %v282 = vld [vmem:[#allocation5 + $0x6c8] sm:$0xff]
    %v283 = vld [vmem:[#allocation5 + $0x6d0] sm:$0xff]
    %v284 = vld [vmem:[#allocation5 + $0x6d8] sm:$0xff]
    %v285 = vld [vmem:[#allocation5 + $0x6e0] sm:$0xff]
    %v286 = vld [vmem:[#allocation5 + $0x6e8] sm:$0xff]
    %v287 = vld [vmem:[#allocation5 + $0x6f0] sm:$0xff]
    %v288 = vld [vmem:[#allocation5 + $0x6f8] sm:$0xff]
    %v289 = vld [vmem:[#allocation5 + $0x700] sm:$0xff]
    %v290 = vld [vmem:[#allocation5 + $0x708] sm:$0xff]
    %v291 = vld [vmem:[#allocation5 + $0x710] sm:$0xff]
    %v292 = vld [vmem:[#allocation5 + $0x718] sm:$0xff]
    %v293 = vld [vmem:[#allocation5 + $0x720] sm:$0xff]
    %v294 = vld [vmem:[#allocation5 + $0x728] sm:$0xff]
    %v295 = vld [vmem:[#allocation5 + $0x730] sm:$0xff]
    %v296 = vld [vmem:[#allocation5 + $0x738] sm:$0xff]
    %v297 = vld [vmem:[#allocation5 + $0x740] sm:$0xff]
    %v298 = vld [vmem:[#allocation5 + $0x748] sm:$0xff]
    %v299 = vld [vmem:[#allocation5 + $0x750] sm:$0xff]
    %v300 = vld [vmem:[#allocation5 + $0x758] sm:$0xff]
    %v301 = vld [vmem:[#allocation5 + $0x760] sm:$0xff]
    %v302 = vld [vmem:[#allocation5 + $0x768] sm:$0xff]
    %v303 = vld [vmem:[#allocation5 + $0x770] sm:$0xff]
    %v304 = vld [vmem:[#allocation5 + $0x778] sm:$0xff]
    %v305 = vld [vmem:[#allocation5 + $0x780] sm:$0xff]
    %v306 = vld [vmem:[#allocation5 + $0x788] sm:$0xff]
    %v307 = vld [vmem:[#allocation5 + $0x790] sm:$0xff]
    %v308 = vld [vmem:[#allocation5 + $0x798] sm:$0xff]
    %v309 = vld [vmem:[#allocation5 + $0x7a0] sm:$0xff]
    %v310 = vld [vmem:[#allocation5 + $0x7a8] sm:$0xff]
    %v311 = vld [vmem:[#allocation5 + $0x7b0] sm:$0xff]
    %v312 = vld [vmem:[#allocation5 + $0x7b8] sm:$0xff]
    %v313 = vld [vmem:[#allocation5 + $0x7c0] sm:$0xff]
    %v314 = vld [vmem:[#allocation5 + $0x7c8] sm:$0xff]
    %v315 = vld [vmem:[#allocation5 + $0x7d0] sm:$0xff]
    %v316 = vld [vmem:[#allocation5 + $0x7d8] sm:$0xff]
    %v317 = vld [vmem:[#allocation5 + $0x7e0] sm:$0xff]
    %v318 = vld [vmem:[#allocation5 + $0x7e8] sm:$0xff]
    %v319 = vld [vmem:[#allocation5 + $0x7f0] sm:$0xff]
    %v320 = vld [vmem:[#allocation5 + $0x7f8] sm:$0xff]
    %v321 = vld [vmem:[#allocation5 + $0x800] sm:$0xff]
    %v322 = vld [vmem:[#allocation5 + $0x808] sm:$0xff]
    %v323 = vld [vmem:[#allocation5 + $0x810] sm:$0xff]
    %v324 = vld [vmem:[#allocation5 + $0x818] sm:$0xff]
    %v325 = vld [vmem:[#allocation5 + $0x820] sm:$0xff]
    %v326 = vld [vmem:[#allocation5 + $0x828] sm:$0xff]
    %v327 = vld [vmem:[#allocation5 + $0x830] sm:$0xff]
    %v328 = vld [vmem:[#allocation5 + $0x838] sm:$0xff]
    %v329 = vld [vmem:[#allocation5 + $0x840] sm:$0xff]
    %v330 = vld [vmem:[#allocation5 + $0x848] sm:$0xff]
    %v331 = vld [vmem:[#allocation5 + $0x850] sm:$0xff]
    %v332 = vld [vmem:[#allocation5 + $0x858] sm:$0xff]
    %v333 = vld [vmem:[#allocation5 + $0x860] sm:$0xff]
    %v334 = vld [vmem:[#allocation5 + $0x868] sm:$0xff]
    %v335 = vld [vmem:[#allocation5 + $0x870] sm:$0xff]
    %v336 = vld [vmem:[#allocation5 + $0x878] sm:$0xff]
    %v337 = vld [vmem:[#allocation5 + $0x880] sm:$0xff]
    %v338 = vld [vmem:[#allocation5 + $0x888] sm:$0xff]
    %v339 = vld [vmem:[#allocation5 + $0x890] sm:$0xff]
    %v340 = vld [vmem:[#allocation5 + $0x898] sm:$0xff]
    %v341 = vld [vmem:[#allocation5 + $0x8a0] sm:$0xff]
    %v342 = vld [vmem:[#allocation5 + $0x8a8] sm:$0xff]
    %v343 = vld [vmem:[#allocation5 + $0x8b0] sm:$0xff]
    %v344 = vld [vmem:[#allocation5 + $0x8b8] sm:$0xff]
    %v345 = vld [vmem:[#allocation5 + $0x8c0] sm:$0xff]
    %v346 = vld [vmem:[#allocation5 + $0x8c8] sm:$0xff]
    %v347 = vld [vmem:[#allocation5 + $0x8d0] sm:$0xff]
    %v348 = vld [vmem:[#allocation5 + $0x8d8] sm:$0xff]
    %v349 = vld [vmem:[#allocation5 + $0x8e0] sm:$0xff]
    %v350 = vld [vmem:[#allocation5 + $0x8e8] sm:$0xff]
    %v351 = vld [vmem:[#allocation5 + $0x8f0] sm:$0xff]
    %v352 = vld [vmem:[#allocation5 + $0x8f8] sm:$0xff]
    %v353 = vld [vmem:[#allocation5 + $0x900] sm:$0xff]
    %v354 = vld [vmem:[#allocation5 + $0x908] sm:$0xff]
    %v355 = vld [vmem:[#allocation5 + $0x910] sm:$0xff]
    %v356 = vld [vmem:[#allocation5 + $0x918] sm:$0xff]
    %v357 = vld [vmem:[#allocation5 + $0x920] sm:$0xff]
    %v358 = vld [vmem:[#allocation5 + $0x928] sm:$0xff]
    %v359 = vld [vmem:[#allocation5 + $0x930] sm:$0xff]
    %v360 = vld [vmem:[#allocation5 + $0x938] sm:$0xff]
    %v361 = vld [vmem:[#allocation5 + $0x940] sm:$0xff]
    %v362 = vld [vmem:[#allocation5 + $0x948] sm:$0xff]
    %v363 = vld [vmem:[#allocation5 + $0x950] sm:$0xff]
    %v364 = vld [vmem:[#allocation5 + $0x958] sm:$0xff]
    %v365 = vld [vmem:[#allocation5 + $0x960] sm:$0xff]
    %v366 = vld [vmem:[#allocation5 + $0x968] sm:$0xff]
    %v367 = vld [vmem:[#allocation5 + $0x970] sm:$0xff]
    %v368 = vld [vmem:[#allocation5 + $0x978] sm:$0xff]
    %v369 = vld [vmem:[#allocation5 + $0x980] sm:$0xff]
    %v370 = vld [vmem:[#allocation5 + $0x988] sm:$0xff]
    %v371 = vld [vmem:[#allocation5 + $0x990] sm:$0xff]
    %v372 = vld [vmem:[#allocation5 + $0x998] sm:$0xff]
    %v373 = vld [vmem:[#allocation5 + $0x9a0] sm:$0xff]
    %v374 = vld [vmem:[#allocation5 + $0x9a8] sm:$0xff]
    %v375 = vld [vmem:[#allocation5 + $0x9b0] sm:$0xff]
    %v376 = vld [vmem:[#allocation5 + $0x9b8] sm:$0xff]
    %v377 = vld [vmem:[#allocation5 + $0x9c0] sm:$0xff]
    %v378 = vld [vmem:[#allocation5 + $0x9c8] sm:$0xff]
    %v379 = vld [vmem:[#allocation5 + $0x9d0] sm:$0xff]
    %v380 = vld [vmem:[#allocation5 + $0x9d8] sm:$0xff]
    %v381 = vld [vmem:[#allocation5 + $0x9e0] sm:$0xff]
    %v382 = vld [vmem:[#allocation5 + $0x9e8] sm:$0xff]
    %v383 = vld [vmem:[#allocation5 + $0x9f0] sm:$0xff]
    %v384 = vld [vmem:[#allocation5 + $0x9f8] sm:$0xff]
    %v385 = vld [vmem:[#allocation5 + $0xa00] sm:$0xff]
    %v386 = vld [vmem:[#allocation5 + $0xa08] sm:$0xff]
    %v387 = vld [vmem:[#allocation5 + $0xa10] sm:$0xff]
    %v388 = vld [vmem:[#allocation5 + $0xa18] sm:$0xff]
    %v389 = vld [vmem:[#allocation5 + $0xa20] sm:$0xff]
    %v390 = vld [vmem:[#allocation5 + $0xa28] sm:$0xff]
    %v391 = vld [vmem:[#allocation5 + $0xa30] sm:$0xff]
    %v392 = vld [vmem:[#allocation5 + $0xa38] sm:$0xff]
    %v393 = vld [vmem:[#allocation5 + $0xa40] sm:$0xff]
    %v394 = vld [vmem:[#allocation5 + $0xa48] sm:$0xff]
    %v395 = vld [vmem:[#allocation5 + $0xa50] sm:$0xff]
    %v396 = vld [vmem:[#allocation5 + $0xa58] sm:$0xff]
    %v397 = vld [vmem:[#allocation5 + $0xa60] sm:$0xff]
    %v398 = vld [vmem:[#allocation5 + $0xa68] sm:$0xff]
    %v399 = vld [vmem:[#allocation5 + $0xa70] sm:$0xff]
    %v400 = vld [vmem:[#allocation5 + $0xa78] sm:$0xff]
    %v401 = vld [vmem:[#allocation5 + $0xa80] sm:$0xff]
    %v402 = vld [vmem:[#allocation5 + $0xa88] sm:$0xff]
    %v403 = vld [vmem:[#allocation5 + $0xa90] sm:$0xff]
    %v404 = vld [vmem:[#allocation5 + $0xa98] sm:$0xff]
    %v405 = vld [vmem:[#allocation5 + $0xaa0] sm:$0xff]
    %v406 = vld [vmem:[#allocation5 + $0xaa8] sm:$0xff]
    %v407 = vld [vmem:[#allocation5 + $0xab0] sm:$0xff]
    %v408 = vld [vmem:[#allocation5 + $0xab8] sm:$0xff]
    %v409 = vld [vmem:[#allocation5 + $0xac0] sm:$0xff]
    %v410 = vld [vmem:[#allocation5 + $0xac8] sm:$0xff]
    %v411 = vld [vmem:[#allocation5 + $0xad0] sm:$0xff]
    %v412 = vld [vmem:[#allocation5 + $0xad8] sm:$0xff]
    %v413 = vld [vmem:[#allocation5 + $0xae0] sm:$0xff]
    %v414 = vld [vmem:[#allocation5 + $0xae8] sm:$0xff]
    %v415 = vld [vmem:[#allocation5 + $0xaf0] sm:$0xff]
    %v416 = vld [vmem:[#allocation5 + $0xaf8] sm:$0xff]
    %v417 = vld [vmem:[#allocation5 + $0xb00] sm:$0xff]
    %v418 = vld [vmem:[#allocation5 + $0xb08] sm:$0xff]
    %v419 = vld [vmem:[#allocation5 + $0xb10] sm:$0xff]
    %v420 = vld [vmem:[#allocation5 + $0xb18] sm:$0xff]
    %v421 = vld [vmem:[#allocation5 + $0xb20] sm:$0xff]
    %v422 = vld [vmem:[#allocation5 + $0xb28] sm:$0xff]
    %v423 = vld [vmem:[#allocation5 + $0xb30] sm:$0xff]
    %v424 = vld [vmem:[#allocation5 + $0xb38] sm:$0xff]
    %v425 = vld [vmem:[#allocation5 + $0xb40] sm:$0xff]
    %v426 = vld [vmem:[#allocation5 + $0xb48] sm:$0xff]
    %v427 = vld [vmem:[#allocation5 + $0xb50] sm:$0xff]
    %v428 = vld [vmem:[#allocation5 + $0xb58] sm:$0xff]
    %v429 = vld [vmem:[#allocation5 + $0xb60] sm:$0xff]
    %v430 = vld [vmem:[#allocation5 + $0xb68] sm:$0xff]
    %v431 = vld [vmem:[#allocation5 + $0xb70] sm:$0xff]
    %v432 = vld [vmem:[#allocation5 + $0xb78] sm:$0xff]
    %v433 = vld [vmem:[#allocation5 + $0xb80] sm:$0xff]
    %v434 = vld [vmem:[#allocation5 + $0xb88] sm:$0xff]
    %v435 = vld [vmem:[#allocation5 + $0xb90] sm:$0xff]
    %v436 = vld [vmem:[#allocation5 + $0xb98] sm:$0xff]
    %v437 = vld [vmem:[#allocation5 + $0xba0] sm:$0xff]
    %v438 = vld [vmem:[#allocation5 + $0xba8] sm:$0xff]
    %v439 = vld [vmem:[#allocation5 + $0xbb0] sm:$0xff]
    %v440 = vld [vmem:[#allocation5 + $0xbb8] sm:$0xff]
    %v441 = vld [vmem:[#allocation5 + $0xbc0] sm:$0xff]
    %v442 = vld [vmem:[#allocation5 + $0xbc8] sm:$0xff]
    %v443 = vld [vmem:[#allocation5 + $0xbd0] sm:$0xff]
    %v444 = vld [vmem:[#allocation5 + $0xbd8] sm:$0xff]
    %v445 = vld [vmem:[#allocation5 + $0xbe0] sm:$0xff]
    %v446 = vld [vmem:[#allocation5 + $0xbe8] sm:$0xff]
    %v447 = vld [vmem:[#allocation5 + $0xbf0] sm:$0xff]
    %v448 = vld [vmem:[#allocation5 + $0xbf8] sm:$0xff]
    %v449 = vld [vmem:[#allocation7] sm:$0xff]
    %v450 = vld [vmem:[#allocation7 + $0x8] sm:$0xf]
    %v453 = vlaneseq
    %v454 = vshrl.u32 %v453, 7
    %v455 = vsub.s32 0, %v454
    %v456 = vrot.slane %v449, %v455
    %v457 = vlaneseq
    %v458 = vshrl.u32 %v457, 7
    %v459 = vsub.s32 1, %v458
    %v460 = vrot.slane %v449, %v459
    %v461 = vlaneseq
    %v462 = vshrl.u32 %v461, 7
    %v463 = vsub.s32 2, %v462
    %v464 = vrot.slane %v449, %v463
    %v465 = vlaneseq
    %v466 = vshrl.u32 %v465, 7
    %v467 = vsub.s32 3, %v466
    %v468 = vrot.slane %v449, %v467
    %v469 = vlaneseq
    %v470 = vshrl.u32 %v469, 7
    %v471 = vsub.s32 4, %v470
    %v472 = vrot.slane %v449, %v471
    %v473 = vlaneseq
    %v474 = vshrl.u32 %v473, 7
    %v475 = vsub.s32 5, %v474
    %v476 = vrot.slane %v449, %v475
    %v477 = vlaneseq
    %v478 = vshrl.u32 %v477, 7
    %v479 = vsub.s32 6, %v478
    %v480 = vrot.slane %v449, %v479
    %v481 = vlaneseq
    %v482 = vshrl.u32 %v481, 7
    %v483 = vsub.s32 7, %v482
    %v484 = vrot.slane %v449, %v483
    %v485 = vlaneseq
    %v486 = vshrl.u32 %v485, 7
    %v487 = vsub.s32 0, %v486
    %v488 = vrot.slane %v450, %v487
    %v489 = vlaneseq
    %v490 = vshrl.u32 %v489, 7
    %v491 = vsub.s32 1, %v490
    %v492 = vrot.slane %v450, %v491
    %v493 = vlaneseq
    %v494 = vshrl.u32 %v493, 7
    %v495 = vsub.s32 2, %v494
    %v496 = vrot.slane %v450, %v495
    %v497 = vlaneseq
    %v498 = vshrl.u32 %v497, 7
    %v499 = vsub.s32 3, %v498
    %v500 = vrot.slane %v450, %v499
    %v525 = vunpack.c.l.b16 %v53
    %v526 = vunpack.c.h.b16 %v53
    %v527 = vunpack.c.l.b16 %v54
    %v528 = vunpack.c.h.b16 %v54
    %v529 = vunpack.c.l.b16 %v55
    %v530 = vunpack.c.h.b16 %v55
    %v531 = vunpack.c.l.b16 %v56
    %v532 = vunpack.c.h.b16 %v56
    %v533 = vunpack.c.l.b16 %v57
    %v534 = vunpack.c.h.b16 %v57
    %v535 = vunpack.c.l.b16 %v58
    %v536 = vunpack.c.h.b16 %v58
    %v537 = vunpack.c.l.b16 %v59
    %v538 = vunpack.c.h.b16 %v59
    %v539 = vunpack.c.l.b16 %v60
    %v540 = vunpack.c.h.b16 %v60
    %v541 = vunpack.c.l.b16 %v61
    %v542 = vunpack.c.h.b16 %v61
    %v543 = vunpack.c.l.b16 %v62
    %v544 = vunpack.c.h.b16 %v62
    %v545 = vunpack.c.l.b16 %v63
    %v546 = vunpack.c.h.b16 %v63
    %v547 = vunpack.c.l.b16 %v64
    %v548 = vunpack.c.h.b16 %v64
    %v549 = vpack.c.b16 %v529, %v525
    %v550 = vpack.c.b16 %v530, %v526
    %v551 = vpack.c.b16 %v531, %v527
    %v552 = vpack.c.b16 %v532, %v528
    %v553 = vpack.c.b16 %v537, %v533
    %v554 = vpack.c.b16 %v538, %v534
    %v555 = vpack.c.b16 %v539, %v535
    %v556 = vpack.c.b16 %v540, %v536
    %v557 = vpack.c.b16 %v545, %v541
    %v558 = vpack.c.b16 %v546, %v542
    %v559 = vpack.c.b16 %v547, %v543
    %v560 = vpack.c.b16 %v548, %v544
    %v957 = vunpack.c.l.b16 %v65
    %v958 = vunpack.c.h.b16 %v65
    %v959 = vunpack.c.l.b16 %v66
    %v960 = vunpack.c.h.b16 %v66
    %v961 = vunpack.c.l.b16 %v67
    %v962 = vunpack.c.h.b16 %v67
    %v963 = vunpack.c.l.b16 %v68
    %v964 = vunpack.c.h.b16 %v68
    %v965 = vunpack.c.l.b16 %v69
    %v966 = vunpack.c.h.b16 %v69
    %v967 = vunpack.c.l.b16 %v70
    %v968 = vunpack.c.h.b16 %v70
    %v969 = vunpack.c.l.b16 %v71
    %v970 = vunpack.c.h.b16 %v71
    %v971 = vunpack.c.l.b16 %v72
    %v972 = vunpack.c.h.b16 %v72
    %v973 = vunpack.c.l.b16 %v73
    %v974 = vunpack.c.h.b16 %v73
    %v975 = vunpack.c.l.b16 %v74
    %v976 = vunpack.c.h.b16 %v74
    %v977 = vunpack.c.l.b16 %v75
    %v978 = vunpack.c.h.b16 %v75
    %v979 = vunpack.c.l.b16 %v76
    %v980 = vunpack.c.h.b16 %v76
    %v981 = vunpack.c.l.b16 %v77
    %v982 = vunpack.c.h.b16 %v77
    %v983 = vunpack.c.l.b16 %v78
    %v984 = vunpack.c.h.b16 %v78
    %v985 = vunpack.c.l.b16 %v79
    %v986 = vunpack.c.h.b16 %v79
    %v987 = vunpack.c.l.b16 %v80
    %v988 = vunpack.c.h.b16 %v80
    %v989 = vunpack.c.l.b16 %v81
    %v990 = vunpack.c.h.b16 %v81
    %v991 = vunpack.c.l.b16 %v82
    %v992 = vunpack.c.h.b16 %v82
    %v993 = vunpack.c.l.b16 %v83
    %v994 = vunpack.c.h.b16 %v83
    %v995 = vunpack.c.l.b16 %v84
    %v996 = vunpack.c.h.b16 %v84
    %v997 = vunpack.c.l.b16 %v85
    %v998 = vunpack.c.h.b16 %v85
    %v999 = vunpack.c.l.b16 %v86
    %v1000 = vunpack.c.h.b16 %v86
    %v1001 = vunpack.c.l.b16 %v87
    %v1002 = vunpack.c.h.b16 %v87
    %v1003 = vunpack.c.l.b16 %v88
    %v1004 = vunpack.c.h.b16 %v88
    %v1005 = vunpack.c.l.b16 %v89
    %v1006 = vunpack.c.h.b16 %v89
    %v1007 = vunpack.c.l.b16 %v90
    %v1008 = vunpack.c.h.b16 %v90
    %v1009 = vunpack.c.l.b16 %v91
    %v1010 = vunpack.c.h.b16 %v91
    %v1011 = vunpack.c.l.b16 %v92
    %v1012 = vunpack.c.h.b16 %v92
    %v1013 = vunpack.c.l.b16 %v93
    %v1014 = vunpack.c.h.b16 %v93
    %v1015 = vunpack.c.l.b16 %v94
    %v1016 = vunpack.c.h.b16 %v94
    %v1017 = vunpack.c.l.b16 %v95
    %v1018 = vunpack.c.h.b16 %v95
    %v1019 = vunpack.c.l.b16 %v96
    %v1020 = vunpack.c.h.b16 %v96
    %v1021 = vunpack.c.l.b16 %v97
    %v1022 = vunpack.c.h.b16 %v97
    %v1023 = vunpack.c.l.b16 %v98
    %v1024 = vunpack.c.h.b16 %v98
    %v1025 = vunpack.c.l.b16 %v99
    %v1026 = vunpack.c.h.b16 %v99
    %v1027 = vunpack.c.l.b16 %v100
    %v1028 = vunpack.c.h.b16 %v100
    %v1029 = vunpack.c.l.b16 %v101
    %v1030 = vunpack.c.h.b16 %v101
    %v1031 = vunpack.c.l.b16 %v102
    %v1032 = vunpack.c.h.b16 %v102
    %v1033 = vunpack.c.l.b16 %v103
    %v1034 = vunpack.c.h.b16 %v103
    %v1035 = vunpack.c.l.b16 %v104
    %v1036 = vunpack.c.h.b16 %v104
    %v1037 = vunpack.c.l.b16 %v105
    %v1038 = vunpack.c.h.b16 %v105
    %v1039 = vunpack.c.l.b16 %v106
    %v1040 = vunpack.c.h.b16 %v106
    %v1041 = vunpack.c.l.b16 %v107
    %v1042 = vunpack.c.h.b16 %v107
    %v1043 = vunpack.c.l.b16 %v108
    %v1044 = vunpack.c.h.b16 %v108
    %v1045 = vunpack.c.l.b16 %v109
    %v1046 = vunpack.c.h.b16 %v109
    %v1047 = vunpack.c.l.b16 %v110
    %v1048 = vunpack.c.h.b16 %v110
    %v1049 = vunpack.c.l.b16 %v111
    %v1050 = vunpack.c.h.b16 %v111
    %v1051 = vunpack.c.l.b16 %v112
    %v1052 = vunpack.c.h.b16 %v112
    %v1053 = vunpack.c.l.b16 %v113
    %v1054 = vunpack.c.h.b16 %v113
    %v1055 = vunpack.c.l.b16 %v114
    %v1056 = vunpack.c.h.b16 %v114
    %v1057 = vunpack.c.l.b16 %v115
    %v1058 = vunpack.c.h.b16 %v115
    %v1059 = vunpack.c.l.b16 %v116
    %v1060 = vunpack.c.h.b16 %v116
    %v1061 = vunpack.c.l.b16 %v117
    %v1062 = vunpack.c.h.b16 %v117
    %v1063 = vunpack.c.l.b16 %v118
    %v1064 = vunpack.c.h.b16 %v118
    %v1065 = vunpack.c.l.b16 %v119
    %v1066 = vunpack.c.h.b16 %v119
    %v1067 = vunpack.c.l.b16 %v120
    %v1068 = vunpack.c.h.b16 %v120
    %v1069 = vunpack.c.l.b16 %v121
    %v1070 = vunpack.c.h.b16 %v121
    %v1071 = vunpack.c.l.b16 %v122
    %v1072 = vunpack.c.h.b16 %v122
    %v1073 = vunpack.c.l.b16 %v123
    %v1074 = vunpack.c.h.b16 %v123
    %v1075 = vunpack.c.l.b16 %v124
    %v1076 = vunpack.c.h.b16 %v124
    %v1077 = vunpack.c.l.b16 %v125
    %v1078 = vunpack.c.h.b16 %v125
    %v1079 = vunpack.c.l.b16 %v126
    %v1080 = vunpack.c.h.b16 %v126
    %v1081 = vunpack.c.l.b16 %v127
    %v1082 = vunpack.c.h.b16 %v127
    %v1083 = vunpack.c.l.b16 %v128
    %v1084 = vunpack.c.h.b16 %v128
    %v1085 = vunpack.c.l.b16 %v129
    %v1086 = vunpack.c.h.b16 %v129
    %v1087 = vunpack.c.l.b16 %v130
    %v1088 = vunpack.c.h.b16 %v130
    %v1089 = vunpack.c.l.b16 %v131
    %v1090 = vunpack.c.h.b16 %v131
    %v1091 = vunpack.c.l.b16 %v132
    %v1092 = vunpack.c.h.b16 %v132
    %v1093 = vunpack.c.l.b16 %v133
    %v1094 = vunpack.c.h.b16 %v133
    %v1095 = vunpack.c.l.b16 %v134
    %v1096 = vunpack.c.h.b16 %v134
    %v1097 = vunpack.c.l.b16 %v135
    %v1098 = vunpack.c.h.b16 %v135
    %v1099 = vunpack.c.l.b16 %v136
    %v1100 = vunpack.c.h.b16 %v136
    %v1101 = vunpack.c.l.b16 %v137
    %v1102 = vunpack.c.h.b16 %v137
    %v1103 = vunpack.c.l.b16 %v138
    %v1104 = vunpack.c.h.b16 %v138
    %v1105 = vunpack.c.l.b16 %v139
    %v1106 = vunpack.c.h.b16 %v139
    %v1107 = vunpack.c.l.b16 %v140
    %v1108 = vunpack.c.h.b16 %v140
    %v1109 = vunpack.c.l.b16 %v141
    %v1110 = vunpack.c.h.b16 %v141
    %v1111 = vunpack.c.l.b16 %v142
    %v1112 = vunpack.c.h.b16 %v142
    %v1113 = vunpack.c.l.b16 %v143
    %v1114 = vunpack.c.h.b16 %v143
    %v1115 = vunpack.c.l.b16 %v144
    %v1116 = vunpack.c.h.b16 %v144
    %v1117 = vunpack.c.l.b16 %v145
    %v1118 = vunpack.c.h.b16 %v145
    %v1119 = vunpack.c.l.b16 %v146
    %v1120 = vunpack.c.h.b16 %v146
    %v1121 = vunpack.c.l.b16 %v147
    %v1122 = vunpack.c.h.b16 %v147
    %v1123 = vunpack.c.l.b16 %v148
    %v1124 = vunpack.c.h.b16 %v148
    %v1125 = vunpack.c.l.b16 %v149
    %v1126 = vunpack.c.h.b16 %v149
    %v1127 = vunpack.c.l.b16 %v150
    %v1128 = vunpack.c.h.b16 %v150
    %v1129 = vunpack.c.l.b16 %v151
    %v1130 = vunpack.c.h.b16 %v151
    %v1131 = vunpack.c.l.b16 %v152
    %v1132 = vunpack.c.h.b16 %v152
    %v1133 = vunpack.c.l.b16 %v153
    %v1134 = vunpack.c.h.b16 %v153
    %v1135 = vunpack.c.l.b16 %v154
    %v1136 = vunpack.c.h.b16 %v154
    %v1137 = vunpack.c.l.b16 %v155
    %v1138 = vunpack.c.h.b16 %v155
    %v1139 = vunpack.c.l.b16 %v156
    %v1140 = vunpack.c.h.b16 %v156
    %v1141 = vunpack.c.l.b16 %v157
    %v1142 = vunpack.c.h.b16 %v157
    %v1143 = vunpack.c.l.b16 %v158
    %v1144 = vunpack.c.h.b16 %v158
    %v1145 = vunpack.c.l.b16 %v159
    %v1146 = vunpack.c.h.b16 %v159
    %v1147 = vunpack.c.l.b16 %v160
    %v1148 = vunpack.c.h.b16 %v160
    %v1149 = vunpack.c.l.b16 %v161
    %v1150 = vunpack.c.h.b16 %v161
    %v1151 = vunpack.c.l.b16 %v162
    %v1152 = vunpack.c.h.b16 %v162
    %v1153 = vunpack.c.l.b16 %v163
    %v1154 = vunpack.c.h.b16 %v163
    %v1155 = vunpack.c.l.b16 %v164
    %v1156 = vunpack.c.h.b16 %v164
    %v1157 = vunpack.c.l.b16 %v165
    %v1158 = vunpack.c.h.b16 %v165
    %v1159 = vunpack.c.l.b16 %v166
    %v1160 = vunpack.c.h.b16 %v166
    %v1161 = vunpack.c.l.b16 %v167
    %v1162 = vunpack.c.h.b16 %v167
    %v1163 = vunpack.c.l.b16 %v168
    %v1164 = vunpack.c.h.b16 %v168
    %v1165 = vunpack.c.l.b16 %v169
    %v1166 = vunpack.c.h.b16 %v169
    %v1167 = vunpack.c.l.b16 %v170
    %v1168 = vunpack.c.h.b16 %v170
    %v1169 = vunpack.c.l.b16 %v171
    %v1170 = vunpack.c.h.b16 %v171
    %v1171 = vunpack.c.l.b16 %v172
    %v1172 = vunpack.c.h.b16 %v172
    %v1173 = vunpack.c.l.b16 %v173
    %v1174 = vunpack.c.h.b16 %v173
    %v1175 = vunpack.c.l.b16 %v174
    %v1176 = vunpack.c.h.b16 %v174
    %v1177 = vunpack.c.l.b16 %v175
    %v1178 = vunpack.c.h.b16 %v175
    %v1179 = vunpack.c.l.b16 %v176
    %v1180 = vunpack.c.h.b16 %v176
    %v1181 = vunpack.c.l.b16 %v177
    %v1182 = vunpack.c.h.b16 %v177
    %v1183 = vunpack.c.l.b16 %v178
    %v1184 = vunpack.c.h.b16 %v178
    %v1185 = vunpack.c.l.b16 %v179
    %v1186 = vunpack.c.h.b16 %v179
    %v1187 = vunpack.c.l.b16 %v180
    %v1188 = vunpack.c.h.b16 %v180
    %v1189 = vunpack.c.l.b16 %v181
    %v1190 = vunpack.c.h.b16 %v181
    %v1191 = vunpack.c.l.b16 %v182
    %v1192 = vunpack.c.h.b16 %v182
    %v1193 = vunpack.c.l.b16 %v183
    %v1194 = vunpack.c.h.b16 %v183
    %v1195 = vunpack.c.l.b16 %v184
    %v1196 = vunpack.c.h.b16 %v184
    %v1197 = vunpack.c.l.b16 %v185
    %v1198 = vunpack.c.h.b16 %v185
    %v1199 = vunpack.c.l.b16 %v186
    %v1200 = vunpack.c.h.b16 %v186
    %v1201 = vunpack.c.l.b16 %v187
    %v1202 = vunpack.c.h.b16 %v187
    %v1203 = vunpack.c.l.b16 %v188
    %v1204 = vunpack.c.h.b16 %v188
    %v1205 = vunpack.c.l.b16 %v189
    %v1206 = vunpack.c.h.b16 %v189
    %v1207 = vunpack.c.l.b16 %v190
    %v1208 = vunpack.c.h.b16 %v190
    %v1209 = vunpack.c.l.b16 %v191
    %v1210 = vunpack.c.h.b16 %v191
    %v1211 = vunpack.c.l.b16 %v192
    %v1212 = vunpack.c.h.b16 %v192
    %v1213 = vunpack.c.l.b16 %v193
    %v1214 = vunpack.c.h.b16 %v193
    %v1215 = vunpack.c.l.b16 %v194
    %v1216 = vunpack.c.h.b16 %v194
    %v1217 = vunpack.c.l.b16 %v195
    %v1218 = vunpack.c.h.b16 %v195
    %v1219 = vunpack.c.l.b16 %v196
    %v1220 = vunpack.c.h.b16 %v196
    %v1221 = vunpack.c.l.b16 %v197
    %v1222 = vunpack.c.h.b16 %v197
    %v1223 = vunpack.c.l.b16 %v198
    %v1224 = vunpack.c.h.b16 %v198
    %v1225 = vunpack.c.l.b16 %v199
    %v1226 = vunpack.c.h.b16 %v199
    %v1227 = vunpack.c.l.b16 %v200
    %v1228 = vunpack.c.h.b16 %v200
    %v1229 = vunpack.c.l.b16 %v201
    %v1230 = vunpack.c.h.b16 %v201
    %v1231 = vunpack.c.l.b16 %v202
    %v1232 = vunpack.c.h.b16 %v202
    %v1233 = vunpack.c.l.b16 %v203
    %v1234 = vunpack.c.h.b16 %v203
    %v1235 = vunpack.c.l.b16 %v204
    %v1236 = vunpack.c.h.b16 %v204
    %v1237 = vunpack.c.l.b16 %v205
    %v1238 = vunpack.c.h.b16 %v205
    %v1239 = vunpack.c.l.b16 %v206
    %v1240 = vunpack.c.h.b16 %v206
    %v1241 = vunpack.c.l.b16 %v207
    %v1242 = vunpack.c.h.b16 %v207
    %v1243 = vunpack.c.l.b16 %v208
    %v1244 = vunpack.c.h.b16 %v208
    %v1245 = vunpack.c.l.b16 %v209
    %v1246 = vunpack.c.h.b16 %v209
    %v1247 = vunpack.c.l.b16 %v210
    %v1248 = vunpack.c.h.b16 %v210
    %v1249 = vunpack.c.l.b16 %v211
    %v1250 = vunpack.c.h.b16 %v211
    %v1251 = vunpack.c.l.b16 %v212
    %v1252 = vunpack.c.h.b16 %v212
    %v1253 = vunpack.c.l.b16 %v213
    %v1254 = vunpack.c.h.b16 %v213
    %v1255 = vunpack.c.l.b16 %v214
    %v1256 = vunpack.c.h.b16 %v214
    %v1257 = vunpack.c.l.b16 %v215
    %v1258 = vunpack.c.h.b16 %v215
    %v1259 = vunpack.c.l.b16 %v216
    %v1260 = vunpack.c.h.b16 %v216
    %v1261 = vunpack.c.l.b16 %v217
    %v1262 = vunpack.c.h.b16 %v217
    %v1263 = vunpack.c.l.b16 %v218
    %v1264 = vunpack.c.h.b16 %v218
    %v1265 = vunpack.c.l.b16 %v219
    %v1266 = vunpack.c.h.b16 %v219
    %v1267 = vunpack.c.l.b16 %v220
    %v1268 = vunpack.c.h.b16 %v220
    %v1269 = vunpack.c.l.b16 %v221
    %v1270 = vunpack.c.h.b16 %v221
    %v1271 = vunpack.c.l.b16 %v222
    %v1272 = vunpack.c.h.b16 %v222
    %v1273 = vunpack.c.l.b16 %v223
    %v1274 = vunpack.c.h.b16 %v223
    %v1275 = vunpack.c.l.b16 %v224
    %v1276 = vunpack.c.h.b16 %v224
    %v1277 = vunpack.c.l.b16 %v225
    %v1278 = vunpack.c.h.b16 %v225
    %v1279 = vunpack.c.l.b16 %v226
    %v1280 = vunpack.c.h.b16 %v226
    %v1281 = vunpack.c.l.b16 %v227
    %v1282 = vunpack.c.h.b16 %v227
    %v1283 = vunpack.c.l.b16 %v228
    %v1284 = vunpack.c.h.b16 %v228
    %v1285 = vunpack.c.l.b16 %v229
    %v1286 = vunpack.c.h.b16 %v229
    %v1287 = vunpack.c.l.b16 %v230
    %v1288 = vunpack.c.h.b16 %v230
    %v1289 = vunpack.c.l.b16 %v231
    %v1290 = vunpack.c.h.b16 %v231
    %v1291 = vunpack.c.l.b16 %v232
    %v1292 = vunpack.c.h.b16 %v232
    %v1293 = vunpack.c.l.b16 %v233
    %v1294 = vunpack.c.h.b16 %v233
    %v1295 = vunpack.c.l.b16 %v234
    %v1296 = vunpack.c.h.b16 %v234
    %v1297 = vunpack.c.l.b16 %v235
    %v1298 = vunpack.c.h.b16 %v235
    %v1299 = vunpack.c.l.b16 %v236
    %v1300 = vunpack.c.h.b16 %v236
    %v1301 = vunpack.c.l.b16 %v237
    %v1302 = vunpack.c.h.b16 %v237
    %v1303 = vunpack.c.l.b16 %v238
    %v1304 = vunpack.c.h.b16 %v238
    %v1305 = vunpack.c.l.b16 %v239
    %v1306 = vunpack.c.h.b16 %v239
    %v1307 = vunpack.c.l.b16 %v240
    %v1308 = vunpack.c.h.b16 %v240
    %v1309 = vunpack.c.l.b16 %v241
    %v1310 = vunpack.c.h.b16 %v241
    %v1311 = vunpack.c.l.b16 %v242
    %v1312 = vunpack.c.h.b16 %v242
    %v1313 = vunpack.c.l.b16 %v243
    %v1314 = vunpack.c.h.b16 %v243
    %v1315 = vunpack.c.l.b16 %v244
    %v1316 = vunpack.c.h.b16 %v244
    %v1317 = vunpack.c.l.b16 %v245
    %v1318 = vunpack.c.h.b16 %v245
    %v1319 = vunpack.c.l.b16 %v246
    %v1320 = vunpack.c.h.b16 %v246
    %v1321 = vunpack.c.l.b16 %v247
    %v1322 = vunpack.c.h.b16 %v247
    %v1323 = vunpack.c.l.b16 %v248
    %v1324 = vunpack.c.h.b16 %v248
    %v1325 = vunpack.c.l.b16 %v249
    %v1326 = vunpack.c.h.b16 %v249
    %v1327 = vunpack.c.l.b16 %v250
    %v1328 = vunpack.c.h.b16 %v250
    %v1329 = vunpack.c.l.b16 %v251
    %v1330 = vunpack.c.h.b16 %v251
    %v1331 = vunpack.c.l.b16 %v252
    %v1332 = vunpack.c.h.b16 %v252
    %v1333 = vunpack.c.l.b16 %v253
    %v1334 = vunpack.c.h.b16 %v253
    %v1335 = vunpack.c.l.b16 %v254
    %v1336 = vunpack.c.h.b16 %v254
    %v1337 = vunpack.c.l.b16 %v255
    %v1338 = vunpack.c.h.b16 %v255
    %v1339 = vunpack.c.l.b16 %v256
    %v1340 = vunpack.c.h.b16 %v256
    %v1341 = vunpack.c.l.b16 %v257
    %v1342 = vunpack.c.h.b16 %v257
    %v1343 = vunpack.c.l.b16 %v258
    %v1344 = vunpack.c.h.b16 %v258
    %v1345 = vunpack.c.l.b16 %v259
    %v1346 = vunpack.c.h.b16 %v259
    %v1347 = vunpack.c.l.b16 %v260
    %v1348 = vunpack.c.h.b16 %v260
    %v1349 = vunpack.c.l.b16 %v261
    %v1350 = vunpack.c.h.b16 %v261
    %v1351 = vunpack.c.l.b16 %v262
    %v1352 = vunpack.c.h.b16 %v262
    %v1353 = vunpack.c.l.b16 %v263
    %v1354 = vunpack.c.h.b16 %v263
    %v1355 = vunpack.c.l.b16 %v264
    %v1356 = vunpack.c.h.b16 %v264
    %v1357 = vunpack.c.l.b16 %v265
    %v1358 = vunpack.c.h.b16 %v265
    %v1359 = vunpack.c.l.b16 %v266
    %v1360 = vunpack.c.h.b16 %v266
    %v1361 = vunpack.c.l.b16 %v267
    %v1362 = vunpack.c.h.b16 %v267
    %v1363 = vunpack.c.l.b16 %v268
    %v1364 = vunpack.c.h.b16 %v268
    %v1365 = vunpack.c.l.b16 %v269
    %v1366 = vunpack.c.h.b16 %v269
    %v1367 = vunpack.c.l.b16 %v270
    %v1368 = vunpack.c.h.b16 %v270
    %v1369 = vunpack.c.l.b16 %v271
    %v1370 = vunpack.c.h.b16 %v271
    %v1371 = vunpack.c.l.b16 %v272
    %v1372 = vunpack.c.h.b16 %v272
    %v1373 = vunpack.c.l.b16 %v273
    %v1374 = vunpack.c.h.b16 %v273
    %v1375 = vunpack.c.l.b16 %v274
    %v1376 = vunpack.c.h.b16 %v274
    %v1377 = vunpack.c.l.b16 %v275
    %v1378 = vunpack.c.h.b16 %v275
    %v1379 = vunpack.c.l.b16 %v276
    %v1380 = vunpack.c.h.b16 %v276
    %v1381 = vunpack.c.l.b16 %v277
    %v1382 = vunpack.c.h.b16 %v277
    %v1383 = vunpack.c.l.b16 %v278
    %v1384 = vunpack.c.h.b16 %v278
    %v1385 = vunpack.c.l.b16 %v279
    %v1386 = vunpack.c.h.b16 %v279
    %v1387 = vunpack.c.l.b16 %v280
    %v1388 = vunpack.c.h.b16 %v280
    %v1389 = vunpack.c.l.b16 %v281
    %v1390 = vunpack.c.h.b16 %v281
    %v1391 = vunpack.c.l.b16 %v282
    %v1392 = vunpack.c.h.b16 %v282
    %v1393 = vunpack.c.l.b16 %v283
    %v1394 = vunpack.c.h.b16 %v283
    %v1395 = vunpack.c.l.b16 %v284
    %v1396 = vunpack.c.h.b16 %v284
    %v1397 = vunpack.c.l.b16 %v285
    %v1398 = vunpack.c.h.b16 %v285
    %v1399 = vunpack.c.l.b16 %v286
    %v1400 = vunpack.c.h.b16 %v286
    %v1401 = vunpack.c.l.b16 %v287
    %v1402 = vunpack.c.h.b16 %v287
    %v1403 = vunpack.c.l.b16 %v288
    %v1404 = vunpack.c.h.b16 %v288
    %v1405 = vunpack.c.l.b16 %v289
    %v1406 = vunpack.c.h.b16 %v289
    %v1407 = vunpack.c.l.b16 %v290
    %v1408 = vunpack.c.h.b16 %v290
    %v1409 = vunpack.c.l.b16 %v291
    %v1410 = vunpack.c.h.b16 %v291
    %v1411 = vunpack.c.l.b16 %v292
    %v1412 = vunpack.c.h.b16 %v292
    %v1413 = vunpack.c.l.b16 %v293
    %v1414 = vunpack.c.h.b16 %v293
    %v1415 = vunpack.c.l.b16 %v294
    %v1416 = vunpack.c.h.b16 %v294
    %v1417 = vunpack.c.l.b16 %v295
    %v1418 = vunpack.c.h.b16 %v295
    %v1419 = vunpack.c.l.b16 %v296
    %v1420 = vunpack.c.h.b16 %v296
    %v1421 = vunpack.c.l.b16 %v297
    %v1422 = vunpack.c.h.b16 %v297
    %v1423 = vunpack.c.l.b16 %v298
    %v1424 = vunpack.c.h.b16 %v298
    %v1425 = vunpack.c.l.b16 %v299
    %v1426 = vunpack.c.h.b16 %v299
    %v1427 = vunpack.c.l.b16 %v300
    %v1428 = vunpack.c.h.b16 %v300
    %v1429 = vunpack.c.l.b16 %v301
    %v1430 = vunpack.c.h.b16 %v301
    %v1431 = vunpack.c.l.b16 %v302
    %v1432 = vunpack.c.h.b16 %v302
    %v1433 = vunpack.c.l.b16 %v303
    %v1434 = vunpack.c.h.b16 %v303
    %v1435 = vunpack.c.l.b16 %v304
    %v1436 = vunpack.c.h.b16 %v304
    %v1437 = vunpack.c.l.b16 %v305
    %v1438 = vunpack.c.h.b16 %v305
    %v1439 = vunpack.c.l.b16 %v306
    %v1440 = vunpack.c.h.b16 %v306
    %v1441 = vunpack.c.l.b16 %v307
    %v1442 = vunpack.c.h.b16 %v307
    %v1443 = vunpack.c.l.b16 %v308
    %v1444 = vunpack.c.h.b16 %v308
    %v1445 = vunpack.c.l.b16 %v309
    %v1446 = vunpack.c.h.b16 %v309
    %v1447 = vunpack.c.l.b16 %v310
    %v1448 = vunpack.c.h.b16 %v310
    %v1449 = vunpack.c.l.b16 %v311
    %v1450 = vunpack.c.h.b16 %v311
    %v1451 = vunpack.c.l.b16 %v312
    %v1452 = vunpack.c.h.b16 %v312
    %v1453 = vunpack.c.l.b16 %v313
    %v1454 = vunpack.c.h.b16 %v313
    %v1455 = vunpack.c.l.b16 %v314
    %v1456 = vunpack.c.h.b16 %v314
    %v1457 = vunpack.c.l.b16 %v315
    %v1458 = vunpack.c.h.b16 %v315
    %v1459 = vunpack.c.l.b16 %v316
    %v1460 = vunpack.c.h.b16 %v316
    %v1461 = vunpack.c.l.b16 %v317
    %v1462 = vunpack.c.h.b16 %v317
    %v1463 = vunpack.c.l.b16 %v318
    %v1464 = vunpack.c.h.b16 %v318
    %v1465 = vunpack.c.l.b16 %v319
    %v1466 = vunpack.c.h.b16 %v319
    %v1467 = vunpack.c.l.b16 %v320
    %v1468 = vunpack.c.h.b16 %v320
    %v1469 = vunpack.c.l.b16 %v321
    %v1470 = vunpack.c.h.b16 %v321
    %v1471 = vunpack.c.l.b16 %v322
    %v1472 = vunpack.c.h.b16 %v322
    %v1473 = vunpack.c.l.b16 %v323
    %v1474 = vunpack.c.h.b16 %v323
    %v1475 = vunpack.c.l.b16 %v324
    %v1476 = vunpack.c.h.b16 %v324
    %v1477 = vunpack.c.l.b16 %v325
    %v1478 = vunpack.c.h.b16 %v325
    %v1479 = vunpack.c.l.b16 %v326
    %v1480 = vunpack.c.h.b16 %v326
    %v1481 = vunpack.c.l.b16 %v327
    %v1482 = vunpack.c.h.b16 %v327
    %v1483 = vunpack.c.l.b16 %v328
    %v1484 = vunpack.c.h.b16 %v328
    %v1485 = vunpack.c.l.b16 %v329
    %v1486 = vunpack.c.h.b16 %v329
    %v1487 = vunpack.c.l.b16 %v330
    %v1488 = vunpack.c.h.b16 %v330
    %v1489 = vunpack.c.l.b16 %v331
    %v1490 = vunpack.c.h.b16 %v331
    %v1491 = vunpack.c.l.b16 %v332
    %v1492 = vunpack.c.h.b16 %v332
    %v1493 = vunpack.c.l.b16 %v333
    %v1494 = vunpack.c.h.b16 %v333
    %v1495 = vunpack.c.l.b16 %v334
    %v1496 = vunpack.c.h.b16 %v334
    %v1497 = vunpack.c.l.b16 %v335
    %v1498 = vunpack.c.h.b16 %v335
    %v1499 = vunpack.c.l.b16 %v336
    %v1500 = vunpack.c.h.b16 %v336
    %v1501 = vunpack.c.l.b16 %v337
    %v1502 = vunpack.c.h.b16 %v337
    %v1503 = vunpack.c.l.b16 %v338
    %v1504 = vunpack.c.h.b16 %v338
    %v1505 = vunpack.c.l.b16 %v339
    %v1506 = vunpack.c.h.b16 %v339
    %v1507 = vunpack.c.l.b16 %v340
    %v1508 = vunpack.c.h.b16 %v340
    %v1509 = vunpack.c.l.b16 %v341
    %v1510 = vunpack.c.h.b16 %v341
    %v1511 = vunpack.c.l.b16 %v342
    %v1512 = vunpack.c.h.b16 %v342
    %v1513 = vunpack.c.l.b16 %v343
    %v1514 = vunpack.c.h.b16 %v343
    %v1515 = vunpack.c.l.b16 %v344
    %v1516 = vunpack.c.h.b16 %v344
    %v1517 = vunpack.c.l.b16 %v345
    %v1518 = vunpack.c.h.b16 %v345
    %v1519 = vunpack.c.l.b16 %v346
    %v1520 = vunpack.c.h.b16 %v346
    %v1521 = vunpack.c.l.b16 %v347
    %v1522 = vunpack.c.h.b16 %v347
    %v1523 = vunpack.c.l.b16 %v348
    %v1524 = vunpack.c.h.b16 %v348
    %v1525 = vunpack.c.l.b16 %v349
    %v1526 = vunpack.c.h.b16 %v349
    %v1527 = vunpack.c.l.b16 %v350
    %v1528 = vunpack.c.h.b16 %v350
    %v1529 = vunpack.c.l.b16 %v351
    %v1530 = vunpack.c.h.b16 %v351
    %v1531 = vunpack.c.l.b16 %v352
    %v1532 = vunpack.c.h.b16 %v352
    %v1533 = vunpack.c.l.b16 %v353
    %v1534 = vunpack.c.h.b16 %v353
    %v1535 = vunpack.c.l.b16 %v354
    %v1536 = vunpack.c.h.b16 %v354
    %v1537 = vunpack.c.l.b16 %v355
    %v1538 = vunpack.c.h.b16 %v355
    %v1539 = vunpack.c.l.b16 %v356
    %v1540 = vunpack.c.h.b16 %v356
    %v1541 = vunpack.c.l.b16 %v357
    %v1542 = vunpack.c.h.b16 %v357
    %v1543 = vunpack.c.l.b16 %v358
    %v1544 = vunpack.c.h.b16 %v358
    %v1545 = vunpack.c.l.b16 %v359
    %v1546 = vunpack.c.h.b16 %v359
    %v1547 = vunpack.c.l.b16 %v360
    %v1548 = vunpack.c.h.b16 %v360
    %v1549 = vunpack.c.l.b16 %v361
    %v1550 = vunpack.c.h.b16 %v361
    %v1551 = vunpack.c.l.b16 %v362
    %v1552 = vunpack.c.h.b16 %v362
    %v1553 = vunpack.c.l.b16 %v363
    %v1554 = vunpack.c.h.b16 %v363
    %v1555 = vunpack.c.l.b16 %v364
    %v1556 = vunpack.c.h.b16 %v364
    %v1557 = vunpack.c.l.b16 %v365
    %v1558 = vunpack.c.h.b16 %v365
    %v1559 = vunpack.c.l.b16 %v366
    %v1560 = vunpack.c.h.b16 %v366
    %v1561 = vunpack.c.l.b16 %v367
    %v1562 = vunpack.c.h.b16 %v367
    %v1563 = vunpack.c.l.b16 %v368
    %v1564 = vunpack.c.h.b16 %v368
    %v1565 = vunpack.c.l.b16 %v369
    %v1566 = vunpack.c.h.b16 %v369
    %v1567 = vunpack.c.l.b16 %v370
    %v1568 = vunpack.c.h.b16 %v370
    %v1569 = vunpack.c.l.b16 %v371
    %v1570 = vunpack.c.h.b16 %v371
    %v1571 = vunpack.c.l.b16 %v372
    %v1572 = vunpack.c.h.b16 %v372
    %v1573 = vunpack.c.l.b16 %v373
    %v1574 = vunpack.c.h.b16 %v373
    %v1575 = vunpack.c.l.b16 %v374
    %v1576 = vunpack.c.h.b16 %v374
    %v1577 = vunpack.c.l.b16 %v375
    %v1578 = vunpack.c.h.b16 %v375
    %v1579 = vunpack.c.l.b16 %v376
    %v1580 = vunpack.c.h.b16 %v376
    %v1581 = vunpack.c.l.b16 %v377
    %v1582 = vunpack.c.h.b16 %v377
    %v1583 = vunpack.c.l.b16 %v378
    %v1584 = vunpack.c.h.b16 %v378
    %v1585 = vunpack.c.l.b16 %v379
    %v1586 = vunpack.c.h.b16 %v379
    %v1587 = vunpack.c.l.b16 %v380
    %v1588 = vunpack.c.h.b16 %v380
    %v1589 = vunpack.c.l.b16 %v381
    %v1590 = vunpack.c.h.b16 %v381
    %v1591 = vunpack.c.l.b16 %v382
    %v1592 = vunpack.c.h.b16 %v382
    %v1593 = vunpack.c.l.b16 %v383
    %v1594 = vunpack.c.h.b16 %v383
    %v1595 = vunpack.c.l.b16 %v384
    %v1596 = vunpack.c.h.b16 %v384
    %v1597 = vunpack.c.l.b16 %v385
    %v1598 = vunpack.c.h.b16 %v385
    %v1599 = vunpack.c.l.b16 %v386
    %v1600 = vunpack.c.h.b16 %v386
    %v1601 = vunpack.c.l.b16 %v387
    %v1602 = vunpack.c.h.b16 %v387
    %v1603 = vunpack.c.l.b16 %v388
    %v1604 = vunpack.c.h.b16 %v388
    %v1605 = vunpack.c.l.b16 %v389
    %v1606 = vunpack.c.h.b16 %v389
    %v1607 = vunpack.c.l.b16 %v390
    %v1608 = vunpack.c.h.b16 %v390
    %v1609 = vunpack.c.l.b16 %v391
    %v1610 = vunpack.c.h.b16 %v391
    %v1611 = vunpack.c.l.b16 %v392
    %v1612 = vunpack.c.h.b16 %v392
    %v1613 = vunpack.c.l.b16 %v393
    %v1614 = vunpack.c.h.b16 %v393
    %v1615 = vunpack.c.l.b16 %v394
    %v1616 = vunpack.c.h.b16 %v394
    %v1617 = vunpack.c.l.b16 %v395
    %v1618 = vunpack.c.h.b16 %v395
    %v1619 = vunpack.c.l.b16 %v396
    %v1620 = vunpack.c.h.b16 %v396
    %v1621 = vunpack.c.l.b16 %v397
    %v1622 = vunpack.c.h.b16 %v397
    %v1623 = vunpack.c.l.b16 %v398
    %v1624 = vunpack.c.h.b16 %v398
    %v1625 = vunpack.c.l.b16 %v399
    %v1626 = vunpack.c.h.b16 %v399
    %v1627 = vunpack.c.l.b16 %v400
    %v1628 = vunpack.c.h.b16 %v400
    %v1629 = vunpack.c.l.b16 %v401
    %v1630 = vunpack.c.h.b16 %v401
    %v1631 = vunpack.c.l.b16 %v402
    %v1632 = vunpack.c.h.b16 %v402
    %v1633 = vunpack.c.l.b16 %v403
    %v1634 = vunpack.c.h.b16 %v403
    %v1635 = vunpack.c.l.b16 %v404
    %v1636 = vunpack.c.h.b16 %v404
    %v1637 = vunpack.c.l.b16 %v405
    %v1638 = vunpack.c.h.b16 %v405
    %v1639 = vunpack.c.l.b16 %v406
    %v1640 = vunpack.c.h.b16 %v406
    %v1641 = vunpack.c.l.b16 %v407
    %v1642 = vunpack.c.h.b16 %v407
    %v1643 = vunpack.c.l.b16 %v408
    %v1644 = vunpack.c.h.b16 %v408
    %v1645 = vunpack.c.l.b16 %v409
    %v1646 = vunpack.c.h.b16 %v409
    %v1647 = vunpack.c.l.b16 %v410
    %v1648 = vunpack.c.h.b16 %v410
    %v1649 = vunpack.c.l.b16 %v411
    %v1650 = vunpack.c.h.b16 %v411
    %v1651 = vunpack.c.l.b16 %v412
    %v1652 = vunpack.c.h.b16 %v412
    %v1653 = vunpack.c.l.b16 %v413
    %v1654 = vunpack.c.h.b16 %v413
    %v1655 = vunpack.c.l.b16 %v414
    %v1656 = vunpack.c.h.b16 %v414
    %v1657 = vunpack.c.l.b16 %v415
    %v1658 = vunpack.c.h.b16 %v415
    %v1659 = vunpack.c.l.b16 %v416
    %v1660 = vunpack.c.h.b16 %v416
    %v1661 = vunpack.c.l.b16 %v417
    %v1662 = vunpack.c.h.b16 %v417
    %v1663 = vunpack.c.l.b16 %v418
    %v1664 = vunpack.c.h.b16 %v418
    %v1665 = vunpack.c.l.b16 %v419
    %v1666 = vunpack.c.h.b16 %v419
    %v1667 = vunpack.c.l.b16 %v420
    %v1668 = vunpack.c.h.b16 %v420
    %v1669 = vunpack.c.l.b16 %v421
    %v1670 = vunpack.c.h.b16 %v421
    %v1671 = vunpack.c.l.b16 %v422
    %v1672 = vunpack.c.h.b16 %v422
    %v1673 = vunpack.c.l.b16 %v423
    %v1674 = vunpack.c.h.b16 %v423
    %v1675 = vunpack.c.l.b16 %v424
    %v1676 = vunpack.c.h.b16 %v424
    %v1677 = vunpack.c.l.b16 %v425
    %v1678 = vunpack.c.h.b16 %v425
    %v1679 = vunpack.c.l.b16 %v426
    %v1680 = vunpack.c.h.b16 %v426
    %v1681 = vunpack.c.l.b16 %v427
    %v1682 = vunpack.c.h.b16 %v427
    %v1683 = vunpack.c.l.b16 %v428
    %v1684 = vunpack.c.h.b16 %v428
    %v1685 = vunpack.c.l.b16 %v429
    %v1686 = vunpack.c.h.b16 %v429
    %v1687 = vunpack.c.l.b16 %v430
    %v1688 = vunpack.c.h.b16 %v430
    %v1689 = vunpack.c.l.b16 %v431
    %v1690 = vunpack.c.h.b16 %v431
    %v1691 = vunpack.c.l.b16 %v432
    %v1692 = vunpack.c.h.b16 %v432
    %v1693 = vunpack.c.l.b16 %v433
    %v1694 = vunpack.c.h.b16 %v433
    %v1695 = vunpack.c.l.b16 %v434
    %v1696 = vunpack.c.h.b16 %v434
    %v1697 = vunpack.c.l.b16 %v435
    %v1698 = vunpack.c.h.b16 %v435
    %v1699 = vunpack.c.l.b16 %v436
    %v1700 = vunpack.c.h.b16 %v436
    %v1701 = vunpack.c.l.b16 %v437
    %v1702 = vunpack.c.h.b16 %v437
    %v1703 = vunpack.c.l.b16 %v438
    %v1704 = vunpack.c.h.b16 %v438
    %v1705 = vunpack.c.l.b16 %v439
    %v1706 = vunpack.c.h.b16 %v439
    %v1707 = vunpack.c.l.b16 %v440
    %v1708 = vunpack.c.h.b16 %v440
    %v1709 = vunpack.c.l.b16 %v441
    %v1710 = vunpack.c.h.b16 %v441
    %v1711 = vunpack.c.l.b16 %v442
    %v1712 = vunpack.c.h.b16 %v442
    %v1713 = vunpack.c.l.b16 %v443
    %v1714 = vunpack.c.h.b16 %v443
    %v1715 = vunpack.c.l.b16 %v444
    %v1716 = vunpack.c.h.b16 %v444
    %v1717 = vunpack.c.l.b16 %v445
    %v1718 = vunpack.c.h.b16 %v445
    %v1719 = vunpack.c.l.b16 %v446
    %v1720 = vunpack.c.h.b16 %v446
    %v1721 = vunpack.c.l.b16 %v447
    %v1722 = vunpack.c.h.b16 %v447
    %v1723 = vunpack.c.l.b16 %v448
    %v1724 = vunpack.c.h.b16 %v448
    %v1725 = vpack.c.b16 %v969, %v957
    %v1726 = vpack.c.b16 %v970, %v958
    %v1727 = vpack.c.b16 %v971, %v959
    %v1728 = vpack.c.b16 %v972, %v960
    %v1729 = vpack.c.b16 %v973, %v961
    %v1730 = vpack.c.b16 %v974, %v962
    %v1731 = vpack.c.b16 %v975, %v963
    %v1732 = vpack.c.b16 %v976, %v964
    %v1733 = vpack.c.b16 %v977, %v965
    %v1734 = vpack.c.b16 %v978, %v966
    %v1735 = vpack.c.b16 %v979, %v967
    %v1736 = vpack.c.b16 %v980, %v968
    %v1737 = vpack.c.b16 %v993, %v981
    %v1738 = vpack.c.b16 %v994, %v982
    %v1739 = vpack.c.b16 %v995, %v983
    %v1740 = vpack.c.b16 %v996, %v984
    %v1741 = vpack.c.b16 %v997, %v985
    %v1742 = vpack.c.b16 %v998, %v986
    %v1743 = vpack.c.b16 %v999, %v987
    %v1744 = vpack.c.b16 %v1000, %v988
    %v1745 = vpack.c.b16 %v1001, %v989
    %v1746 = vpack.c.b16 %v1002, %v990
    %v1747 = vpack.c.b16 %v1003, %v991
    %v1748 = vpack.c.b16 %v1004, %v992
    %v1749 = vpack.c.b16 %v1017, %v1005
    %v1750 = vpack.c.b16 %v1018, %v1006
    %v1751 = vpack.c.b16 %v1019, %v1007
    %v1752 = vpack.c.b16 %v1020, %v1008
    %v1753 = vpack.c.b16 %v1021, %v1009
    %v1754 = vpack.c.b16 %v1022, %v1010
    %v1755 = vpack.c.b16 %v1023, %v1011
    %v1756 = vpack.c.b16 %v1024, %v1012
    %v1757 = vpack.c.b16 %v1025, %v1013
    %v1758 = vpack.c.b16 %v1026, %v1014
    %v1759 = vpack.c.b16 %v1027, %v1015
    %v1760 = vpack.c.b16 %v1028, %v1016
    %v1761 = vpack.c.b16 %v1041, %v1029
    %v1762 = vpack.c.b16 %v1042, %v1030
    %v1763 = vpack.c.b16 %v1043, %v1031
    %v1764 = vpack.c.b16 %v1044, %v1032
    %v1765 = vpack.c.b16 %v1045, %v1033
    %v1766 = vpack.c.b16 %v1046, %v1034
    %v1767 = vpack.c.b16 %v1047, %v1035
    %v1768 = vpack.c.b16 %v1048, %v1036
    %v1769 = vpack.c.b16 %v1049, %v1037
    %v1770 = vpack.c.b16 %v1050, %v1038
    %v1771 = vpack.c.b16 %v1051, %v1039
    %v1772 = vpack.c.b16 %v1052, %v1040
    %v1773 = vpack.c.b16 %v1065, %v1053
    %v1774 = vpack.c.b16 %v1066, %v1054
    %v1775 = vpack.c.b16 %v1067, %v1055
    %v1776 = vpack.c.b16 %v1068, %v1056
    %v1777 = vpack.c.b16 %v1069, %v1057
    %v1778 = vpack.c.b16 %v1070, %v1058
    %v1779 = vpack.c.b16 %v1071, %v1059
    %v1780 = vpack.c.b16 %v1072, %v1060
    %v1781 = vpack.c.b16 %v1073, %v1061
    %v1782 = vpack.c.b16 %v1074, %v1062
    %v1783 = vpack.c.b16 %v1075, %v1063
    %v1784 = vpack.c.b16 %v1076, %v1064
    %v1785 = vpack.c.b16 %v1089, %v1077
    %v1786 = vpack.c.b16 %v1090, %v1078
    %v1787 = vpack.c.b16 %v1091, %v1079
    %v1788 = vpack.c.b16 %v1092, %v1080
    %v1789 = vpack.c.b16 %v1093, %v1081
    %v1790 = vpack.c.b16 %v1094, %v1082
    %v1791 = vpack.c.b16 %v1095, %v1083
    %v1792 = vpack.c.b16 %v1096, %v1084
    %v1793 = vpack.c.b16 %v1097, %v1085
    %v1794 = vpack.c.b16 %v1098, %v1086
    %v1795 = vpack.c.b16 %v1099, %v1087
    %v1796 = vpack.c.b16 %v1100, %v1088
    %v1797 = vpack.c.b16 %v1113, %v1101
    %v1798 = vpack.c.b16 %v1114, %v1102
    %v1799 = vpack.c.b16 %v1115, %v1103
    %v1800 = vpack.c.b16 %v1116, %v1104
    %v1801 = vpack.c.b16 %v1117, %v1105
    %v1802 = vpack.c.b16 %v1118, %v1106
    %v1803 = vpack.c.b16 %v1119, %v1107
    %v1804 = vpack.c.b16 %v1120, %v1108
    %v1805 = vpack.c.b16 %v1121, %v1109
    %v1806 = vpack.c.b16 %v1122, %v1110
    %v1807 = vpack.c.b16 %v1123, %v1111
    %v1808 = vpack.c.b16 %v1124, %v1112
    %v1809 = vpack.c.b16 %v1137, %v1125
    %v1810 = vpack.c.b16 %v1138, %v1126
    %v1811 = vpack.c.b16 %v1139, %v1127
    %v1812 = vpack.c.b16 %v1140, %v1128
    %v1813 = vpack.c.b16 %v1141, %v1129
    %v1814 = vpack.c.b16 %v1142, %v1130
    %v1815 = vpack.c.b16 %v1143, %v1131
    %v1816 = vpack.c.b16 %v1144, %v1132
    %v1817 = vpack.c.b16 %v1145, %v1133
    %v1818 = vpack.c.b16 %v1146, %v1134
    %v1819 = vpack.c.b16 %v1147, %v1135
    %v1820 = vpack.c.b16 %v1148, %v1136
    %v1821 = vpack.c.b16 %v1161, %v1149
    %v1822 = vpack.c.b16 %v1162, %v1150
    %v1823 = vpack.c.b16 %v1163, %v1151
    %v1824 = vpack.c.b16 %v1164, %v1152
    %v1825 = vpack.c.b16 %v1165, %v1153
    %v1826 = vpack.c.b16 %v1166, %v1154
    %v1827 = vpack.c.b16 %v1167, %v1155
    %v1828 = vpack.c.b16 %v1168, %v1156
    %v1829 = vpack.c.b16 %v1169, %v1157
    %v1830 = vpack.c.b16 %v1170, %v1158
    %v1831 = vpack.c.b16 %v1171, %v1159
    %v1832 = vpack.c.b16 %v1172, %v1160
    %v1833 = vpack.c.b16 %v1185, %v1173
    %v1834 = vpack.c.b16 %v1186, %v1174
    %v1835 = vpack.c.b16 %v1187, %v1175
    %v1836 = vpack.c.b16 %v1188, %v1176
    %v1837 = vpack.c.b16 %v1189, %v1177
    %v1838 = vpack.c.b16 %v1190, %v1178
    %v1839 = vpack.c.b16 %v1191, %v1179
    %v1840 = vpack.c.b16 %v1192, %v1180
    %v1841 = vpack.c.b16 %v1193, %v1181
    %v1842 = vpack.c.b16 %v1194, %v1182
    %v1843 = vpack.c.b16 %v1195, %v1183
    %v1844 = vpack.c.b16 %v1196, %v1184
    %v1845 = vpack.c.b16 %v1209, %v1197
    %v1846 = vpack.c.b16 %v1210, %v1198
    %v1847 = vpack.c.b16 %v1211, %v1199
    %v1848 = vpack.c.b16 %v1212, %v1200
    %v1849 = vpack.c.b16 %v1213, %v1201
    %v1850 = vpack.c.b16 %v1214, %v1202
    %v1851 = vpack.c.b16 %v1215, %v1203
    %v1852 = vpack.c.b16 %v1216, %v1204
    %v1853 = vpack.c.b16 %v1217, %v1205
    %v1854 = vpack.c.b16 %v1218, %v1206
    %v1855 = vpack.c.b16 %v1219, %v1207
    %v1856 = vpack.c.b16 %v1220, %v1208
    %v1857 = vpack.c.b16 %v1233, %v1221
    %v1858 = vpack.c.b16 %v1234, %v1222
    %v1859 = vpack.c.b16 %v1235, %v1223
    %v1860 = vpack.c.b16 %v1236, %v1224
    %v1861 = vpack.c.b16 %v1237, %v1225
    %v1862 = vpack.c.b16 %v1238, %v1226
    %v1863 = vpack.c.b16 %v1239, %v1227
    %v1864 = vpack.c.b16 %v1240, %v1228
    %v1865 = vpack.c.b16 %v1241, %v1229
    %v1866 = vpack.c.b16 %v1242, %v1230
    %v1867 = vpack.c.b16 %v1243, %v1231
    %v1868 = vpack.c.b16 %v1244, %v1232
    %v1869 = vpack.c.b16 %v1257, %v1245
    %v1870 = vpack.c.b16 %v1258, %v1246
    %v1871 = vpack.c.b16 %v1259, %v1247
    %v1872 = vpack.c.b16 %v1260, %v1248
    %v1873 = vpack.c.b16 %v1261, %v1249
    %v1874 = vpack.c.b16 %v1262, %v1250
    %v1875 = vpack.c.b16 %v1263, %v1251
    %v1876 = vpack.c.b16 %v1264, %v1252
    %v1877 = vpack.c.b16 %v1265, %v1253
    %v1878 = vpack.c.b16 %v1266, %v1254
    %v1879 = vpack.c.b16 %v1267, %v1255
    %v1880 = vpack.c.b16 %v1268, %v1256
    %v1881 = vpack.c.b16 %v1281, %v1269
    %v1882 = vpack.c.b16 %v1282, %v1270
    %v1883 = vpack.c.b16 %v1283, %v1271
    %v1884 = vpack.c.b16 %v1284, %v1272
    %v1885 = vpack.c.b16 %v1285, %v1273
    %v1886 = vpack.c.b16 %v1286, %v1274
    %v1887 = vpack.c.b16 %v1287, %v1275
    %v1888 = vpack.c.b16 %v1288, %v1276
    %v1889 = vpack.c.b16 %v1289, %v1277
    %v1890 = vpack.c.b16 %v1290, %v1278
    %v1891 = vpack.c.b16 %v1291, %v1279
    %v1892 = vpack.c.b16 %v1292, %v1280
    %v1893 = vpack.c.b16 %v1305, %v1293
    %v1894 = vpack.c.b16 %v1306, %v1294
    %v1895 = vpack.c.b16 %v1307, %v1295
    %v1896 = vpack.c.b16 %v1308, %v1296
    %v1897 = vpack.c.b16 %v1309, %v1297
    %v1898 = vpack.c.b16 %v1310, %v1298
    %v1899 = vpack.c.b16 %v1311, %v1299
    %v1900 = vpack.c.b16 %v1312, %v1300
    %v1901 = vpack.c.b16 %v1313, %v1301
    %v1902 = vpack.c.b16 %v1314, %v1302
    %v1903 = vpack.c.b16 %v1315, %v1303
    %v1904 = vpack.c.b16 %v1316, %v1304
    %v1905 = vpack.c.b16 %v1329, %v1317
    %v1906 = vpack.c.b16 %v1330, %v1318
    %v1907 = vpack.c.b16 %v1331, %v1319
    %v1908 = vpack.c.b16 %v1332, %v1320
    %v1909 = vpack.c.b16 %v1333, %v1321
    %v1910 = vpack.c.b16 %v1334, %v1322
    %v1911 = vpack.c.b16 %v1335, %v1323
    %v1912 = vpack.c.b16 %v1336, %v1324
    %v1913 = vpack.c.b16 %v1337, %v1325
    %v1914 = vpack.c.b16 %v1338, %v1326
    %v1915 = vpack.c.b16 %v1339, %v1327
    %v1916 = vpack.c.b16 %v1340, %v1328
    %v1917 = vpack.c.b16 %v1353, %v1341
    %v1918 = vpack.c.b16 %v1354, %v1342
    %v1919 = vpack.c.b16 %v1355, %v1343
    %v1920 = vpack.c.b16 %v1356, %v1344
    %v1921 = vpack.c.b16 %v1357, %v1345
    %v1922 = vpack.c.b16 %v1358, %v1346
    %v1923 = vpack.c.b16 %v1359, %v1347
    %v1924 = vpack.c.b16 %v1360, %v1348
    %v1925 = vpack.c.b16 %v1361, %v1349
    %v1926 = vpack.c.b16 %v1362, %v1350
    %v1927 = vpack.c.b16 %v1363, %v1351
    %v1928 = vpack.c.b16 %v1364, %v1352
    %v1929 = vpack.c.b16 %v1377, %v1365
    %v1930 = vpack.c.b16 %v1378, %v1366
    %v1931 = vpack.c.b16 %v1379, %v1367
    %v1932 = vpack.c.b16 %v1380, %v1368
    %v1933 = vpack.c.b16 %v1381, %v1369
    %v1934 = vpack.c.b16 %v1382, %v1370
    %v1935 = vpack.c.b16 %v1383, %v1371
    %v1936 = vpack.c.b16 %v1384, %v1372
    %v1937 = vpack.c.b16 %v1385, %v1373
    %v1938 = vpack.c.b16 %v1386, %v1374
    %v1939 = vpack.c.b16 %v1387, %v1375
    %v1940 = vpack.c.b16 %v1388, %v1376
    %v1941 = vpack.c.b16 %v1401, %v1389
    %v1942 = vpack.c.b16 %v1402, %v1390
    %v1943 = vpack.c.b16 %v1403, %v1391
    %v1944 = vpack.c.b16 %v1404, %v1392
    %v1945 = vpack.c.b16 %v1405, %v1393
    %v1946 = vpack.c.b16 %v1406, %v1394
    %v1947 = vpack.c.b16 %v1407, %v1395
    %v1948 = vpack.c.b16 %v1408, %v1396
    %v1949 = vpack.c.b16 %v1409, %v1397
    %v1950 = vpack.c.b16 %v1410, %v1398
    %v1951 = vpack.c.b16 %v1411, %v1399
    %v1952 = vpack.c.b16 %v1412, %v1400
    %v1953 = vpack.c.b16 %v1425, %v1413
    %v1954 = vpack.c.b16 %v1426, %v1414
    %v1955 = vpack.c.b16 %v1427, %v1415
    %v1956 = vpack.c.b16 %v1428, %v1416
    %v1957 = vpack.c.b16 %v1429, %v1417
    %v1958 = vpack.c.b16 %v1430, %v1418
    %v1959 = vpack.c.b16 %v1431, %v1419
    %v1960 = vpack.c.b16 %v1432, %v1420
    %v1961 = vpack.c.b16 %v1433, %v1421
    %v1962 = vpack.c.b16 %v1434, %v1422
    %v1963 = vpack.c.b16 %v1435, %v1423
    %v1964 = vpack.c.b16 %v1436, %v1424
    %v1965 = vpack.c.b16 %v1449, %v1437
    %v1966 = vpack.c.b16 %v1450, %v1438
    %v1967 = vpack.c.b16 %v1451, %v1439
    %v1968 = vpack.c.b16 %v1452, %v1440
    %v1969 = vpack.c.b16 %v1453, %v1441
    %v1970 = vpack.c.b16 %v1454, %v1442
    %v1971 = vpack.c.b16 %v1455, %v1443
    %v1972 = vpack.c.b16 %v1456, %v1444
    %v1973 = vpack.c.b16 %v1457, %v1445
    %v1974 = vpack.c.b16 %v1458, %v1446
    %v1975 = vpack.c.b16 %v1459, %v1447
    %v1976 = vpack.c.b16 %v1460, %v1448
    %v1977 = vpack.c.b16 %v1473, %v1461
    %v1978 = vpack.c.b16 %v1474, %v1462
    %v1979 = vpack.c.b16 %v1475, %v1463
    %v1980 = vpack.c.b16 %v1476, %v1464
    %v1981 = vpack.c.b16 %v1477, %v1465
    %v1982 = vpack.c.b16 %v1478, %v1466
    %v1983 = vpack.c.b16 %v1479, %v1467
    %v1984 = vpack.c.b16 %v1480, %v1468
    %v1985 = vpack.c.b16 %v1481, %v1469
    %v1986 = vpack.c.b16 %v1482, %v1470
    %v1987 = vpack.c.b16 %v1483, %v1471
    %v1988 = vpack.c.b16 %v1484, %v1472
    %v1989 = vpack.c.b16 %v1497, %v1485
    %v1990 = vpack.c.b16 %v1498, %v1486
    %v1991 = vpack.c.b16 %v1499, %v1487
    %v1992 = vpack.c.b16 %v1500, %v1488
    %v1993 = vpack.c.b16 %v1501, %v1489
    %v1994 = vpack.c.b16 %v1502, %v1490
    %v1995 = vpack.c.b16 %v1503, %v1491
    %v1996 = vpack.c.b16 %v1504, %v1492
    %v1997 = vpack.c.b16 %v1505, %v1493
    %v1998 = vpack.c.b16 %v1506, %v1494
    %v1999 = vpack.c.b16 %v1507, %v1495
    %v2000 = vpack.c.b16 %v1508, %v1496
    %v2001 = vpack.c.b16 %v1521, %v1509
    %v2002 = vpack.c.b16 %v1522, %v1510
    %v2003 = vpack.c.b16 %v1523, %v1511
    %v2004 = vpack.c.b16 %v1524, %v1512
    %v2005 = vpack.c.b16 %v1525, %v1513
    %v2006 = vpack.c.b16 %v1526, %v1514
    %v2007 = vpack.c.b16 %v1527, %v1515
    %v2008 = vpack.c.b16 %v1528, %v1516
    %v2009 = vpack.c.b16 %v1529, %v1517
    %v2010 = vpack.c.b16 %v1530, %v1518
    %v2011 = vpack.c.b16 %v1531, %v1519
    %v2012 = vpack.c.b16 %v1532, %v1520
    %v2013 = vpack.c.b16 %v1545, %v1533
    %v2014 = vpack.c.b16 %v1546, %v1534
    %v2015 = vpack.c.b16 %v1547, %v1535
    %v2016 = vpack.c.b16 %v1548, %v1536
    %v2017 = vpack.c.b16 %v1549, %v1537
    %v2018 = vpack.c.b16 %v1550, %v1538
    %v2019 = vpack.c.b16 %v1551, %v1539
    %v2020 = vpack.c.b16 %v1552, %v1540
    %v2021 = vpack.c.b16 %v1553, %v1541
    %v2022 = vpack.c.b16 %v1554, %v1542
    %v2023 = vpack.c.b16 %v1555, %v1543
    %v2024 = vpack.c.b16 %v1556, %v1544
    %v2025 = vpack.c.b16 %v1569, %v1557
    %v2026 = vpack.c.b16 %v1570, %v1558
    %v2027 = vpack.c.b16 %v1571, %v1559
    %v2028 = vpack.c.b16 %v1572, %v1560
    %v2029 = vpack.c.b16 %v1573, %v1561
    %v2030 = vpack.c.b16 %v1574, %v1562
    %v2031 = vpack.c.b16 %v1575, %v1563
    %v2032 = vpack.c.b16 %v1576, %v1564
    %v2033 = vpack.c.b16 %v1577, %v1565
    %v2034 = vpack.c.b16 %v1578, %v1566
    %v2035 = vpack.c.b16 %v1579, %v1567
    %v2036 = vpack.c.b16 %v1580, %v1568
    %v2037 = vpack.c.b16 %v1593, %v1581
    %v2038 = vpack.c.b16 %v1594, %v1582
    %v2039 = vpack.c.b16 %v1595, %v1583
    %v2040 = vpack.c.b16 %v1596, %v1584
    %v2041 = vpack.c.b16 %v1597, %v1585
    %v2042 = vpack.c.b16 %v1598, %v1586
    %v2043 = vpack.c.b16 %v1599, %v1587
    %v2044 = vpack.c.b16 %v1600, %v1588
    %v2045 = vpack.c.b16 %v1601, %v1589
    %v2046 = vpack.c.b16 %v1602, %v1590
    %v2047 = vpack.c.b16 %v1603, %v1591
    %v2048 = vpack.c.b16 %v1604, %v1592
    %v2049 = vpack.c.b16 %v1617, %v1605
    %v2050 = vpack.c.b16 %v1618, %v1606
    %v2051 = vpack.c.b16 %v1619, %v1607
    %v2052 = vpack.c.b16 %v1620, %v1608
    %v2053 = vpack.c.b16 %v1621, %v1609
    %v2054 = vpack.c.b16 %v1622, %v1610
    %v2055 = vpack.c.b16 %v1623, %v1611
    %v2056 = vpack.c.b16 %v1624, %v1612
    %v2057 = vpack.c.b16 %v1625, %v1613
    %v2058 = vpack.c.b16 %v1626, %v1614
    %v2059 = vpack.c.b16 %v1627, %v1615
    %v2060 = vpack.c.b16 %v1628, %v1616
    %v2061 = vpack.c.b16 %v1641, %v1629
    %v2062 = vpack.c.b16 %v1642, %v1630
    %v2063 = vpack.c.b16 %v1643, %v1631
    %v2064 = vpack.c.b16 %v1644, %v1632
    %v2065 = vpack.c.b16 %v1645, %v1633
    %v2066 = vpack.c.b16 %v1646, %v1634
    %v2067 = vpack.c.b16 %v1647, %v1635
    %v2068 = vpack.c.b16 %v1648, %v1636
    %v2069 = vpack.c.b16 %v1649, %v1637
    %v2070 = vpack.c.b16 %v1650, %v1638
    %v2071 = vpack.c.b16 %v1651, %v1639
    %v2072 = vpack.c.b16 %v1652, %v1640
    %v2073 = vpack.c.b16 %v1665, %v1653
    %v2074 = vpack.c.b16 %v1666, %v1654
    %v2075 = vpack.c.b16 %v1667, %v1655
    %v2076 = vpack.c.b16 %v1668, %v1656
    %v2077 = vpack.c.b16 %v1669, %v1657
    %v2078 = vpack.c.b16 %v1670, %v1658
    %v2079 = vpack.c.b16 %v1671, %v1659
    %v2080 = vpack.c.b16 %v1672, %v1660
    %v2081 = vpack.c.b16 %v1673, %v1661
    %v2082 = vpack.c.b16 %v1674, %v1662
    %v2083 = vpack.c.b16 %v1675, %v1663
    %v2084 = vpack.c.b16 %v1676, %v1664
    %v2085 = vpack.c.b16 %v1689, %v1677
    %v2086 = vpack.c.b16 %v1690, %v1678
    %v2087 = vpack.c.b16 %v1691, %v1679
    %v2088 = vpack.c.b16 %v1692, %v1680
    %v2089 = vpack.c.b16 %v1693, %v1681
    %v2090 = vpack.c.b16 %v1694, %v1682
    %v2091 = vpack.c.b16 %v1695, %v1683
    %v2092 = vpack.c.b16 %v1696, %v1684
    %v2093 = vpack.c.b16 %v1697, %v1685
    %v2094 = vpack.c.b16 %v1698, %v1686
    %v2095 = vpack.c.b16 %v1699, %v1687
    %v2096 = vpack.c.b16 %v1700, %v1688
    %v2097 = vpack.c.b16 %v1713, %v1701
    %v2098 = vpack.c.b16 %v1714, %v1702
    %v2099 = vpack.c.b16 %v1715, %v1703
    %v2100 = vpack.c.b16 %v1716, %v1704
    %v2101 = vpack.c.b16 %v1717, %v1705
    %v2102 = vpack.c.b16 %v1718, %v1706
    %v2103 = vpack.c.b16 %v1719, %v1707
    %v2104 = vpack.c.b16 %v1720, %v1708
    %v2105 = vpack.c.b16 %v1721, %v1709
    %v2106 = vpack.c.b16 %v1722, %v1710
    %v2107 = vpack.c.b16 %v1723, %v1711
    %v2108 = vpack.c.b16 %v1724, %v1712
    %2493 = vmatprep.subr.bf16.mxu0 %v1726
    %2494 = vmatpush1.bf16.msra.mxu0 %v1725
    %2495 = vmatprep.subr.bf16.mxu0 %v1738
    %2496 = vmatpush1.bf16.msra.mxu0 %v1737
    %2497 = vmatprep.subr.bf16.mxu0 %v1750
    %2498 = vmatpush1.bf16.msra.mxu0 %v1749
    %2499 = vmatprep.subr.bf16.mxu0 %v1762
    %2500 = vmatpush1.bf16.msra.mxu0 %v1761
    %2501 = vmatprep.subr.bf16.mxu0 %v1774
    %2502 = vmatpush1.bf16.msra.mxu0 %v1773
    %2503 = vmatprep.subr.bf16.mxu0 %v1786
    %2504 = vmatpush1.bf16.msra.mxu0 %v1785
    %2505 = vmatprep.subr.bf16.mxu0 %v1798
    %2506 = vmatpush1.bf16.msra.mxu0 %v1797
    %2507 = vmatprep.subr.bf16.mxu0 %v1810
    %2508 = vmatpush1.bf16.msra.mxu0 %v1809
    %2509 = vmatprep.subr.bf16.mxu0 %v1822
    %2510 = vmatpush1.bf16.msra.mxu0 %v1821
    %2511 = vmatprep.subr.bf16.mxu0 %v1834
    %2512 = vmatpush1.bf16.msra.mxu0 %v1833
    %2513 = vmatprep.subr.bf16.mxu0 %v1846
    %2514 = vmatpush1.bf16.msra.mxu0 %v1845
    %2515 = vmatprep.subr.bf16.mxu0 %v1858
    %2516 = vmatpush1.bf16.msra.mxu0 %v1857
    %2517 = vmatprep.subr.bf16.mxu0 %v1870
    %2518 = vmatpush1.bf16.msra.mxu0 %v1869
    %2519 = vmatprep.subr.bf16.mxu0 %v1882
    %2520 = vmatpush1.bf16.msra.mxu0 %v1881
    %2521 = vmatprep.subr.bf16.mxu0 %v1894
    %2522 = vmatpush1.bf16.msra.mxu0 %v1893
    %2523 = vmatprep.subr.bf16.mxu0 %v1906
    %2524 = vmatpush1.bf16.msra.mxu0 %v1905
    %2525 = vmatprep.mubr.bf16.mxu0 %v550
    %2526 = vmatmul.mubr.bf16.gmra.mrb[0].mxu0 %v549
    %v2527 = vpop.f32.mrb[0].mxu0
    %v2528 = vadd.f32 %v456, %v2527
    %v2529 = vpop.f32.mrb[0].mxu0
    %v2530 = vadd.f32 %v460, %v2529
    %v2531 = vpop.f32.mrb[0].mxu0
    %v2532 = vadd.f32 %v456, %v2531
    %v2533 = vpop.f32.mrb[0].mxu0
    %v2534 = vadd.f32 %v460, %v2533
    %2535 = vmatprep.mubr.bf16.mxu0 %v554
    %2536 = vmatmul.mubr.bf16.gmra.mrb[0].mxu0 %v553
    %v2537 = vpop.f32.mrb[0].mxu0
    %v2538 = vadd.f32 %v456, %v2537
    %v2539 = vpop.f32.mrb[0].mxu0
    %v2540 = vadd.f32 %v460, %v2539
    %v2541 = vpop.f32.mrb[0].mxu0
    %v2542 = vadd.f32 %v456, %v2541
    %v2543 = vpop.f32.mrb[0].mxu0
    %v2544 = vadd.f32 %v460, %v2543
    %2545 = vmatprep.mubr.bf16.mxu0 %v558
    %2546 = vmatmul.mubr.bf16.gmra.mrb[0].mxu0 %v557
    %v2547 = vpop.f32.mrb[0].mxu0
    %v2548 = vadd.f32 %v456, %v2547
    %v2549 = vpop.f32.mrb[0].mxu0
    %v2550 = vadd.f32 %v460, %v2549
    %v2551 = vpop.f32.mrb[0].mxu0
    %v2552 = vadd.f32 %v456, %v2551
    %v2553 = vpop.f32.mrb[0].mxu0
    %v2554 = vadd.f32 %v460, %v2553
    %2555 = vdwg.mxu0
    %2556 = vmatprep.subr.bf16.mxu0 %v1918
    %2557 = vmatpush1.bf16.msra.mxu0 %v1917
    %2558 = vmatprep.subr.bf16.mxu0 %v1930
    %2559 = vmatpush1.bf16.msra.mxu0 %v1929
    %2560 = vmatprep.subr.bf16.mxu0 %v1942
    %2561 = vmatpush1.bf16.msra.mxu0 %v1941
    %2562 = vmatprep.subr.bf16.mxu0 %v1954
    %2563 = vmatpush1.bf16.msra.mxu0 %v1953
    %2564 = vmatprep.subr.bf16.mxu0 %v1966
    %2565 = vmatpush1.bf16.msra.mxu0 %v1965
    %2566 = vmatprep.subr.bf16.mxu0 %v1978
    %2567 = vmatpush1.bf16.msra.mxu0 %v1977
    %2568 = vmatprep.subr.bf16.mxu0 %v1990
    %2569 = vmatpush1.bf16.msra.mxu0 %v1989
    %2570 = vmatprep.subr.bf16.mxu0 %v2002
    %2571 = vmatpush1.bf16.msra.mxu0 %v2001
    %2572 = vmatprep.subr.bf16.mxu0 %v2014
    %2573 = vmatpush1.bf16.msra.mxu0 %v2013
    %2574 = vmatprep.subr.bf16.mxu0 %v2026
    %2575 = vmatpush1.bf16.msra.mxu0 %v2025
    %2576 = vmatprep.subr.bf16.mxu0 %v2038
    %2577 = vmatpush1.bf16.msra.mxu0 %v2037
    %2578 = vmatprep.subr.bf16.mxu0 %v2050
    %2579 = vmatpush1.bf16.msra.mxu0 %v2049
    %2580 = vmatprep.subr.bf16.mxu0 %v2062
    %2581 = vmatpush1.bf16.msra.mxu0 %v2061
    %2582 = vmatprep.subr.bf16.mxu0 %v2074
    %2583 = vmatpush1.bf16.msra.mxu0 %v2073
    %2584 = vmatprep.subr.bf16.mxu0 %v2086
    %2585 = vmatpush1.bf16.msra.mxu0 %v2085
    %2586 = vmatprep.subr.bf16.mxu0 %v2098
    %2587 = vmatpush1.bf16.msra.mxu0 %v2097
    %2588 = vmatprep.mubr.bf16.mxu0 %v552
    %2589 = vmatmul.mubr.bf16.gmra.mrb[0].mxu0 %v551
    %v2590 = vpop.f32.mrb[0].mxu0
    %v2591 = vadd.f32 %v2528, %v2590
    %v2592 = vpop.f32.mrb[0].mxu0
    %v2593 = vadd.f32 %v2530, %v2592
    %v2594 = vpop.f32.mrb[0].mxu0
    %v2595 = vadd.f32 %v2532, %v2594
    %v2596 = vpop.f32.mrb[0].mxu0
    %v2597 = vadd.f32 %v2534, %v2596
    %2598 = vmatprep.mubr.bf16.mxu0 %v556
    %2599 = vmatmul.mubr.bf16.gmra.mrb[0].mxu0 %v555
    %v2600 = vpop.f32.mrb[0].mxu0
    %v2601 = vadd.f32 %v2538, %v2600
    %v2602 = vpop.f32.mrb[0].mxu0
    %v2603 = vadd.f32 %v2540, %v2602
    %v2604 = vpop.f32.mrb[0].mxu0
    %v2605 = vadd.f32 %v2542, %v2604
    %v2606 = vpop.f32.mrb[0].mxu0
    %v2607 = vadd.f32 %v2544, %v2606
    %2608 = vmatprep.mubr.bf16.mxu0 %v560
    %2609 = vmatmul.mubr.bf16.gmra.mrb[0].mxu0 %v559
    %v2610 = vpop.f32.mrb[0].mxu0
    %v2611 = vadd.f32 %v2548, %v2610
    %v2612 = vpop.f32.mrb[0].mxu0
    %v2613 = vadd.f32 %v2550, %v2612
    %v2614 = vpop.f32.mrb[0].mxu0
    %v2615 = vadd.f32 %v2552, %v2614
    %v2616 = vpop.f32.mrb[0].mxu0
    %v2617 = vadd.f32 %v2554, %v2616
    %2618 = vdwg.mxu0
    %2619 = vmatprep.subr.bf16.mxu0 %v1728
    %2620 = vmatpush1.bf16.msra.mxu0 %v1727
    %2621 = vmatprep.subr.bf16.mxu0 %v1740
    %2622 = vmatpush1.bf16.msra.mxu0 %v1739
    %2623 = vmatprep.subr.bf16.mxu0 %v1752
    %2624 = vmatpush1.bf16.msra.mxu0 %v1751
    %2625 = vmatprep.subr.bf16.mxu0 %v1764
    %2626 = vmatpush1.bf16.msra.mxu0 %v1763
    %2627 = vmatprep.subr.bf16.mxu0 %v1776
    %2628 = vmatpush1.bf16.msra.mxu0 %v1775
    %2629 = vmatprep.subr.bf16.mxu0 %v1788
    %2630 = vmatpush1.bf16.msra.mxu0 %v1787
    %2631 = vmatprep.subr.bf16.mxu0 %v1800
    %2632 = vmatpush1.bf16.msra.mxu0 %v1799
    %2633 = vmatprep.subr.bf16.mxu0 %v1812
    %2634 = vmatpush1.bf16.msra.mxu0 %v1811
    %2635 = vmatprep.subr.bf16.mxu0 %v1824
    %2636 = vmatpush1.bf16.msra.mxu0 %v1823
    %2637 = vmatprep.subr.bf16.mxu0 %v1836
    %2638 = vmatpush1.bf16.msra.mxu0 %v1835
    %2639 = vmatprep.subr.bf16.mxu0 %v1848
    %2640 = vmatpush1.bf16.msra.mxu0 %v1847
    %2641 = vmatprep.subr.bf16.mxu0 %v1860
    %2642 = vmatpush1.bf16.msra.mxu0 %v1859
    %2643 = vmatprep.subr.bf16.mxu0 %v1872
    %2644 = vmatpush1.bf16.msra.mxu0 %v1871
    %2645 = vmatprep.subr.bf16.mxu0 %v1884
    %2646 = vmatpush1.bf16.msra.mxu0 %v1883
    %2647 = vmatprep.subr.bf16.mxu0 %v1896
    %2648 = vmatpush1.bf16.msra.mxu0 %v1895
    %2649 = vmatprep.subr.bf16.mxu0 %v1908
    %2650 = vmatpush1.bf16.msra.mxu0 %v1907
    %2651 = vmatprep.mubr.bf16.mxu0 %v550
    %2652 = vmatmul.mubr.bf16.gmra.mrb[0].mxu0 %v549
    %v2653 = vpop.f32.mrb[0].mxu0
    %v2654 = vadd.f32 %v464, %v2653
    %v2655 = vpop.f32.mrb[0].mxu0
    %v2656 = vadd.f32 %v468, %v2655
    %v2657 = vpop.f32.mrb[0].mxu0
    %v2658 = vadd.f32 %v464, %v2657
    %v2659 = vpop.f32.mrb[0].mxu0
    %v2660 = vadd.f32 %v468, %v2659
    %2661 = vmatprep.mubr.bf16.mxu0 %v554
    %2662 = vmatmul.mubr.bf16.gmra.mrb[0].mxu0 %v553
    %v2663 = vpop.f32.mrb[0].mxu0
    %v2664 = vadd.f32 %v464, %v2663
    %v2665 = vpop.f32.mrb[0].mxu0
    %v2666 = vadd.f32 %v468, %v2665
    %v2667 = vpop.f32.mrb[0].mxu0
    %v2668 = vadd.f32 %v464, %v2667
    %v2669 = vpop.f32.mrb[0].mxu0
    %v2670 = vadd.f32 %v468, %v2669
    %2671 = vmatprep.mubr.bf16.mxu0 %v558
    %2672 = vmatmul.mubr.bf16.gmra.mrb[0].mxu0 %v557
    %v2673 = vpop.f32.mrb[0].mxu0
    %v2674 = vadd.f32 %v464, %v2673
    %v2675 = vpop.f32.mrb[0].mxu0
    %v2676 = vadd.f32 %v468, %v2675
    %v2677 = vpop.f32.mrb[0].mxu0
    %v2678 = vadd.f32 %v464, %v2677
    %v2679 = vpop.f32.mrb[0].mxu0
    %v2680 = vadd.f32 %v468, %v2679
    %2681 = vdwg.mxu0
    %2682 = vmatprep.subr.bf16.mxu0 %v1920
    %2683 = vmatpush1.bf16.msra.mxu0 %v1919
    %2684 = vmatprep.subr.bf16.mxu0 %v1932
    %2685 = vmatpush1.bf16.msra.mxu0 %v1931
    %2686 = vmatprep.subr.bf16.mxu0 %v1944
    %2687 = vmatpush1.bf16.msra.mxu0 %v1943
    %2688 = vmatprep.subr.bf16.mxu0 %v1956
    %2689 = vmatpush1.bf16.msra.mxu0 %v1955
    %2690 = vmatprep.subr.bf16.mxu0 %v1968
    %2691 = vmatpush1.bf16.msra.mxu0 %v1967
    %2692 = vmatprep.subr.bf16.mxu0 %v1980
    %2693 = vmatpush1.bf16.msra.mxu0 %v1979
    %2694 = vmatprep.subr.bf16.mxu0 %v1992
    %2695 = vmatpush1.bf16.msra.mxu0 %v1991
    %2696 = vmatprep.subr.bf16.mxu0 %v2004
    %2697 = vmatpush1.bf16.msra.mxu0 %v2003
    %2698 = vmatprep.subr.bf16.mxu0 %v2016
    %2699 = vmatpush1.bf16.msra.mxu0 %v2015
    %2700 = vmatprep.subr.bf16.mxu0 %v2028
    %2701 = vmatpush1.bf16.msra.mxu0 %v2027
    %2702 = vmatprep.subr.bf16.mxu0 %v2040
    %2703 = vmatpush1.bf16.msra.mxu0 %v2039
    %2704 = vmatprep.subr.bf16.mxu0 %v2052
    %2705 = vmatpush1.bf16.msra.mxu0 %v2051
    %2706 = vmatprep.subr.bf16.mxu0 %v2064
    %2707 = vmatpush1.bf16.msra.mxu0 %v2063
    %2708 = vmatprep.subr.bf16.mxu0 %v2076
    %2709 = vmatpush1.bf16.msra.mxu0 %v2075
    %2710 = vmatprep.subr.bf16.mxu0 %v2088
    %2711 = vmatpush1.bf16.msra.mxu0 %v2087
    %2712 = vmatprep.subr.bf16.mxu0 %v2100
    %2713 = vmatpush1.bf16.msra.mxu0 %v2099
    %2714 = vmatprep.mubr.bf16.mxu0 %v552
    %2715 = vmatmul.mubr.bf16.gmra.mrb[0].mxu0 %v551
    %v2716 = vpop.f32.mrb[0].mxu0
    %v2717 = vadd.f32 %v2654, %v2716
    %v2718 = vpop.f32.mrb[0].mxu0
    %v2719 = vadd.f32 %v2656, %v2718
    %v2720 = vpop.f32.mrb[0].mxu0
    %v2721 = vadd.f32 %v2658, %v2720
    %v2722 = vpop.f32.mrb[0].mxu0
    %v2723 = vadd.f32 %v2660, %v2722
    %2724 = vmatprep.mubr.bf16.mxu0 %v556
    %2725 = vmatmul.mubr.bf16.gmra.mrb[0].mxu0 %v555
    %v2726 = vpop.f32.mrb[0].mxu0
    %v2727 = vadd.f32 %v2664, %v2726
    %v2728 = vpop.f32.mrb[0].mxu0
    %v2729 = vadd.f32 %v2666, %v2728
    %v2730 = vpop.f32.mrb[0].mxu0
    %v2731 = vadd.f32 %v2668, %v2730
    %v2732 = vpop.f32.mrb[0].mxu0
    %v2733 = vadd.f32 %v2670, %v2732
    %2734 = vmatprep.mubr.bf16.mxu0 %v560
    %2735 = vmatmul.mubr.bf16.gmra.mrb[0].mxu0 %v559
    %v2736 = vpop.f32.mrb[0].mxu0
    %v2737 = vadd.f32 %v2674, %v2736
    %v2738 = vpop.f32.mrb[0].mxu0
    %v2739 = vadd.f32 %v2676, %v2738
    %v2740 = vpop.f32.mrb[0].mxu0
    %v2741 = vadd.f32 %v2678, %v2740
    %v2742 = vpop.f32.mrb[0].mxu0
    %v2743 = vadd.f32 %v2680, %v2742
    %2744 = vdwg.mxu0
    %2745 = vmatprep.subr.bf16.mxu0 %v1730
    %2746 = vmatpush1.bf16.msra.mxu0 %v1729
    %2747 = vmatprep.subr.bf16.mxu0 %v1742
    %2748 = vmatpush1.bf16.msra.mxu0 %v1741
    %2749 = vmatprep.subr.bf16.mxu0 %v1754
    %2750 = vmatpush1.bf16.msra.mxu0 %v1753
    %2751 = vmatprep.subr.bf16.mxu0 %v1766
    %2752 = vmatpush1.bf16.msra.mxu0 %v1765
    %2753 = vmatprep.subr.bf16.mxu0 %v1778
    %2754 = vmatpush1.bf16.msra.mxu0 %v1777
    %2755 = vmatprep.subr.bf16.mxu0 %v1790
    %2756 = vmatpush1.bf16.msra.mxu0 %v1789
    %2757 = vmatprep.subr.bf16.mxu0 %v1802
    %2758 = vmatpush1.bf16.msra.mxu0 %v1801
    %2759 = vmatprep.subr.bf16.mxu0 %v1814
    %2760 = vmatpush1.bf16.msra.mxu0 %v1813
    %2761 = vmatprep.subr.bf16.mxu0 %v1826
    %2762 = vmatpush1.bf16.msra.mxu0 %v1825
    %2763 = vmatprep.subr.bf16.mxu0 %v1838
    %2764 = vmatpush1.bf16.msra.mxu0 %v1837
    %2765 = vmatprep.subr.bf16.mxu0 %v1850
    %2766 = vmatpush1.bf16.msra.mxu0 %v1849
    %2767 = vmatprep.subr.bf16.mxu0 %v1862
    %2768 = vmatpush1.bf16.msra.mxu0 %v1861
    %2769 = vmatprep.subr.bf16.mxu0 %v1874
    %2770 = vmatpush1.bf16.msra.mxu0 %v1873
    %2771 = vmatprep.subr.bf16.mxu0 %v1886
    %2772 = vmatpush1.bf16.msra.mxu0 %v1885
    %2773 = vmatprep.subr.bf16.mxu0 %v1898
    %2774 = vmatpush1.bf16.msra.mxu0 %v1897
    %2775 = vmatprep.subr.bf16.mxu0 %v1910
    %2776 = vmatpush1.bf16.msra.mxu0 %v1909
    %2777 = vmatprep.mubr.bf16.mxu0 %v550
    %2778 = vmatmul.mubr.bf16.gmra.mrb[0].mxu0 %v549
    %v2779 = vpop.f32.mrb[0].mxu0
    %v2780 = vadd.f32 %v472, %v2779
    %v2781 = vpop.f32.mrb[0].mxu0
    %v2782 = vadd.f32 %v476, %v2781
    %v2783 = vpop.f32.mrb[0].mxu0
    %v2784 = vadd.f32 %v472, %v2783
    %v2785 = vpop.f32.mrb[0].mxu0
    %v2786 = vadd.f32 %v476, %v2785
    %2787 = vmatprep.mubr.bf16.mxu0 %v554
    %2788 = vmatmul.mubr.bf16.gmra.mrb[0].mxu0 %v553
    %v2789 = vpop.f32.mrb[0].mxu0
    %v2790 = vadd.f32 %v472, %v2789
    %v2791 = vpop.f32.mrb[0].mxu0
    %v2792 = vadd.f32 %v476, %v2791
    %v2793 = vpop.f32.mrb[0].mxu0
    %v2794 = vadd.f32 %v472, %v2793
    %v2795 = vpop.f32.mrb[0].mxu0
    %v2796 = vadd.f32 %v476, %v2795
    %2797 = vmatprep.mubr.bf16.mxu0 %v558
    %2798 = vmatmul.mubr.bf16.gmra.mrb[0].mxu0 %v557
    %v2799 = vpop.f32.mrb[0].mxu0
    %v2800 = vadd.f32 %v472, %v2799
    %v2801 = vpop.f32.mrb[0].mxu0
    %v2802 = vadd.f32 %v476, %v2801
    %v2803 = vpop.f32.mrb[0].mxu0
    %v2804 = vadd.f32 %v472, %v2803
    %v2805 = vpop.f32.mrb[0].mxu0
    %v2806 = vadd.f32 %v476, %v2805
    %2807 = vdwg.mxu0
    %2808 = vmatprep.subr.bf16.mxu0 %v1922
    %2809 = vmatpush1.bf16.msra.mxu0 %v1921
    %2810 = vmatprep.subr.bf16.mxu0 %v1934
    %2811 = vmatpush1.bf16.msra.mxu0 %v1933
    %2812 = vmatprep.subr.bf16.mxu0 %v1946
    %2813 = vmatpush1.bf16.msra.mxu0 %v1945
    %2814 = vmatprep.subr.bf16.mxu0 %v1958
    %2815 = vmatpush1.bf16.msra.mxu0 %v1957
    %2816 = vmatprep.subr.bf16.mxu0 %v1970
    %2817 = vmatpush1.bf16.msra.mxu0 %v1969
    %2818 = vmatprep.subr.bf16.mxu0 %v1982
    %2819 = vmatpush1.bf16.msra.mxu0 %v1981
    %2820 = vmatprep.subr.bf16.mxu0 %v1994
    %2821 = vmatpush1.bf16.msra.mxu0 %v1993
    %2822 = vmatprep.subr.bf16.mxu0 %v2006
    %2823 = vmatpush1.bf16.msra.mxu0 %v2005
    %2824 = vmatprep.subr.bf16.mxu0 %v2018
    %2825 = vmatpush1.bf16.msra.mxu0 %v2017
    %2826 = vmatprep.subr.bf16.mxu0 %v2030
    %2827 = vmatpush1.bf16.msra.mxu0 %v2029
    %2828 = vmatprep.subr.bf16.mxu0 %v2042
    %2829 = vmatpush1.bf16.msra.mxu0 %v2041
    %2830 = vmatprep.subr.bf16.mxu0 %v2054
    %2831 = vmatpush1.bf16.msra.mxu0 %v2053
    %2832 = vmatprep.subr.bf16.mxu0 %v2066
    %2833 = vmatpush1.bf16.msra.mxu0 %v2065
    %2834 = vmatprep.subr.bf16.mxu0 %v2078
    %2835 = vmatpush1.bf16.msra.mxu0 %v2077
    %2836 = vmatprep.subr.bf16.mxu0 %v2090
    %2837 = vmatpush1.bf16.msra.mxu0 %v2089
    %2838 = vmatprep.subr.bf16.mxu0 %v2102
    %2839 = vmatpush1.bf16.msra.mxu0 %v2101
    %2840 = vmatprep.mubr.bf16.mxu0 %v552
    %2841 = vmatmul.mubr.bf16.gmra.mrb[0].mxu0 %v551
    %v2842 = vpop.f32.mrb[0].mxu0
    %v2843 = vadd.f32 %v2780, %v2842
    %v2844 = vpop.f32.mrb[0].mxu0
    %v2845 = vadd.f32 %v2782, %v2844
    %v2846 = vpop.f32.mrb[0].mxu0
    %v2847 = vadd.f32 %v2784, %v2846
    %v2848 = vpop.f32.mrb[0].mxu0
    %v2849 = vadd.f32 %v2786, %v2848
    %2850 = vmatprep.mubr.bf16.mxu0 %v556
    %2851 = vmatmul.mubr.bf16.gmra.mrb[0].mxu0 %v555
    %v2852 = vpop.f32.mrb[0].mxu0
    %v2853 = vadd.f32 %v2790, %v2852
    %v2854 = vpop.f32.mrb[0].mxu0
    %v2855 = vadd.f32 %v2792, %v2854
    %v2856 = vpop.f32.mrb[0].mxu0
    %v2857 = vadd.f32 %v2794, %v2856
    %v2858 = vpop.f32.mrb[0].mxu0
    %v2859 = vadd.f32 %v2796, %v2858
    %2860 = vmatprep.mubr.bf16.mxu0 %v560
    %2861 = vmatmul.mubr.bf16.gmra.mrb[0].mxu0 %v559
    %v2862 = vpop.f32.mrb[0].mxu0
    %v2863 = vadd.f32 %v2800, %v2862
    %v2864 = vpop.f32.mrb[0].mxu0
    %v2865 = vadd.f32 %v2802, %v2864
    %v2866 = vpop.f32.mrb[0].mxu0
    %v2867 = vadd.f32 %v2804, %v2866
    %v2868 = vpop.f32.mrb[0].mxu0
    %v2869 = vadd.f32 %v2806, %v2868
    %2870 = vdwg.mxu0
    %2871 = vmatprep.subr.bf16.mxu0 %v1732
    %2872 = vmatpush1.bf16.msra.mxu0 %v1731
    %2873 = vmatprep.subr.bf16.mxu0 %v1744
    %2874 = vmatpush1.bf16.msra.mxu0 %v1743
    %2875 = vmatprep.subr.bf16.mxu0 %v1756
    %2876 = vmatpush1.bf16.msra.mxu0 %v1755
    %2877 = vmatprep.subr.bf16.mxu0 %v1768
    %2878 = vmatpush1.bf16.msra.mxu0 %v1767
    %2879 = vmatprep.subr.bf16.mxu0 %v1780
    %2880 = vmatpush1.bf16.msra.mxu0 %v1779
    %2881 = vmatprep.subr.bf16.mxu0 %v1792
    %2882 = vmatpush1.bf16.msra.mxu0 %v1791
    %2883 = vmatprep.subr.bf16.mxu0 %v1804
    %2884 = vmatpush1.bf16.msra.mxu0 %v1803
    %2885 = vmatprep.subr.bf16.mxu0 %v1816
    %2886 = vmatpush1.bf16.msra.mxu0 %v1815
    %2887 = vmatprep.subr.bf16.mxu0 %v1828
    %2888 = vmatpush1.bf16.msra.mxu0 %v1827
    %2889 = vmatprep.subr.bf16.mxu0 %v1840
    %2890 = vmatpush1.bf16.msra.mxu0 %v1839
    %2891 = vmatprep.subr.bf16.mxu0 %v1852
    %2892 = vmatpush1.bf16.msra.mxu0 %v1851
    %2893 = vmatprep.subr.bf16.mxu0 %v1864
    %2894 = vmatpush1.bf16.msra.mxu0 %v1863
    %2895 = vmatprep.subr.bf16.mxu0 %v1876
    %2896 = vmatpush1.bf16.msra.mxu0 %v1875
    %2897 = vmatprep.subr.bf16.mxu0 %v1888
    %2898 = vmatpush1.bf16.msra.mxu0 %v1887
    %2899 = vmatprep.subr.bf16.mxu0 %v1900
    %2900 = vmatpush1.bf16.msra.mxu0 %v1899
    %2901 = vmatprep.subr.bf16.mxu0 %v1912
    %2902 = vmatpush1.bf16.msra.mxu0 %v1911
    %2903 = vmatprep.mubr.bf16.mxu0 %v550
    %2904 = vmatmul.mubr.bf16.gmra.mrb[0].mxu0 %v549
    %v2905 = vpop.f32.mrb[0].mxu0
    %v2906 = vadd.f32 %v480, %v2905
    %v2907 = vpop.f32.mrb[0].mxu0
    %v2908 = vadd.f32 %v484, %v2907
    %v2909 = vpop.f32.mrb[0].mxu0
    %v2910 = vadd.f32 %v480, %v2909
    %v2911 = vpop.f32.mrb[0].mxu0
    %v2912 = vadd.f32 %v484, %v2911
    %2913 = vmatprep.mubr.bf16.mxu0 %v554
    %2914 = vmatmul.mubr.bf16.gmra.mrb[0].mxu0 %v553
    %v2915 = vpop.f32.mrb[0].mxu0
    %v2916 = vadd.f32 %v480, %v2915
    %v2917 = vpop.f32.mrb[0].mxu0
    %v2918 = vadd.f32 %v484, %v2917
    %v2919 = vpop.f32.mrb[0].mxu0
    %v2920 = vadd.f32 %v480, %v2919
    %v2921 = vpop.f32.mrb[0].mxu0
    %v2922 = vadd.f32 %v484, %v2921
    %2923 = vmatprep.mubr.bf16.mxu0 %v558
    %2924 = vmatmul.mubr.bf16.gmra.mrb[0].mxu0 %v557
    %v2925 = vpop.f32.mrb[0].mxu0
    %v2926 = vadd.f32 %v480, %v2925
    %v2927 = vpop.f32.mrb[0].mxu0
    %v2928 = vadd.f32 %v484, %v2927
    %v2929 = vpop.f32.mrb[0].mxu0
    %v2930 = vadd.f32 %v480, %v2929
    %v2931 = vpop.f32.mrb[0].mxu0
    %v2932 = vadd.f32 %v484, %v2931
    %2933 = vdwg.mxu0
    %2934 = vmatprep.subr.bf16.mxu0 %v1924
    %2935 = vmatpush1.bf16.msra.mxu0 %v1923
    %2936 = vmatprep.subr.bf16.mxu0 %v1936
    %2937 = vmatpush1.bf16.msra.mxu0 %v1935
    %2938 = vmatprep.subr.bf16.mxu0 %v1948
    %2939 = vmatpush1.bf16.msra.mxu0 %v1947
    %2940 = vmatprep.subr.bf16.mxu0 %v1960
    %2941 = vmatpush1.bf16.msra.mxu0 %v1959
    %2942 = vmatprep.subr.bf16.mxu0 %v1972
    %2943 = vmatpush1.bf16.msra.mxu0 %v1971
    %2944 = vmatprep.subr.bf16.mxu0 %v1984
    %2945 = vmatpush1.bf16.msra.mxu0 %v1983
    %2946 = vmatprep.subr.bf16.mxu0 %v1996
    %2947 = vmatpush1.bf16.msra.mxu0 %v1995
    %2948 = vmatprep.subr.bf16.mxu0 %v2008
    %2949 = vmatpush1.bf16.msra.mxu0 %v2007
    %2950 = vmatprep.subr.bf16.mxu0 %v2020
    %2951 = vmatpush1.bf16.msra.mxu0 %v2019
    %2952 = vmatprep.subr.bf16.mxu0 %v2032
    %2953 = vmatpush1.bf16.msra.mxu0 %v2031
    %2954 = vmatprep.subr.bf16.mxu0 %v2044
    %2955 = vmatpush1.bf16.msra.mxu0 %v2043
    %2956 = vmatprep.subr.bf16.mxu0 %v2056
    %2957 = vmatpush1.bf16.msra.mxu0 %v2055
    %2958 = vmatprep.subr.bf16.mxu0 %v2068
    %2959 = vmatpush1.bf16.msra.mxu0 %v2067
    %2960 = vmatprep.subr.bf16.mxu0 %v2080
    %2961 = vmatpush1.bf16.msra.mxu0 %v2079
    %2962 = vmatprep.subr.bf16.mxu0 %v2092
    %2963 = vmatpush1.bf16.msra.mxu0 %v2091
    %2964 = vmatprep.subr.bf16.mxu0 %v2104
    %2965 = vmatpush1.bf16.msra.mxu0 %v2103
    %2966 = vmatprep.mubr.bf16.mxu0 %v552
    %2967 = vmatmul.mubr.bf16.gmra.mrb[0].mxu0 %v551
    %v2968 = vpop.f32.mrb[0].mxu0
    %v2969 = vadd.f32 %v2906, %v2968
    %v2970 = vpop.f32.mrb[0].mxu0
    %v2971 = vadd.f32 %v2908, %v2970
    %v2972 = vpop.f32.mrb[0].mxu0
    %v2973 = vadd.f32 %v2910, %v2972
    %v2974 = vpop.f32.mrb[0].mxu0
    %v2975 = vadd.f32 %v2912, %v2974
    %2976 = vmatprep.mubr.bf16.mxu0 %v556
    %2977 = vmatmul.mubr.bf16.gmra.mrb[0].mxu0 %v555
    %v2978 = vpop.f32.mrb[0].mxu0
    %v2979 = vadd.f32 %v2916, %v2978
    %v2980 = vpop.f32.mrb[0].mxu0
    %v2981 = vadd.f32 %v2918, %v2980
    %v2982 = vpop.f32.mrb[0].mxu0
    %v2983 = vadd.f32 %v2920, %v2982
    %v2984 = vpop.f32.mrb[0].mxu0
    %v2985 = vadd.f32 %v2922, %v2984
    %2986 = vmatprep.mubr.bf16.mxu0 %v560
    %2987 = vmatmul.mubr.bf16.gmra.mrb[0].mxu0 %v559
    %v2988 = vpop.f32.mrb[0].mxu0
    %v2989 = vadd.f32 %v2926, %v2988
    %v2990 = vpop.f32.mrb[0].mxu0
    %v2991 = vadd.f32 %v2928, %v2990
    %v2992 = vpop.f32.mrb[0].mxu0
    %v2993 = vadd.f32 %v2930, %v2992
    %v2994 = vpop.f32.mrb[0].mxu0
    %v2995 = vadd.f32 %v2932, %v2994
    %2996 = vdwg.mxu0
    %2997 = vmatprep.subr.bf16.mxu0 %v1734
    %2998 = vmatpush1.bf16.msra.mxu0 %v1733
    %2999 = vmatprep.subr.bf16.mxu0 %v1746
    %3000 = vmatpush1.bf16.msra.mxu0 %v1745
    %3001 = vmatprep.subr.bf16.mxu0 %v1758
    %3002 = vmatpush1.bf16.msra.mxu0 %v1757
    %3003 = vmatprep.subr.bf16.mxu0 %v1770
    %3004 = vmatpush1.bf16.msra.mxu0 %v1769
    %3005 = vmatprep.subr.bf16.mxu0 %v1782
    %3006 = vmatpush1.bf16.msra.mxu0 %v1781
    %3007 = vmatprep.subr.bf16.mxu0 %v1794
    %3008 = vmatpush1.bf16.msra.mxu0 %v1793
    %3009 = vmatprep.subr.bf16.mxu0 %v1806
    %3010 = vmatpush1.bf16.msra.mxu0 %v1805
    %3011 = vmatprep.subr.bf16.mxu0 %v1818
    %3012 = vmatpush1.bf16.msra.mxu0 %v1817
    %3013 = vmatprep.subr.bf16.mxu0 %v1830
    %3014 = vmatpush1.bf16.msra.mxu0 %v1829
    %3015 = vmatprep.subr.bf16.mxu0 %v1842
    %3016 = vmatpush1.bf16.msra.mxu0 %v1841
    %3017 = vmatprep.subr.bf16.mxu0 %v1854
    %3018 = vmatpush1.bf16.msra.mxu0 %v1853
    %3019 = vmatprep.subr.bf16.mxu0 %v1866
    %3020 = vmatpush1.bf16.msra.mxu0 %v1865
    %3021 = vmatprep.subr.bf16.mxu0 %v1878
    %3022 = vmatpush1.bf16.msra.mxu0 %v1877
    %3023 = vmatprep.subr.bf16.mxu0 %v1890
    %3024 = vmatpush1.bf16.msra.mxu0 %v1889
    %3025 = vmatprep.subr.bf16.mxu0 %v1902
    %3026 = vmatpush1.bf16.msra.mxu0 %v1901
    %3027 = vmatprep.subr.bf16.mxu0 %v1914
    %3028 = vmatpush1.bf16.msra.mxu0 %v1913
    %3029 = vmatprep.mubr.bf16.mxu0 %v550
    %3030 = vmatmul.mubr.bf16.gmra.mrb[0].mxu0 %v549
    %v3031 = vpop.f32.mrb[0].mxu0
    %v3032 = vadd.f32 %v488, %v3031
    %v3033 = vpop.f32.mrb[0].mxu0
    %v3034 = vadd.f32 %v492, %v3033
    %v3035 = vpop.f32.mrb[0].mxu0
    %v3036 = vadd.f32 %v488, %v3035
    %v3037 = vpop.f32.mrb[0].mxu0
    %v3038 = vadd.f32 %v492, %v3037
    %3039 = vmatprep.mubr.bf16.mxu0 %v554
    %3040 = vmatmul.mubr.bf16.gmra.mrb[0].mxu0 %v553
    %v3041 = vpop.f32.mrb[0].mxu0
    %v3042 = vadd.f32 %v488, %v3041
    %v3043 = vpop.f32.mrb[0].mxu0
    %v3044 = vadd.f32 %v492, %v3043
    %v3045 = vpop.f32.mrb[0].mxu0
    %v3046 = vadd.f32 %v488, %v3045
    %v3047 = vpop.f32.mrb[0].mxu0
    %v3048 = vadd.f32 %v492, %v3047
    %3049 = vmatprep.mubr.bf16.mxu0 %v558
    %3050 = vmatmul.mubr.bf16.gmra.mrb[0].mxu0 %v557
    %v3051 = vpop.f32.mrb[0].mxu0
    %v3052 = vadd.f32 %v488, %v3051
    %v3053 = vpop.f32.mrb[0].mxu0
    %v3054 = vadd.f32 %v492, %v3053
    %v3055 = vpop.f32.mrb[0].mxu0
    %v3056 = vadd.f32 %v488, %v3055
    %v3057 = vpop.f32.mrb[0].mxu0
    %v3058 = vadd.f32 %v492, %v3057
    %3059 = vdwg.mxu0
    %3060 = vmatprep.subr.bf16.mxu0 %v1926
    %3061 = vmatpush1.bf16.msra.mxu0 %v1925
    %3062 = vmatprep.subr.bf16.mxu0 %v1938
    %3063 = vmatpush1.bf16.msra.mxu0 %v1937
    %3064 = vmatprep.subr.bf16.mxu0 %v1950
    %3065 = vmatpush1.bf16.msra.mxu0 %v1949
    %3066 = vmatprep.subr.bf16.mxu0 %v1962
    %3067 = vmatpush1.bf16.msra.mxu0 %v1961
    %3068 = vmatprep.subr.bf16.mxu0 %v1974
    %3069 = vmatpush1.bf16.msra.mxu0 %v1973
    %3070 = vmatprep.subr.bf16.mxu0 %v1986
    %3071 = vmatpush1.bf16.msra.mxu0 %v1985
    %3072 = vmatprep.subr.bf16.mxu0 %v1998
    %3073 = vmatpush1.bf16.msra.mxu0 %v1997
    %3074 = vmatprep.subr.bf16.mxu0 %v2010
    %3075 = vmatpush1.bf16.msra.mxu0 %v2009
    %3076 = vmatprep.subr.bf16.mxu0 %v2022
    %3077 = vmatpush1.bf16.msra.mxu0 %v2021
    %3078 = vmatprep.subr.bf16.mxu0 %v2034
    %3079 = vmatpush1.bf16.msra.mxu0 %v2033
    %3080 = vmatprep.subr.bf16.mxu0 %v2046
    %3081 = vmatpush1.bf16.msra.mxu0 %v2045
    %3082 = vmatprep.subr.bf16.mxu0 %v2058
    %3083 = vmatpush1.bf16.msra.mxu0 %v2057
    %3084 = vmatprep.subr.bf16.mxu0 %v2070
    %3085 = vmatpush1.bf16.msra.mxu0 %v2069
    %3086 = vmatprep.subr.bf16.mxu0 %v2082
    %3087 = vmatpush1.bf16.msra.mxu0 %v2081
    %3088 = vmatprep.subr.bf16.mxu0 %v2094
    %3089 = vmatpush1.bf16.msra.mxu0 %v2093
    %3090 = vmatprep.subr.bf16.mxu0 %v2106
    %3091 = vmatpush1.bf16.msra.mxu0 %v2105
    %3092 = vmatprep.mubr.bf16.mxu0 %v552
    %3093 = vmatmul.mubr.bf16.gmra.mrb[0].mxu0 %v551
    %v3094 = vpop.f32.mrb[0].mxu0
    %v3095 = vadd.f32 %v3032, %v3094
    %v3096 = vpop.f32.mrb[0].mxu0
    %v3097 = vadd.f32 %v3034, %v3096
    %v3098 = vpop.f32.mrb[0].mxu0
    %v3099 = vadd.f32 %v3036, %v3098
    %v3100 = vpop.f32.mrb[0].mxu0
    %v3101 = vadd.f32 %v3038, %v3100
    %3102 = vmatprep.mubr.bf16.mxu0 %v556
    %3103 = vmatmul.mubr.bf16.gmra.mrb[0].mxu0 %v555
    %v3104 = vpop.f32.mrb[0].mxu0
    %v3105 = vadd.f32 %v3042, %v3104
    %v3106 = vpop.f32.mrb[0].mxu0
    %v3107 = vadd.f32 %v3044, %v3106
    %v3108 = vpop.f32.mrb[0].mxu0
    %v3109 = vadd.f32 %v3046, %v3108
    %v3110 = vpop.f32.mrb[0].mxu0
    %v3111 = vadd.f32 %v3048, %v3110
    %3112 = vmatprep.mubr.bf16.mxu0 %v560
    %3113 = vmatmul.mubr.bf16.gmra.mrb[0].mxu0 %v559
    %v3114 = vpop.f32.mrb[0].mxu0
    %v3115 = vadd.f32 %v3052, %v3114
    %v3116 = vpop.f32.mrb[0].mxu0
    %v3117 = vadd.f32 %v3054, %v3116
    %v3118 = vpop.f32.mrb[0].mxu0
    %v3119 = vadd.f32 %v3056, %v3118
    %v3120 = vpop.f32.mrb[0].mxu0
    %v3121 = vadd.f32 %v3058, %v3120
    %3122 = vdwg.mxu0
    %3123 = vmatprep.subr.bf16.mxu0 %v1736
    %3124 = vmatpush1.bf16.msra.mxu0 %v1735
    %3125 = vmatprep.subr.bf16.mxu0 %v1748
    %3126 = vmatpush1.bf16.msra.mxu0 %v1747
    %3127 = vmatprep.subr.bf16.mxu0 %v1760
    %3128 = vmatpush1.bf16.msra.mxu0 %v1759
    %3129 = vmatprep.subr.bf16.mxu0 %v1772
    %3130 = vmatpush1.bf16.msra.mxu0 %v1771
    %3131 = vmatprep.subr.bf16.mxu0 %v1784
    %3132 = vmatpush1.bf16.msra.mxu0 %v1783
    %3133 = vmatprep.subr.bf16.mxu0 %v1796
    %3134 = vmatpush1.bf16.msra.mxu0 %v1795
    %3135 = vmatprep.subr.bf16.mxu0 %v1808
    %3136 = vmatpush1.bf16.msra.mxu0 %v1807
    %3137 = vmatprep.subr.bf16.mxu0 %v1820
    %3138 = vmatpush1.bf16.msra.mxu0 %v1819
    %3139 = vmatprep.subr.bf16.mxu0 %v1832
    %3140 = vmatpush1.bf16.msra.mxu0 %v1831
    %3141 = vmatprep.subr.bf16.mxu0 %v1844
    %3142 = vmatpush1.bf16.msra.mxu0 %v1843
    %3143 = vmatprep.subr.bf16.mxu0 %v1856
    %3144 = vmatpush1.bf16.msra.mxu0 %v1855
    %3145 = vmatprep.subr.bf16.mxu0 %v1868
    %3146 = vmatpush1.bf16.msra.mxu0 %v1867
    %3147 = vmatprep.subr.bf16.mxu0 %v1880
    %3148 = vmatpush1.bf16.msra.mxu0 %v1879
    %3149 = vmatprep.subr.bf16.mxu0 %v1892
    %3150 = vmatpush1.bf16.msra.mxu0 %v1891
    %3151 = vmatprep.subr.bf16.mxu0 %v1904
    %3152 = vmatpush1.bf16.msra.mxu0 %v1903
    %3153 = vmatprep.subr.bf16.mxu0 %v1916
    %3154 = vmatpush1.bf16.msra.mxu0 %v1915
    %3155 = vmatprep.mubr.bf16.mxu0 %v550
    %3156 = vmatmul.mubr.bf16.gmra.mrb[0].mxu0 %v549
    %v3157 = vpop.f32.mrb[0].mxu0
    %v3158 = vadd.f32 %v496, %v3157
    %v3159 = vpop.f32.mrb[0].mxu0
    %v3160 = vadd.f32 %v500, %v3159
    %v3161 = vpop.f32.mrb[0].mxu0
    %v3162 = vadd.f32 %v496, %v3161
    %v3163 = vpop.f32.mrb[0].mxu0
    %v3164 = vadd.f32 %v500, %v3163
    %3165 = vmatprep.mubr.bf16.mxu0 %v554
    %3166 = vmatmul.mubr.bf16.gmra.mrb[0].mxu0 %v553
    %v3167 = vpop.f32.mrb[0].mxu0
    %v3168 = vadd.f32 %v496, %v3167
    %v3169 = vpop.f32.mrb[0].mxu0
    %v3170 = vadd.f32 %v500, %v3169
    %v3171 = vpop.f32.mrb[0].mxu0
    %v3172 = vadd.f32 %v496, %v3171
    %v3173 = vpop.f32.mrb[0].mxu0
    %v3174 = vadd.f32 %v500, %v3173
    %3175 = vmatprep.mubr.bf16.mxu0 %v558
    %3176 = vmatmul.mubr.bf16.gmra.mrb[0].mxu0 %v557
    %v3177 = vpop.f32.mrb[0].mxu0
    %v3178 = vadd.f32 %v496, %v3177
    %v3179 = vpop.f32.mrb[0].mxu0
    %v3180 = vadd.f32 %v500, %v3179
    %v3181 = vpop.f32.mrb[0].mxu0
    %v3182 = vadd.f32 %v496, %v3181
    %v3183 = vpop.f32.mrb[0].mxu0
    %v3184 = vadd.f32 %v500, %v3183
    %3185 = vdwg.mxu0
    %3186 = vmatprep.subr.bf16.mxu0 %v1928
    %3187 = vmatpush1.bf16.msra.mxu0 %v1927
    %3188 = vmatprep.subr.bf16.mxu0 %v1940
    %3189 = vmatpush1.bf16.msra.mxu0 %v1939
    %3190 = vmatprep.subr.bf16.mxu0 %v1952
    %3191 = vmatpush1.bf16.msra.mxu0 %v1951
    %3192 = vmatprep.subr.bf16.mxu0 %v1964
    %3193 = vmatpush1.bf16.msra.mxu0 %v1963
    %3194 = vmatprep.subr.bf16.mxu0 %v1976
    %3195 = vmatpush1.bf16.msra.mxu0 %v1975
    %3196 = vmatprep.subr.bf16.mxu0 %v1988
    %3197 = vmatpush1.bf16.msra.mxu0 %v1987
    %3198 = vmatprep.subr.bf16.mxu0 %v2000
    %3199 = vmatpush1.bf16.msra.mxu0 %v1999
    %3200 = vmatprep.subr.bf16.mxu0 %v2012
    %3201 = vmatpush1.bf16.msra.mxu0 %v2011
    %3202 = vmatprep.subr.bf16.mxu0 %v2024
    %3203 = vmatpush1.bf16.msra.mxu0 %v2023
    %3204 = vmatprep.subr.bf16.mxu0 %v2036
    %3205 = vmatpush1.bf16.msra.mxu0 %v2035
    %3206 = vmatprep.subr.bf16.mxu0 %v2048
    %3207 = vmatpush1.bf16.msra.mxu0 %v2047
    %3208 = vmatprep.subr.bf16.mxu0 %v2060
    %3209 = vmatpush1.bf16.msra.mxu0 %v2059
    %3210 = vmatprep.subr.bf16.mxu0 %v2072
    %3211 = vmatpush1.bf16.msra.mxu0 %v2071
    %3212 = vmatprep.subr.bf16.mxu0 %v2084
    %3213 = vmatpush1.bf16.msra.mxu0 %v2083
    %3214 = vmatprep.subr.bf16.mxu0 %v2096
    %3215 = vmatpush1.bf16.msra.mxu0 %v2095
    %3216 = vmatprep.subr.bf16.mxu0 %v2108
    %3217 = vmatpush1.bf16.msra.mxu0 %v2107
    %3218 = vmatprep.mubr.bf16.mxu0 %v552
    %3219 = vmatmul.mubr.bf16.gmra.mrb[0].mxu0 %v551
    %v3220 = vpop.f32.mrb[0].mxu0
    %v3221 = vadd.f32 %v3158, %v3220
    %v3222 = vpop.f32.mrb[0].mxu0
    %v3223 = vadd.f32 %v3160, %v3222
    %v3224 = vpop.f32.mrb[0].mxu0
    %v3225 = vadd.f32 %v3162, %v3224
    %v3226 = vpop.f32.mrb[0].mxu0
    %v3227 = vadd.f32 %v3164, %v3226
    %3228 = vmatprep.mubr.bf16.mxu0 %v556
    %3229 = vmatmul.mubr.bf16.gmra.mrb[0].mxu0 %v555
    %v3230 = vpop.f32.mrb[0].mxu0
    %v3231 = vadd.f32 %v3168, %v3230
    %v3232 = vpop.f32.mrb[0].mxu0
    %v3233 = vadd.f32 %v3170, %v3232
    %v3234 = vpop.f32.mrb[0].mxu0
    %v3235 = vadd.f32 %v3172, %v3234
    %v3236 = vpop.f32.mrb[0].mxu0
    %v3237 = vadd.f32 %v3174, %v3236
    %3238 = vmatprep.mubr.bf16.mxu0 %v560
    %3239 = vmatmul.mubr.bf16.gmra.mrb[0].mxu0 %v559
    %v3240 = vpop.f32.mrb[0].mxu0
    %v3241 = vadd.f32 %v3178, %v3240
    %v3242 = vpop.f32.mrb[0].mxu0
    %v3243 = vadd.f32 %v3180, %v3242
    %v3244 = vpop.f32.mrb[0].mxu0
    %v3245 = vadd.f32 %v3182, %v3244
    %v3246 = vpop.f32.mrb[0].mxu0
    %v3247 = vadd.f32 %v3184, %v3246
    %3248 = vdwg.mxu0
    %3249 = vst [vmem:[#allocation2] sm:$0xff] %v2591
    %3250 = vst [vmem:[#allocation2 + $0x8] sm:$0xff] %v2593
    %3251 = vst [vmem:[#allocation2 + $0x10] sm:$0xff] %v2717
    %3252 = vst [vmem:[#allocation2 + $0x18] sm:$0xff] %v2719
    %3253 = vst [vmem:[#allocation2 + $0x20] sm:$0xff] %v2843
    %3254 = vst [vmem:[#allocation2 + $0x28] sm:$0xff] %v2845
    %3255 = vst [vmem:[#allocation2 + $0x30] sm:$0xff] %v2969
    %3256 = vst [vmem:[#allocation2 + $0x38] sm:$0xff] %v2971
    %3257 = vst [vmem:[#allocation2 + $0x40] sm:$0xff] %v3095
    %3258 = vst [vmem:[#allocation2 + $0x48] sm:$0xff] %v3097
    %3259 = vst [vmem:[#allocation2 + $0x50] sm:$0xff] %v3221
    %3260 = vst [vmem:[#allocation2 + $0x58] sm:$0xff] %v3223
    %3261 = vst [vmem:[#allocation2 + $0x60] sm:$0xff] %v2595
    %3262 = vst [vmem:[#allocation2 + $0x68] sm:$0xff] %v2597
    %3263 = vst [vmem:[#allocation2 + $0x70] sm:$0xff] %v2721
    %3264 = vst [vmem:[#allocation2 + $0x78] sm:$0xff] %v2723
    %3265 = vst [vmem:[#allocation2 + $0x80] sm:$0xff] %v2847
    %3266 = vst [vmem:[#allocation2 + $0x88] sm:$0xff] %v2849
    %3267 = vst [vmem:[#allocation2 + $0x90] sm:$0xff] %v2973
    %3268 = vst [vmem:[#allocation2 + $0x98] sm:$0xff] %v2975
    %3269 = vst [vmem:[#allocation2 + $0xa0] sm:$0xff] %v3099
    %3270 = vst [vmem:[#allocation2 + $0xa8] sm:$0xff] %v3101
    %3271 = vst [vmem:[#allocation2 + $0xb0] sm:$0xff] %v3225
    %3272 = vst [vmem:[#allocation2 + $0xb8] sm:$0xff] %v3227
    %3273 = vst [vmem:[#allocation2 + $0xc0] sm:$0xff] %v2601
    %3274 = vst [vmem:[#allocation2 + $0xc8] sm:$0xff] %v2603
    %3275 = vst [vmem:[#allocation2 + $0xd0] sm:$0xff] %v2727
    %3276 = vst [vmem:[#allocation2 + $0xd8] sm:$0xff] %v2729
    %3277 = vst [vmem:[#allocation2 + $0xe0] sm:$0xff] %v2853
    %3278 = vst [vmem:[#allocation2 + $0xe8] sm:$0xff] %v2855
    %3279 = vst [vmem:[#allocation2 + $0xf0] sm:$0xff] %v2979
    %3280 = vst [vmem:[#allocation2 + $0xf8] sm:$0xff] %v2981
    %3281 = vst [vmem:[#allocation2 + $0x100] sm:$0xff] %v3105
    %3282 = vst [vmem:[#allocation2 + $0x108] sm:$0xff] %v3107
    %3283 = vst [vmem:[#allocation2 + $0x110] sm:$0xff] %v3231
    %3284 = vst [vmem:[#allocation2 + $0x118] sm:$0xff] %v3233
    %3285 = vst [vmem:[#allocation2 + $0x120] sm:$0xff] %v2605
    %3286 = vst [vmem:[#allocation2 + $0x128] sm:$0xff] %v2607
    %3287 = vst [vmem:[#allocation2 + $0x130] sm:$0xff] %v2731
    %3288 = vst [vmem:[#allocation2 + $0x138] sm:$0xff] %v2733
    %3289 = vst [vmem:[#allocation2 + $0x140] sm:$0xff] %v2857
    %3290 = vst [vmem:[#allocation2 + $0x148] sm:$0xff] %v2859
    %3291 = vst [vmem:[#allocation2 + $0x150] sm:$0xff] %v2983
    %3292 = vst [vmem:[#allocation2 + $0x158] sm:$0xff] %v2985
    %3293 = vst [vmem:[#allocation2 + $0x160] sm:$0xff] %v3109
    %3294 = vst [vmem:[#allocation2 + $0x168] sm:$0xff] %v3111
    %3295 = vst [vmem:[#allocation2 + $0x170] sm:$0xff] %v3235
    %3296 = vst [vmem:[#allocation2 + $0x178] sm:$0xff] %v3237
    %3297 = vst [vmem:[#allocation2 + $0x180] sm:$0xff] %v2611
    %3298 = vst [vmem:[#allocation2 + $0x188] sm:$0xff] %v2613
    %3299 = vst [vmem:[#allocation2 + $0x190] sm:$0xff] %v2737
    %3300 = vst [vmem:[#allocation2 + $0x198] sm:$0xff] %v2739
    %3301 = vst [vmem:[#allocation2 + $0x1a0] sm:$0xff] %v2863
    %3302 = vst [vmem:[#allocation2 + $0x1a8] sm:$0xff] %v2865
    %3303 = vst [vmem:[#allocation2 + $0x1b0] sm:$0xff] %v2989
    %3304 = vst [vmem:[#allocation2 + $0x1b8] sm:$0xff] %v2991
    %3305 = vst [vmem:[#allocation2 + $0x1c0] sm:$0xff] %v3115
    %3306 = vst [vmem:[#allocation2 + $0x1c8] sm:$0xff] %v3117
    %3307 = vst [vmem:[#allocation2 + $0x1d0] sm:$0xff] %v3241
    %3308 = vst [vmem:[#allocation2 + $0x1d8] sm:$0xff] %v3243
    %3309 = vst [vmem:[#allocation2 + $0x1e0] sm:$0xff] %v2615
    %3310 = vst [vmem:[#allocation2 + $0x1e8] sm:$0xff] %v2617
    %3311 = vst [vmem:[#allocation2 + $0x1f0] sm:$0xff] %v2741
    %3312 = vst [vmem:[#allocation2 + $0x1f8] sm:$0xff] %v2743
    %3313 = vst [vmem:[#allocation2 + $0x200] sm:$0xff] %v2867
    %3314 = vst [vmem:[#allocation2 + $0x208] sm:$0xff] %v2869
    %3315 = vst [vmem:[#allocation2 + $0x210] sm:$0xff] %v2993
    %3316 = vst [vmem:[#allocation2 + $0x218] sm:$0xff] %v2995
    %3317 = vst [vmem:[#allocation2 + $0x220] sm:$0xff] %v3119
    %3318 = vst [vmem:[#allocation2 + $0x228] sm:$0xff] %v3121
    %3319 = vst [vmem:[#allocation2 + $0x230] sm:$0xff] %v3245
    %3320 = vst [vmem:[#allocation2 + $0x238] sm:$0xff] %v3247
    %v3321 = vld [vmem:[#allocation2] sm:$0xff]
    %v3322 = vld [vmem:[#allocation2 + $0x8] sm:$0xff]
    %v3323 = vld [vmem:[#allocation2 + $0x10] sm:$0xff]
    %v3324 = vld [vmem:[#allocation2 + $0x18] sm:$0xff]
    %v3325 = vld [vmem:[#allocation2 + $0x60] sm:$0x3]
    %v3326 = vld [vmem:[#allocation2 + $0x68] sm:$0x3]
    %v3327 = vld [vmem:[#allocation2 + $0x70] sm:$0x3]
    %v3328 = vld [vmem:[#allocation2 + $0x78] sm:$0x3]
    %v3329 = vld [vmem:[#allocation2 + $0x20] sm:$0xff]
    %v3330 = vld [vmem:[#allocation2 + $0x28] sm:$0xff]
    %v3331 = vld [vmem:[#allocation2 + $0x30] sm:$0xff]
    %v3332 = vld [vmem:[#allocation2 + $0x38] sm:$0xff]
    %v3333 = vld [vmem:[#allocation2 + $0x80] sm:$0x3]
    %v3334 = vld [vmem:[#allocation2 + $0x88] sm:$0x3]
    %v3335 = vld [vmem:[#allocation2 + $0x90] sm:$0x3]
    %v3336 = vld [vmem:[#allocation2 + $0x98] sm:$0x3]
    %v3337 = vld [vmem:[#allocation2 + $0x40] sm:$0xff]
    %v3338 = vld [vmem:[#allocation2 + $0x48] sm:$0xff]
    %v3339 = vld [vmem:[#allocation2 + $0x50] sm:$0xff]
    %v3340 = vld [vmem:[#allocation2 + $0x58] sm:$0xff]
    %v3341 = vld [vmem:[#allocation2 + $0xa0] sm:$0x3]
    %v3342 = vld [vmem:[#allocation2 + $0xa8] sm:$0x3]
    %v3343 = vld [vmem:[#allocation2 + $0xb0] sm:$0x3]
    %v3344 = vld [vmem:[#allocation2 + $0xb8] sm:$0x3]
    %3345 = vmatprep.subr.mxu0 %v3330
    %3346 = vmatpush1.xpose.msra.mxu0 %v3329
    %3347 = vmatprep.subr.mxu0 %v3334
    %3348 = vmatpush1.xpose.msra.mxu0 %v3333
    %3349 = vmatprep.subr.mxu0 0.0
    %3350 = vmatpush1.xpose.msra.mxu0 0.0
    %3351 = vmatprep.subr.mxu0 0.0
    %3352 = vmatpush1.xpose.msra.mxu0 0.0
    %3353 = vmatprep.subr.mxu0 0.0
    %3354 = vmatpush1.xpose.msra.mxu0 0.0
    %3355 = vmatprep.subr.mxu0 0.0
    %3356 = vmatpush1.xpose.msra.mxu0 0.0
    %3357 = vmatprep.subr.mxu0 0.0
    %3358 = vmatpush1.xpose.msra.mxu0 0.0
    %3359 = vmatprep.subr.mxu0 0.0
    %3360 = vmatpush1.xpose.msra.mxu0 0.0
    %3361 = vmatprep.subr.mxu0 0.0
    %3362 = vmatpush1.xpose.msra.mxu0 0.0
    %3363 = vmatprep.subr.mxu0 0.0
    %3364 = vmatpush1.xpose.msra.mxu0 0.0
    %3365 = vmatprep.subr.mxu0 0.0
    %3366 = vmatpush1.xpose.msra.mxu0 0.0
    %3367 = vmatprep.subr.mxu0 0.0
    %3368 = vmatpush1.xpose.msra.mxu0 0.0
    %3369 = vmatprep.subr.mxu0 0.0
    %3370 = vmatpush1.xpose.msra.mxu0 0.0
    %3371 = vmatprep.subr.mxu0 0.0
    %3372 = vmatpush1.xpose.msra.mxu0 0.0
    %3373 = vmatprep.subr.mxu0 0.0
    %3374 = vmatpush1.xpose.msra.mxu0 0.0
    %3375 = vmatprep.subr.mxu0 0.0
    %3376 = vmatpush1.xpose.msra.mxu0 0.0
    %3377 = vmatprep.subr.mxu0 0.0
    %3378 = vmatpush1.xpose.msra.mxu0 0.0
    %3379 = vmatprep.subr.mxu0 0.0
    %3380 = vmatpush1.xpose.msra.mxu0 0.0
    %3381 = vmatprep.subr.mxu0 0.0
    %3382 = vmatpush1.xpose.msra.mxu0 0.0
    %3383 = vmatprep.subr.mxu0 0.0
    %3384 = vmatpush1.xpose.msra.mxu0 0.0
    %3385 = vmatprep.subr.mxu0 0.0
    %3386 = vmatpush1.xpose.msra.mxu0 0.0
    %3387 = vmatprep.subr.mxu0 0.0
    %3388 = vmatpush1.xpose.msra.mxu0 0.0
    %3389 = vmatprep.subr.mxu0 0.0
    %3390 = vmatpush1.xpose.msra.mxu0 0.0
    %3391 = vmatprep.subr.mxu0 0.0
    %3392 = vmatpush1.xpose.msra.mxu0 0.0
    %3393 = vmatprep.subr.mxu0 0.0
    %3394 = vmatpush1.xpose.msra.mxu0 0.0
    %3395 = vmatprep.subr.mxu0 0.0
    %3396 = vmatpush1.xpose.msra.mxu0 0.0
    %3397 = vmatprep.subr.mxu0 0.0
    %3398 = vmatpush1.xpose.msra.mxu0 0.0
    %3399 = vmatprep.subr.mxu0 0.0
    %3400 = vmatpush1.xpose.msra.mxu0 0.0
    %3401 = vmatprep.subr.mxu0 0.0
    %3402 = vmatpush1.xpose.msra.mxu0 0.0
    %3403 = vmatprep.subr.mxu0 0.0
    %3404 = vmatpush1.xpose.msra.mxu0 0.0
    %3405 = vmatprep.subr.mxu0 0.0
    %3406 = vmatpush1.xpose.msra.mxu0 0.0
    %3407 = vmatprep.subr.mxu0 0.0
    %3408 = vmatpush1.xpose.msra.mxu0 0.0
    %3409 = vmatprep.mubr.f32.mxu0 %v3322
    %3410 = vmatmul.mubr.f32.gmra.mrb[0].mxu0 %v3321
    %v3411 = vpop.f32.mrb[0].mxu0
    %v3412 = vadd.f32 0.0, %v3411
    %v3413 = vpop.f32.mrb[0].mxu0
    %3414 = vmatprep.mubr.f32.mxu0 %v3326
    %3415 = vmatmul.mubr.f32.gmra.mrb[0].mxu0 %v3325
    %v3416 = vpop.f32.mrb[0].mxu0
    %v3417 = vadd.f32 0.0, %v3416
    %v3418 = vpop.f32.mrb[0].mxu0
    %3419 = vdwg.mxu0
    %3420 = vmatprep.subr.mxu0 %v3332
    %3421 = vmatpush1.xpose.msra.mxu0 %v3331
    %3422 = vmatprep.subr.mxu0 %v3336
    %3423 = vmatpush1.xpose.msra.mxu0 %v3335
    %3424 = vmatprep.subr.mxu0 0.0
    %3425 = vmatpush1.xpose.msra.mxu0 0.0
    %3426 = vmatprep.subr.mxu0 0.0
    %3427 = vmatpush1.xpose.msra.mxu0 0.0
    %3428 = vmatprep.subr.mxu0 0.0
    %3429 = vmatpush1.xpose.msra.mxu0 0.0
    %3430 = vmatprep.subr.mxu0 0.0
    %3431 = vmatpush1.xpose.msra.mxu0 0.0
    %3432 = vmatprep.subr.mxu0 0.0
    %3433 = vmatpush1.xpose.msra.mxu0 0.0
    %3434 = vmatprep.subr.mxu0 0.0
    %3435 = vmatpush1.xpose.msra.mxu0 0.0
    %3436 = vmatprep.subr.mxu0 0.0
    %3437 = vmatpush1.xpose.msra.mxu0 0.0
    %3438 = vmatprep.subr.mxu0 0.0
    %3439 = vmatpush1.xpose.msra.mxu0 0.0
    %3440 = vmatprep.subr.mxu0 0.0
    %3441 = vmatpush1.xpose.msra.mxu0 0.0
    %3442 = vmatprep.subr.mxu0 0.0
    %3443 = vmatpush1.xpose.msra.mxu0 0.0
    %3444 = vmatprep.subr.mxu0 0.0
    %3445 = vmatpush1.xpose.msra.mxu0 0.0
    %3446 = vmatprep.subr.mxu0 0.0
    %3447 = vmatpush1.xpose.msra.mxu0 0.0
    %3448 = vmatprep.subr.mxu0 0.0
    %3449 = vmatpush1.xpose.msra.mxu0 0.0
    %3450 = vmatprep.subr.mxu0 0.0
    %3451 = vmatpush1.xpose.msra.mxu0 0.0
    %3452 = vmatprep.subr.mxu0 0.0
    %3453 = vmatpush1.xpose.msra.mxu0 0.0
    %3454 = vmatprep.subr.mxu0 0.0
    %3455 = vmatpush1.xpose.msra.mxu0 0.0
    %3456 = vmatprep.subr.mxu0 0.0
    %3457 = vmatpush1.xpose.msra.mxu0 0.0
    %3458 = vmatprep.subr.mxu0 0.0
    %3459 = vmatpush1.xpose.msra.mxu0 0.0
    %3460 = vmatprep.subr.mxu0 0.0
    %3461 = vmatpush1.xpose.msra.mxu0 0.0
    %3462 = vmatprep.subr.mxu0 0.0
    %3463 = vmatpush1.xpose.msra.mxu0 0.0
    %3464 = vmatprep.subr.mxu0 0.0
    %3465 = vmatpush1.xpose.msra.mxu0 0.0
    %3466 = vmatprep.subr.mxu0 0.0
    %3467 = vmatpush1.xpose.msra.mxu0 0.0
    %3468 = vmatprep.subr.mxu0 0.0
    %3469 = vmatpush1.xpose.msra.mxu0 0.0
    %3470 = vmatprep.subr.mxu0 0.0
    %3471 = vmatpush1.xpose.msra.mxu0 0.0
    %3472 = vmatprep.subr.mxu0 0.0
    %3473 = vmatpush1.xpose.msra.mxu0 0.0
    %3474 = vmatprep.subr.mxu0 0.0
    %3475 = vmatpush1.xpose.msra.mxu0 0.0
    %3476 = vmatprep.subr.mxu0 0.0
    %3477 = vmatpush1.xpose.msra.mxu0 0.0
    %3478 = vmatprep.subr.mxu0 0.0
    %3479 = vmatpush1.xpose.msra.mxu0 0.0
    %3480 = vmatprep.subr.mxu0 0.0
    %3481 = vmatpush1.xpose.msra.mxu0 0.0
    %3482 = vmatprep.subr.mxu0 0.0
    %3483 = vmatpush1.xpose.msra.mxu0 0.0
    %3484 = vmatprep.mubr.f32.mxu0 %v3324
    %3485 = vmatmul.mubr.f32.gmra.mrb[0].mxu0 %v3323
    %v3486 = vpop.f32.mrb[0].mxu0
    %v3487 = vadd.f32 %v3412, %v3486
    %v3488 = vpop.f32.mrb[0].mxu0
    %3489 = vmatprep.mubr.f32.mxu0 %v3328
    %3490 = vmatmul.mubr.f32.gmra.mrb[0].mxu0 %v3327
    %v3491 = vpop.f32.mrb[0].mxu0
    %v3492 = vadd.f32 %v3417, %v3491
    %v3493 = vpop.f32.mrb[0].mxu0
    %3494 = vdwg.mxu0
    %v3495 = vmul.f32 %v3487, 0.044194173
    %v3496 = vmul.f32 %v3492, 0.044194173
    %vm3497 = vcmask 80896
    %v3498 = vsel %vm3497, %v3495, -inf
    %3499 = vmax.xlane.f32.xlu0 %v3498
    %v3500 = vpop.xlane.xlu0 %3499
    %vm3501 = vcmask 74752
    %v3502 = vsel %vm3501, %v3496, -inf
    %3503 = vmax.xlane.f32.xlu0 %v3502
    %v3504 = vpop.xlane.xlu0 %3503
    %v3505 = vsub.f32 %v3495, %v3500
    %v3506 = vsub.f32 %v3496, %v3504
    %v3507 = vmul.f32 %v3505, 1.442695
    %v3508 = vpow.pop %v3507
    %v3509 = vmul.f32 %v3506, 1.442695
    %v3510 = vpow.pop %v3509
    %v3511 = vsel %vm3497, %v3508, 0.0
    %3512 = vadd.xlane.f32.xlu0 %v3511
    %v3513 = vpop.xlane.xlu0 %3512
    %v3514 = vsel %vm3501, %v3510, 0.0
    %3515 = vadd.xlane.f32.xlu0 %v3514
    %v3516 = vpop.xlane.xlu0 %3515
    %v3517 = vrcp.pop %v3513
    %v3518 = vrcp.pop %v3516
    %v3519 = vmul.f32 %v3508, %v3517
    %v3520 = vmul.f32 %v3510, %v3518
    %v3522 = vsel %vm3497, %v3519, 0
    %v3525 = vsel %vm3497, %v3520, 0
    %vm3527 = vcmask 1041408
    %v3529 = vsel %vm3527, %v3341, 0
    %v3532 = vsel %vm3527, %v3342, 0
    %v3535 = vsel %vm3527, %v3343, 0
    %v3538 = vsel %vm3527, %v3344, 0
    %3540 = vmatprep.subr.mxu0 %v3338
    %3541 = vmatpush1.msra.mxu0 %v3337
    %3542 = vmatprep.subr.mxu0 %v3532
    %3543 = vmatpush1.msra.mxu0 %v3529
    %3544 = vmatprep.subr.mxu0 0.0
    %3545 = vmatpush1.msra.mxu0 0.0
    %3546 = vmatprep.subr.mxu0 0.0
    %3547 = vmatpush1.msra.mxu0 0.0
    %3548 = vmatprep.subr.mxu0 0.0
    %3549 = vmatpush1.msra.mxu0 0.0
    %3550 = vmatprep.subr.mxu0 0.0
    %3551 = vmatpush1.msra.mxu0 0.0
    %3552 = vmatprep.subr.mxu0 0.0
    %3553 = vmatpush1.msra.mxu0 0.0
    %3554 = vmatprep.subr.mxu0 0.0
    %3555 = vmatpush1.msra.mxu0 0.0
    %3556 = vmatprep.subr.mxu0 0.0
    %3557 = vmatpush1.msra.mxu0 0.0
    %3558 = vmatprep.subr.mxu0 0.0
    %3559 = vmatpush1.msra.mxu0 0.0
    %3560 = vmatprep.subr.mxu0 0.0
    %3561 = vmatpush1.msra.mxu0 0.0
    %3562 = vmatprep.subr.mxu0 0.0
    %3563 = vmatpush1.msra.mxu0 0.0
    %3564 = vmatprep.subr.mxu0 0.0
    %3565 = vmatpush1.msra.mxu0 0.0
    %3566 = vmatprep.subr.mxu0 0.0
    %3567 = vmatpush1.msra.mxu0 0.0
    %3568 = vmatprep.subr.mxu0 0.0
    %3569 = vmatpush1.msra.mxu0 0.0
    %3570 = vmatprep.subr.mxu0 0.0
    %3571 = vmatpush1.msra.mxu0 0.0
    %3572 = vmatprep.subr.mxu0 0.0
    %3573 = vmatpush1.msra.mxu0 0.0
    %3574 = vmatprep.subr.mxu0 0.0
    %3575 = vmatpush1.msra.mxu0 0.0
    %3576 = vmatprep.subr.mxu0 0.0
    %3577 = vmatpush1.msra.mxu0 0.0
    %3578 = vmatprep.subr.mxu0 0.0
    %3579 = vmatpush1.msra.mxu0 0.0
    %3580 = vmatprep.subr.mxu0 0.0
    %3581 = vmatpush1.msra.mxu0 0.0
    %3582 = vmatprep.subr.mxu0 0.0
    %3583 = vmatpush1.msra.mxu0 0.0
    %3584 = vmatprep.subr.mxu0 0.0
    %3585 = vmatpush1.msra.mxu0 0.0
    %3586 = vmatprep.subr.mxu0 0.0
    %3587 = vmatpush1.msra.mxu0 0.0
    %3588 = vmatprep.subr.mxu0 0.0
    %3589 = vmatpush1.msra.mxu0 0.0
    %3590 = vmatprep.subr.mxu0 0.0
    %3591 = vmatpush1.msra.mxu0 0.0
    %3592 = vmatprep.subr.mxu0 0.0
    %3593 = vmatpush1.msra.mxu0 0.0
    %3594 = vmatprep.subr.mxu0 0.0
    %3595 = vmatpush1.msra.mxu0 0.0
    %3596 = vmatprep.subr.mxu0 0.0
    %3597 = vmatpush1.msra.mxu0 0.0
    %3598 = vmatprep.subr.mxu0 0.0
    %3599 = vmatpush1.msra.mxu0 0.0
    %3600 = vmatprep.subr.mxu0 0.0
    %3601 = vmatpush1.msra.mxu0 0.0
    %3602 = vmatprep.subr.mxu0 0.0
    %3603 = vmatpush1.msra.mxu0 0.0
    %3604 = vmatprep.mubr.f32.mxu0 0.0
    %3605 = vmatmul.mubr.f32.gmra.mrb[0].mxu0 %v3522
    %v3606 = vpop.f32.mrb[0].mxu0
    %v3607 = vadd.f32 0.0, %v3606
    %v3608 = vpop.f32.mrb[0].mxu0
    %v3609 = vadd.f32 0.0, %v3608
    %3610 = vmatprep.mubr.f32.mxu0 0.0
    %3611 = vmatmul.mubr.f32.gmra.mrb[0].mxu0 %v3525
    %v3612 = vpop.f32.mrb[0].mxu0
    %v3613 = vadd.f32 0.0, %v3612
    %v3614 = vpop.f32.mrb[0].mxu0
    %v3615 = vadd.f32 0.0, %v3614
    %3616 = vdwg.mxu0
    %3617 = vmatprep.subr.mxu0 %v3340
    %3618 = vmatpush1.msra.mxu0 %v3339
    %3619 = vmatprep.subr.mxu0 %v3538
    %3620 = vmatpush1.msra.mxu0 %v3535
    %3621 = vmatprep.subr.mxu0 0.0
    %3622 = vmatpush1.msra.mxu0 0.0
    %3623 = vmatprep.subr.mxu0 0.0
    %3624 = vmatpush1.msra.mxu0 0.0
    %3625 = vmatprep.subr.mxu0 0.0
    %3626 = vmatpush1.msra.mxu0 0.0
    %3627 = vmatprep.subr.mxu0 0.0
    %3628 = vmatpush1.msra.mxu0 0.0
    %3629 = vmatprep.subr.mxu0 0.0
    %3630 = vmatpush1.msra.mxu0 0.0
    %3631 = vmatprep.subr.mxu0 0.0
    %3632 = vmatpush1.msra.mxu0 0.0
    %3633 = vmatprep.subr.mxu0 0.0
    %3634 = vmatpush1.msra.mxu0 0.0
    %3635 = vmatprep.subr.mxu0 0.0
    %3636 = vmatpush1.msra.mxu0 0.0
    %3637 = vmatprep.subr.mxu0 0.0
    %3638 = vmatpush1.msra.mxu0 0.0
    %3639 = vmatprep.subr.mxu0 0.0
    %3640 = vmatpush1.msra.mxu0 0.0
    %3641 = vmatprep.subr.mxu0 0.0
    %3642 = vmatpush1.msra.mxu0 0.0
    %3643 = vmatprep.subr.mxu0 0.0
    %3644 = vmatpush1.msra.mxu0 0.0
    %3645 = vmatprep.subr.mxu0 0.0
    %3646 = vmatpush1.msra.mxu0 0.0
    %3647 = vmatprep.subr.mxu0 0.0
    %3648 = vmatpush1.msra.mxu0 0.0
    %3649 = vmatprep.subr.mxu0 0.0
    %3650 = vmatpush1.msra.mxu0 0.0
    %3651 = vmatprep.subr.mxu0 0.0
    %3652 = vmatpush1.msra.mxu0 0.0
    %3653 = vmatprep.subr.mxu0 0.0
    %3654 = vmatpush1.msra.mxu0 0.0
    %3655 = vmatprep.subr.mxu0 0.0
    %3656 = vmatpush1.msra.mxu0 0.0
    %3657 = vmatprep.subr.mxu0 0.0
    %3658 = vmatpush1.msra.mxu0 0.0
    %3659 = vmatprep.subr.mxu0 0.0
    %3660 = vmatpush1.msra.mxu0 0.0
    %3661 = vmatprep.subr.mxu0 0.0
    %3662 = vmatpush1.msra.mxu0 0.0
    %3663 = vmatprep.subr.mxu0 0.0
    %3664 = vmatpush1.msra.mxu0 0.0
    %3665 = vmatprep.subr.mxu0 0.0
    %3666 = vmatpush1.msra.mxu0 0.0
    %3667 = vmatprep.subr.mxu0 0.0
    %3668 = vmatpush1.msra.mxu0 0.0
    %3669 = vmatprep.subr.mxu0 0.0
    %3670 = vmatpush1.msra.mxu0 0.0
    %3671 = vmatprep.subr.mxu0 0.0
    %3672 = vmatpush1.msra.mxu0 0.0
    %3673 = vmatprep.subr.mxu0 0.0
    %3674 = vmatpush1.msra.mxu0 0.0
    %3675 = vmatprep.subr.mxu0 0.0
    %3676 = vmatpush1.msra.mxu0 0.0
    %3677 = vmatprep.subr.mxu0 0.0
    %3678 = vmatpush1.msra.mxu0 0.0
    %3679 = vmatprep.subr.mxu0 0.0
    %3680 = vmatpush1.msra.mxu0 0.0
    %3681 = vmatprep.mubr.f32.mxu0 0.0
    %3682 = vmatmul.mubr.f32.gmra.mrb[0].mxu0 %v3522
    %v3683 = vpop.f32.mrb[0].mxu0
    %v3684 = vadd.f32 0.0, %v3683
    %v3685 = vpop.f32.mrb[0].mxu0
    %v3686 = vadd.f32 0.0, %v3685
    %3687 = vmatprep.mubr.f32.mxu0 0.0
    %3688 = vmatmul.mubr.f32.gmra.mrb[0].mxu0 %v3525
    %v3689 = vpop.f32.mrb[0].mxu0
    %v3690 = vadd.f32 0.0, %v3689
    %v3691 = vpop.f32.mrb[0].mxu0
    %v3692 = vadd.f32 0.0, %v3691
    %3693 = vdwg.mxu0
    %3694 = vst [vmem:[%s3] sm:$0xff] %v3607
    %3695 = vst [vmem:[%s3 + $0x8] sm:$0xff] %v3609
    %3696 = vst [vmem:[%s3 + $0x10] sm:$0xff] %v3684
    %3697 = vst [vmem:[%s3 + $0x18] sm:$0xff] %v3686
    %3698 = vst [vmem:[%s3 + $0x20] sm:$0x3] %v3613
    %3699 = vst [vmem:[%s3 + $0x28] sm:$0x3] %v3615
    %3700 = vst [vmem:[%s3 + $0x30] sm:$0x3] %v3690
    %3701 = vst [vmem:[%s3 + $0x38] sm:$0x3] %v3692
    %v3702 = vld [vmem:[#allocation2 + $0xc0] sm:$0xff]
    %v3703 = vld [vmem:[#allocation2 + $0xc8] sm:$0xff]
    %v3704 = vld [vmem:[#allocation2 + $0xd0] sm:$0xff]
    %v3705 = vld [vmem:[#allocation2 + $0xd8] sm:$0xff]
    %v3706 = vld [vmem:[#allocation2 + $0x120] sm:$0x3]
    %v3707 = vld [vmem:[#allocation2 + $0x128] sm:$0x3]
    %v3708 = vld [vmem:[#allocation2 + $0x130] sm:$0x3]
    %v3709 = vld [vmem:[#allocation2 + $0x138] sm:$0x3]
    %v3710 = vld [vmem:[#allocation2 + $0xe0] sm:$0xff]
    %v3711 = vld [vmem:[#allocation2 + $0xe8] sm:$0xff]
    %v3712 = vld [vmem:[#allocation2 + $0xf0] sm:$0xff]
    %v3713 = vld [vmem:[#allocation2 + $0xf8] sm:$0xff]
    %v3714 = vld [vmem:[#allocation2 + $0x140] sm:$0x3]
    %v3715 = vld [vmem:[#allocation2 + $0x148] sm:$0x3]
    %v3716 = vld [vmem:[#allocation2 + $0x150] sm:$0x3]
    %v3717 = vld [vmem:[#allocation2 + $0x158] sm:$0x3]
    %v3718 = vld [vmem:[#allocation2 + $0x100] sm:$0xff]
    %v3719 = vld [vmem:[#allocation2 + $0x108] sm:$0xff]
    %v3720 = vld [vmem:[#allocation2 + $0x110] sm:$0xff]
    %v3721 = vld [vmem:[#allocation2 + $0x118] sm:$0xff]
    %v3722 = vld [vmem:[#allocation2 + $0x160] sm:$0x3]
    %v3723 = vld [vmem:[#allocation2 + $0x168] sm:$0x3]
    %v3724 = vld [vmem:[#allocation2 + $0x170] sm:$0x3]
    %v3725 = vld [vmem:[#allocation2 + $0x178] sm:$0x3]
    %3726 = vmatprep.subr.mxu0 %v3711
    %3727 = vmatpush1.xpose.msra.mxu0 %v3710
    %3728 = vmatprep.subr.mxu0 %v3715
    %3729 = vmatpush1.xpose.msra.mxu0 %v3714
    %3730 = vmatprep.subr.mxu0 0.0
    %3731 = vmatpush1.xpose.msra.mxu0 0.0
    %3732 = vmatprep.subr.mxu0 0.0
    %3733 = vmatpush1.xpose.msra.mxu0 0.0
    %3734 = vmatprep.subr.mxu0 0.0
    %3735 = vmatpush1.xpose.msra.mxu0 0.0
    %3736 = vmatprep.subr.mxu0 0.0
    %3737 = vmatpush1.xpose.msra.mxu0 0.0
    %3738 = vmatprep.subr.mxu0 0.0
    %3739 = vmatpush1.xpose.msra.mxu0 0.0
    %3740 = vmatprep.subr.mxu0 0.0
    %3741 = vmatpush1.xpose.msra.mxu0 0.0
    %3742 = vmatprep.subr.mxu0 0.0
    %3743 = vmatpush1.xpose.msra.mxu0 0.0
    %3744 = vmatprep.subr.mxu0 0.0
    %3745 = vmatpush1.xpose.msra.mxu0 0.0
    %3746 = vmatprep.subr.mxu0 0.0
    %3747 = vmatpush1.xpose.msra.mxu0 0.0
    %3748 = vmatprep.subr.mxu0 0.0
    %3749 = vmatpush1.xpose.msra.mxu0 0.0
    %3750 = vmatprep.subr.mxu0 0.0
    %3751 = vmatpush1.xpose.msra.mxu0 0.0
    %3752 = vmatprep.subr.mxu0 0.0
    %3753 = vmatpush1.xpose.msra.mxu0 0.0
    %3754 = vmatprep.subr.mxu0 0.0
    %3755 = vmatpush1.xpose.msra.mxu0 0.0
    %3756 = vmatprep.subr.mxu0 0.0
    %3757 = vmatpush1.xpose.msra.mxu0 0.0
    %3758 = vmatprep.subr.mxu0 0.0
    %3759 = vmatpush1.xpose.msra.mxu0 0.0
    %3760 = vmatprep.subr.mxu0 0.0
    %3761 = vmatpush1.xpose.msra.mxu0 0.0
    %3762 = vmatprep.subr.mxu0 0.0
    %3763 = vmatpush1.xpose.msra.mxu0 0.0
    %3764 = vmatprep.subr.mxu0 0.0
    %3765 = vmatpush1.xpose.msra.mxu0 0.0
    %3766 = vmatprep.subr.mxu0 0.0
    %3767 = vmatpush1.xpose.msra.mxu0 0.0
    %3768 = vmatprep.subr.mxu0 0.0
    %3769 = vmatpush1.xpose.msra.mxu0 0.0
    %3770 = vmatprep.subr.mxu0 0.0
    %3771 = vmatpush1.xpose.msra.mxu0 0.0
    %3772 = vmatprep.subr.mxu0 0.0
    %3773 = vmatpush1.xpose.msra.mxu0 0.0
    %3774 = vmatprep.subr.mxu0 0.0
    %3775 = vmatpush1.xpose.msra.mxu0 0.0
    %3776 = vmatprep.subr.mxu0 0.0
    %3777 = vmatpush1.xpose.msra.mxu0 0.0
    %3778 = vmatprep.subr.mxu0 0.0
    %3779 = vmatpush1.xpose.msra.mxu0 0.0
    %3780 = vmatprep.subr.mxu0 0.0
    %3781 = vmatpush1.xpose.msra.mxu0 0.0
    %3782 = vmatprep.subr.mxu0 0.0
    %3783 = vmatpush1.xpose.msra.mxu0 0.0
    %3784 = vmatprep.subr.mxu0 0.0
    %3785 = vmatpush1.xpose.msra.mxu0 0.0
    %3786 = vmatprep.subr.mxu0 0.0
    %3787 = vmatpush1.xpose.msra.mxu0 0.0
    %3788 = vmatprep.subr.mxu0 0.0
    %3789 = vmatpush1.xpose.msra.mxu0 0.0
    %3790 = vmatprep.mubr.f32.mxu0 %v3703
    %3791 = vmatmul.mubr.f32.gmra.mrb[0].mxu0 %v3702
    %v3792 = vpop.f32.mrb[0].mxu0
    %v3793 = vadd.f32 0.0, %v3792
    %v3794 = vpop.f32.mrb[0].mxu0
    %3795 = vmatprep.mubr.f32.mxu0 %v3707
    %3796 = vmatmul.mubr.f32.gmra.mrb[0].mxu0 %v3706
    %v3797 = vpop.f32.mrb[0].mxu0
    %v3798 = vadd.f32 0.0, %v3797
    %v3799 = vpop.f32.mrb[0].mxu0
    %3800 = vdwg.mxu0
    %3801 = vmatprep.subr.mxu0 %v3713
    %3802 = vmatpush1.xpose.msra.mxu0 %v3712
    %3803 = vmatprep.subr.mxu0 %v3717
    %3804 = vmatpush1.xpose.msra.mxu0 %v3716
    %3805 = vmatprep.subr.mxu0 0.0
    %3806 = vmatpush1.xpose.msra.mxu0 0.0
    %3807 = vmatprep.subr.mxu0 0.0
    %3808 = vmatpush1.xpose.msra.mxu0 0.0
    %3809 = vmatprep.subr.mxu0 0.0
    %3810 = vmatpush1.xpose.msra.mxu0 0.0
    %3811 = vmatprep.subr.mxu0 0.0
    %3812 = vmatpush1.xpose.msra.mxu0 0.0
    %3813 = vmatprep.subr.mxu0 0.0
    %3814 = vmatpush1.xpose.msra.mxu0 0.0
    %3815 = vmatprep.subr.mxu0 0.0
    %3816 = vmatpush1.xpose.msra.mxu0 0.0
    %3817 = vmatprep.subr.mxu0 0.0
    %3818 = vmatpush1.xpose.msra.mxu0 0.0
    %3819 = vmatprep.subr.mxu0 0.0
    %3820 = vmatpush1.xpose.msra.mxu0 0.0
    %3821 = vmatprep.subr.mxu0 0.0
    %3822 = vmatpush1.xpose.msra.mxu0 0.0
    %3823 = vmatprep.subr.mxu0 0.0
    %3824 = vmatpush1.xpose.msra.mxu0 0.0
    %3825 = vmatprep.subr.mxu0 0.0
    %3826 = vmatpush1.xpose.msra.mxu0 0.0
    %3827 = vmatprep.subr.mxu0 0.0
    %3828 = vmatpush1.xpose.msra.mxu0 0.0
    %3829 = vmatprep.subr.mxu0 0.0
    %3830 = vmatpush1.xpose.msra.mxu0 0.0
    %3831 = vmatprep.subr.mxu0 0.0
    %3832 = vmatpush1.xpose.msra.mxu0 0.0
    %3833 = vmatprep.subr.mxu0 0.0
    %3834 = vmatpush1.xpose.msra.mxu0 0.0
    %3835 = vmatprep.subr.mxu0 0.0
    %3836 = vmatpush1.xpose.msra.mxu0 0.0
    %3837 = vmatprep.subr.mxu0 0.0
    %3838 = vmatpush1.xpose.msra.mxu0 0.0
    %3839 = vmatprep.subr.mxu0 0.0
    %3840 = vmatpush1.xpose.msra.mxu0 0.0
    %3841 = vmatprep.subr.mxu0 0.0
    %3842 = vmatpush1.xpose.msra.mxu0 0.0
    %3843 = vmatprep.subr.mxu0 0.0
    %3844 = vmatpush1.xpose.msra.mxu0 0.0
    %3845 = vmatprep.subr.mxu0 0.0
    %3846 = vmatpush1.xpose.msra.mxu0 0.0
    %3847 = vmatprep.subr.mxu0 0.0
    %3848 = vmatpush1.xpose.msra.mxu0 0.0
    %3849 = vmatprep.subr.mxu0 0.0
    %3850 = vmatpush1.xpose.msra.mxu0 0.0
    %3851 = vmatprep.subr.mxu0 0.0
    %3852 = vmatpush1.xpose.msra.mxu0 0.0
    %3853 = vmatprep.subr.mxu0 0.0
    %3854 = vmatpush1.xpose.msra.mxu0 0.0
    %3855 = vmatprep.subr.mxu0 0.0
    %3856 = vmatpush1.xpose.msra.mxu0 0.0
    %3857 = vmatprep.subr.mxu0 0.0
    %3858 = vmatpush1.xpose.msra.mxu0 0.0
    %3859 = vmatprep.subr.mxu0 0.0
    %3860 = vmatpush1.xpose.msra.mxu0 0.0
    %3861 = vmatprep.subr.mxu0 0.0
    %3862 = vmatpush1.xpose.msra.mxu0 0.0
    %3863 = vmatprep.subr.mxu0 0.0
    %3864 = vmatpush1.xpose.msra.mxu0 0.0
    %3865 = vmatprep.mubr.f32.mxu0 %v3705
    %3866 = vmatmul.mubr.f32.gmra.mrb[0].mxu0 %v3704
    %v3867 = vpop.f32.mrb[0].mxu0
    %v3868 = vadd.f32 %v3793, %v3867
    %v3869 = vpop.f32.mrb[0].mxu0
    %3870 = vmatprep.mubr.f32.mxu0 %v3709
    %3871 = vmatmul.mubr.f32.gmra.mrb[0].mxu0 %v3708
    %v3872 = vpop.f32.mrb[0].mxu0
    %v3873 = vadd.f32 %v3798, %v3872
    %v3874 = vpop.f32.mrb[0].mxu0
    %3875 = vdwg.mxu0
    %v3876 = vmul.f32 %v3868, 0.044194173
    %v3877 = vmul.f32 %v3873, 0.044194173
    %v3878 = vsel %vm3497, %v3876, -inf
    %3879 = vmax.xlane.f32.xlu0 %v3878
    %v3880 = vpop.xlane.xlu0 %3879
    %v3881 = vsel %vm3501, %v3877, -inf
    %3882 = vmax.xlane.f32.xlu0 %v3881
    %v3883 = vpop.xlane.xlu0 %3882
    %v3884 = vsub.f32 %v3876, %v3880
    %v3885 = vsub.f32 %v3877, %v3883
    %v3886 = vmul.f32 %v3884, 1.442695
    %v3887 = vpow.pop %v3886
    %v3888 = vmul.f32 %v3885, 1.442695
    %v3889 = vpow.pop %v3888
    %v3890 = vsel %vm3497, %v3887, 0.0
    %3891 = vadd.xlane.f32.xlu0 %v3890
    %v3892 = vpop.xlane.xlu0 %3891
    %v3893 = vsel %vm3501, %v3889, 0.0
    %3894 = vadd.xlane.f32.xlu0 %v3893
    %v3895 = vpop.xlane.xlu0 %3894
    %v3896 = vrcp.pop %v3892
    %v3897 = vrcp.pop %v3895
    %v3898 = vmul.f32 %v3887, %v3896
    %v3899 = vmul.f32 %v3889, %v3897
    %v3901 = vsel %vm3497, %v3898, 0
    %v3904 = vsel %vm3497, %v3899, 0
    %v3907 = vsel %vm3527, %v3722, 0
    %v3910 = vsel %vm3527, %v3723, 0
    %v3913 = vsel %vm3527, %v3724, 0
    %v3916 = vsel %vm3527, %v3725, 0
    %3918 = vmatprep.subr.mxu0 %v3719
    %3919 = vmatpush1.msra.mxu0 %v3718
    %3920 = vmatprep.subr.mxu0 %v3910
    %3921 = vmatpush1.msra.mxu0 %v3907
    %3922 = vmatprep.subr.mxu0 0.0
    %3923 = vmatpush1.msra.mxu0 0.0
    %3924 = vmatprep.subr.mxu0 0.0
    %3925 = vmatpush1.msra.mxu0 0.0
    %3926 = vmatprep.subr.mxu0 0.0
    %3927 = vmatpush1.msra.mxu0 0.0
    %3928 = vmatprep.subr.mxu0 0.0
    %3929 = vmatpush1.msra.mxu0 0.0
    %3930 = vmatprep.subr.mxu0 0.0
    %3931 = vmatpush1.msra.mxu0 0.0
    %3932 = vmatprep.subr.mxu0 0.0
    %3933 = vmatpush1.msra.mxu0 0.0
    %3934 = vmatprep.subr.mxu0 0.0
    %3935 = vmatpush1.msra.mxu0 0.0
    %3936 = vmatprep.subr.mxu0 0.0
    %3937 = vmatpush1.msra.mxu0 0.0
    %3938 = vmatprep.subr.mxu0 0.0
    %3939 = vmatpush1.msra.mxu0 0.0
    %3940 = vmatprep.subr.mxu0 0.0
    %3941 = vmatpush1.msra.mxu0 0.0
    %3942 = vmatprep.subr.mxu0 0.0
    %3943 = vmatpush1.msra.mxu0 0.0
    %3944 = vmatprep.subr.mxu0 0.0
    %3945 = vmatpush1.msra.mxu0 0.0
    %3946 = vmatprep.subr.mxu0 0.0
    %3947 = vmatpush1.msra.mxu0 0.0
    %3948 = vmatprep.subr.mxu0 0.0
    %3949 = vmatpush1.msra.mxu0 0.0
    %3950 = vmatprep.subr.mxu0 0.0
    %3951 = vmatpush1.msra.mxu0 0.0
    %3952 = vmatprep.subr.mxu0 0.0
    %3953 = vmatpush1.msra.mxu0 0.0
    %3954 = vmatprep.subr.mxu0 0.0
    %3955 = vmatpush1.msra.mxu0 0.0
    %3956 = vmatprep.subr.mxu0 0.0
    %3957 = vmatpush1.msra.mxu0 0.0
    %3958 = vmatprep.subr.mxu0 0.0
    %3959 = vmatpush1.msra.mxu0 0.0
    %3960 = vmatprep.subr.mxu0 0.0
    %3961 = vmatpush1.msra.mxu0 0.0
    %3962 = vmatprep.subr.mxu0 0.0
    %3963 = vmatpush1.msra.mxu0 0.0
    %3964 = vmatprep.subr.mxu0 0.0
    %3965 = vmatpush1.msra.mxu0 0.0
    %3966 = vmatprep.subr.mxu0 0.0
    %3967 = vmatpush1.msra.mxu0 0.0
    %3968 = vmatprep.subr.mxu0 0.0
    %3969 = vmatpush1.msra.mxu0 0.0
    %3970 = vmatprep.subr.mxu0 0.0
    %3971 = vmatpush1.msra.mxu0 0.0
    %3972 = vmatprep.subr.mxu0 0.0
    %3973 = vmatpush1.msra.mxu0 0.0
    %3974 = vmatprep.subr.mxu0 0.0
    %3975 = vmatpush1.msra.mxu0 0.0
    %3976 = vmatprep.subr.mxu0 0.0
    %3977 = vmatpush1.msra.mxu0 0.0
    %3978 = vmatprep.subr.mxu0 0.0
    %3979 = vmatpush1.msra.mxu0 0.0
    %3980 = vmatprep.subr.mxu0 0.0
    %3981 = vmatpush1.msra.mxu0 0.0
    %3982 = vmatprep.mubr.f32.mxu0 0.0
    %3983 = vmatmul.mubr.f32.gmra.mrb[0].mxu0 %v3901
    %v3984 = vpop.f32.mrb[0].mxu0
    %v3985 = vadd.f32 0.0, %v3984
    %v3986 = vpop.f32.mrb[0].mxu0
    %v3987 = vadd.f32 0.0, %v3986
    %3988 = vmatprep.mubr.f32.mxu0 0.0
    %3989 = vmatmul.mubr.f32.gmra.mrb[0].mxu0 %v3904
    %v3990 = vpop.f32.mrb[0].mxu0
    %v3991 = vadd.f32 0.0, %v3990
    %v3992 = vpop.f32.mrb[0].mxu0
    %v3993 = vadd.f32 0.0, %v3992
    %3994 = vdwg.mxu0
    %3995 = vmatprep.subr.mxu0 %v3721
    %3996 = vmatpush1.msra.mxu0 %v3720
    %3997 = vmatprep.subr.mxu0 %v3916
    %3998 = vmatpush1.msra.mxu0 %v3913
    %3999 = vmatprep.subr.mxu0 0.0
    %4000 = vmatpush1.msra.mxu0 0.0
    %4001 = vmatprep.subr.mxu0 0.0
    %4002 = vmatpush1.msra.mxu0 0.0
    %4003 = vmatprep.subr.mxu0 0.0
    %4004 = vmatpush1.msra.mxu0 0.0
    %4005 = vmatprep.subr.mxu0 0.0
    %4006 = vmatpush1.msra.mxu0 0.0
    %4007 = vmatprep.subr.mxu0 0.0
    %4008 = vmatpush1.msra.mxu0 0.0
    %4009 = vmatprep.subr.mxu0 0.0
    %4010 = vmatpush1.msra.mxu0 0.0
    %4011 = vmatprep.subr.mxu0 0.0
    %4012 = vmatpush1.msra.mxu0 0.0
    %4013 = vmatprep.subr.mxu0 0.0
    %4014 = vmatpush1.msra.mxu0 0.0
    %4015 = vmatprep.subr.mxu0 0.0
    %4016 = vmatpush1.msra.mxu0 0.0
    %4017 = vmatprep.subr.mxu0 0.0
    %4018 = vmatpush1.msra.mxu0 0.0
    %4019 = vmatprep.subr.mxu0 0.0
    %4020 = vmatpush1.msra.mxu0 0.0
    %4021 = vmatprep.subr.mxu0 0.0
    %4022 = vmatpush1.msra.mxu0 0.0
    %4023 = vmatprep.subr.mxu0 0.0
    %4024 = vmatpush1.msra.mxu0 0.0
    %4025 = vmatprep.subr.mxu0 0.0
    %4026 = vmatpush1.msra.mxu0 0.0
    %4027 = vmatprep.subr.mxu0 0.0
    %4028 = vmatpush1.msra.mxu0 0.0
    %4029 = vmatprep.subr.mxu0 0.0
    %4030 = vmatpush1.msra.mxu0 0.0
    %4031 = vmatprep.subr.mxu0 0.0
    %4032 = vmatpush1.msra.mxu0 0.0
    %4033 = vmatprep.subr.mxu0 0.0
    %4034 = vmatpush1.msra.mxu0 0.0
    %4035 = vmatprep.subr.mxu0 0.0
    %4036 = vmatpush1.msra.mxu0 0.0
    %4037 = vmatprep.subr.mxu0 0.0
    %4038 = vmatpush1.msra.mxu0 0.0
    %4039 = vmatprep.subr.mxu0 0.0
    %4040 = vmatpush1.msra.mxu0 0.0
    %4041 = vmatprep.subr.mxu0 0.0
    %4042 = vmatpush1.msra.mxu0 0.0
    %4043 = vmatprep.subr.mxu0 0.0
    %4044 = vmatpush1.msra.mxu0 0.0
    %4045 = vmatprep.subr.mxu0 0.0
    %4046 = vmatpush1.msra.mxu0 0.0
    %4047 = vmatprep.subr.mxu0 0.0
    %4048 = vmatpush1.msra.mxu0 0.0
    %4049 = vmatprep.subr.mxu0 0.0
    %4050 = vmatpush1.msra.mxu0 0.0
    %4051 = vmatprep.subr.mxu0 0.0
    %4052 = vmatpush1.msra.mxu0 0.0
    %4053 = vmatprep.subr.mxu0 0.0
    %4054 = vmatpush1.msra.mxu0 0.0
    %4055 = vmatprep.subr.mxu0 0.0
    %4056 = vmatpush1.msra.mxu0 0.0
    %4057 = vmatprep.subr.mxu0 0.0
    %4058 = vmatpush1.msra.mxu0 0.0
    %4059 = vmatprep.mubr.f32.mxu0 0.0
    %4060 = vmatmul.mubr.f32.gmra.mrb[0].mxu0 %v3901
    %v4061 = vpop.f32.mrb[0].mxu0
    %v4062 = vadd.f32 0.0, %v4061
    %v4063 = vpop.f32.mrb[0].mxu0
    %v4064 = vadd.f32 0.0, %v4063
    %4065 = vmatprep.mubr.f32.mxu0 0.0
    %4066 = vmatmul.mubr.f32.gmra.mrb[0].mxu0 %v3904
    %v4067 = vpop.f32.mrb[0].mxu0
    %v4068 = vadd.f32 0.0, %v4067
    %v4069 = vpop.f32.mrb[0].mxu0
    %v4070 = vadd.f32 0.0, %v4069
    %4071 = vdwg.mxu0
    %s4072 = scalar_lea.vmem %s3, 64
    %4073 = vst [vmem:[%s4072] sm:$0xff] %v3985
    %4074 = vst [vmem:[%s4072 + $0x8] sm:$0xff] %v3987
    %4075 = vst [vmem:[%s4072 + $0x10] sm:$0xff] %v4062
    %4076 = vst [vmem:[%s4072 + $0x18] sm:$0xff] %v4064
    %4077 = vst [vmem:[%s4072 + $0x20] sm:$0x3] %v3991
    %4078 = vst [vmem:[%s4072 + $0x28] sm:$0x3] %v3993
    %4079 = vst [vmem:[%s4072 + $0x30] sm:$0x3] %v4068
    %4080 = vst [vmem:[%s4072 + $0x38] sm:$0x3] %v4070
    %v4081 = vld [vmem:[#allocation2 + $0x180] sm:$0xff]
    %v4082 = vld [vmem:[#allocation2 + $0x188] sm:$0xff]
    %v4083 = vld [vmem:[#allocation2 + $0x190] sm:$0xff]
    %v4084 = vld [vmem:[#allocation2 + $0x198] sm:$0xff]
    %v4085 = vld [vmem:[#allocation2 + $0x1e0] sm:$0x3]
    %v4086 = vld [vmem:[#allocation2 + $0x1e8] sm:$0x3]
    %v4087 = vld [vmem:[#allocation2 + $0x1f0] sm:$0x3]
    %v4088 = vld [vmem:[#allocation2 + $0x1f8] sm:$0x3]
    %v4089 = vld [vmem:[#allocation2 + $0x1a0] sm:$0xff]
    %v4090 = vld [vmem:[#allocation2 + $0x1a8] sm:$0xff]
    %v4091 = vld [vmem:[#allocation2 + $0x1b0] sm:$0xff]
    %v4092 = vld [vmem:[#allocation2 + $0x1b8] sm:$0xff]
    %v4093 = vld [vmem:[#allocation2 + $0x200] sm:$0x3]
    %v4094 = vld [vmem:[#allocation2 + $0x208] sm:$0x3]
    %v4095 = vld [vmem:[#allocation2 + $0x210] sm:$0x3]
    %v4096 = vld [vmem:[#allocation2 + $0x218] sm:$0x3]
    %v4097 = vld [vmem:[#allocation2 + $0x1c0] sm:$0xff]
    %v4098 = vld [vmem:[#allocation2 + $0x1c8] sm:$0xff]
    %v4099 = vld [vmem:[#allocation2 + $0x1d0] sm:$0xff]
    %v4100 = vld [vmem:[#allocation2 + $0x1d8] sm:$0xff]
    %v4101 = vld [vmem:[#allocation2 + $0x220] sm:$0x3]
    %v4102 = vld [vmem:[#allocation2 + $0x228] sm:$0x3]
    %v4103 = vld [vmem:[#allocation2 + $0x230] sm:$0x3]
    %v4104 = vld [vmem:[#allocation2 + $0x238] sm:$0x3]
    %4105 = vmatprep.subr.mxu0 %v4090
    %4106 = vmatpush1.xpose.msra.mxu0 %v4089
    %4107 = vmatprep.subr.mxu0 %v4094
    %4108 = vmatpush1.xpose.msra.mxu0 %v4093
    %4109 = vmatprep.subr.mxu0 0.0
    %4110 = vmatpush1.xpose.msra.mxu0 0.0
    %4111 = vmatprep.subr.mxu0 0.0
    %4112 = vmatpush1.xpose.msra.mxu0 0.0
    %4113 = vmatprep.subr.mxu0 0.0
    %4114 = vmatpush1.xpose.msra.mxu0 0.0
    %4115 = vmatprep.subr.mxu0 0.0
    %4116 = vmatpush1.xpose.msra.mxu0 0.0
    %4117 = vmatprep.subr.mxu0 0.0
    %4118 = vmatpush1.xpose.msra.mxu0 0.0
    %4119 = vmatprep.subr.mxu0 0.0
    %4120 = vmatpush1.xpose.msra.mxu0 0.0
    %4121 = vmatprep.subr.mxu0 0.0
    %4122 = vmatpush1.xpose.msra.mxu0 0.0
    %4123 = vmatprep.subr.mxu0 0.0
    %4124 = vmatpush1.xpose.msra.mxu0 0.0
    %4125 = vmatprep.subr.mxu0 0.0
    %4126 = vmatpush1.xpose.msra.mxu0 0.0
    %4127 = vmatprep.subr.mxu0 0.0
    %4128 = vmatpush1.xpose.msra.mxu0 0.0
    %4129 = vmatprep.subr.mxu0 0.0
    %4130 = vmatpush1.xpose.msra.mxu0 0.0
    %4131 = vmatprep.subr.mxu0 0.0
    %4132 = vmatpush1.xpose.msra.mxu0 0.0
    %4133 = vmatprep.subr.mxu0 0.0
    %4134 = vmatpush1.xpose.msra.mxu0 0.0
    %4135 = vmatprep.subr.mxu0 0.0
    %4136 = vmatpush1.xpose.msra.mxu0 0.0
    %4137 = vmatprep.subr.mxu0 0.0
    %4138 = vmatpush1.xpose.msra.mxu0 0.0
    %4139 = vmatprep.subr.mxu0 0.0
    %4140 = vmatpush1.xpose.msra.mxu0 0.0
    %4141 = vmatprep.subr.mxu0 0.0
    %4142 = vmatpush1.xpose.msra.mxu0 0.0
    %4143 = vmatprep.subr.mxu0 0.0
    %4144 = vmatpush1.xpose.msra.mxu0 0.0
    %4145 = vmatprep.subr.mxu0 0.0
    %4146 = vmatpush1.xpose.msra.mxu0 0.0
    %4147 = vmatprep.subr.mxu0 0.0
    %4148 = vmatpush1.xpose.msra.mxu0 0.0
    %4149 = vmatprep.subr.mxu0 0.0
    %4150 = vmatpush1.xpose.msra.mxu0 0.0
    %4151 = vmatprep.subr.mxu0 0.0
    %4152 = vmatpush1.xpose.msra.mxu0 0.0
    %4153 = vmatprep.subr.mxu0 0.0
    %4154 = vmatpush1.xpose.msra.mxu0 0.0
    %4155 = vmatprep.subr.mxu0 0.0
    %4156 = vmatpush1.xpose.msra.mxu0 0.0
    %4157 = vmatprep.subr.mxu0 0.0
    %4158 = vmatpush1.xpose.msra.mxu0 0.0
    %4159 = vmatprep.subr.mxu0 0.0
    %4160 = vmatpush1.xpose.msra.mxu0 0.0
    %4161 = vmatprep.subr.mxu0 0.0
    %4162 = vmatpush1.xpose.msra.mxu0 0.0
    %4163 = vmatprep.subr.mxu0 0.0
    %4164 = vmatpush1.xpose.msra.mxu0 0.0
    %4165 = vmatprep.subr.mxu0 0.0
    %4166 = vmatpush1.xpose.msra.mxu0 0.0
    %4167 = vmatprep.subr.mxu0 0.0
    %4168 = vmatpush1.xpose.msra.mxu0 0.0
    %4169 = vmatprep.mubr.f32.mxu0 %v4082
    %4170 = vmatmul.mubr.f32.gmra.mrb[0].mxu0 %v4081
    %v4171 = vpop.f32.mrb[0].mxu0
    %v4172 = vadd.f32 0.0, %v4171
    %v4173 = vpop.f32.mrb[0].mxu0
    %4174 = vmatprep.mubr.f32.mxu0 %v4086
    %4175 = vmatmul.mubr.f32.gmra.mrb[0].mxu0 %v4085
    %v4176 = vpop.f32.mrb[0].mxu0
    %v4177 = vadd.f32 0.0, %v4176
    %v4178 = vpop.f32.mrb[0].mxu0
    %4179 = vdwg.mxu0
    %4180 = vmatprep.subr.mxu0 %v4092
    %4181 = vmatpush1.xpose.msra.mxu0 %v4091
    %4182 = vmatprep.subr.mxu0 %v4096
    %4183 = vmatpush1.xpose.msra.mxu0 %v4095
    %4184 = vmatprep.subr.mxu0 0.0
    %4185 = vmatpush1.xpose.msra.mxu0 0.0
    %4186 = vmatprep.subr.mxu0 0.0
    %4187 = vmatpush1.xpose.msra.mxu0 0.0
    %4188 = vmatprep.subr.mxu0 0.0
    %4189 = vmatpush1.xpose.msra.mxu0 0.0
    %4190 = vmatprep.subr.mxu0 0.0
    %4191 = vmatpush1.xpose.msra.mxu0 0.0
    %4192 = vmatprep.subr.mxu0 0.0
    %4193 = vmatpush1.xpose.msra.mxu0 0.0
    %4194 = vmatprep.subr.mxu0 0.0
    %4195 = vmatpush1.xpose.msra.mxu0 0.0
    %4196 = vmatprep.subr.mxu0 0.0
    %4197 = vmatpush1.xpose.msra.mxu0 0.0
    %4198 = vmatprep.subr.mxu0 0.0
    %4199 = vmatpush1.xpose.msra.mxu0 0.0
    %4200 = vmatprep.subr.mxu0 0.0
    %4201 = vmatpush1.xpose.msra.mxu0 0.0
    %4202 = vmatprep.subr.mxu0 0.0
    %4203 = vmatpush1.xpose.msra.mxu0 0.0
    %4204 = vmatprep.subr.mxu0 0.0
    %4205 = vmatpush1.xpose.msra.mxu0 0.0
    %4206 = vmatprep.subr.mxu0 0.0
    %4207 = vmatpush1.xpose.msra.mxu0 0.0
    %4208 = vmatprep.subr.mxu0 0.0
    %4209 = vmatpush1.xpose.msra.mxu0 0.0
    %4210 = vmatprep.subr.mxu0 0.0
    %4211 = vmatpush1.xpose.msra.mxu0 0.0
    %4212 = vmatprep.subr.mxu0 0.0
    %4213 = vmatpush1.xpose.msra.mxu0 0.0
    %4214 = vmatprep.subr.mxu0 0.0
    %4215 = vmatpush1.xpose.msra.mxu0 0.0
    %4216 = vmatprep.subr.mxu0 0.0
    %4217 = vmatpush1.xpose.msra.mxu0 0.0
    %4218 = vmatprep.subr.mxu0 0.0
    %4219 = vmatpush1.xpose.msra.mxu0 0.0
    %4220 = vmatprep.subr.mxu0 0.0
    %4221 = vmatpush1.xpose.msra.mxu0 0.0
    %4222 = vmatprep.subr.mxu0 0.0
    %4223 = vmatpush1.xpose.msra.mxu0 0.0
    %4224 = vmatprep.subr.mxu0 0.0
    %4225 = vmatpush1.xpose.msra.mxu0 0.0
    %4226 = vmatprep.subr.mxu0 0.0
    %4227 = vmatpush1.xpose.msra.mxu0 0.0
    %4228 = vmatprep.subr.mxu0 0.0
    %4229 = vmatpush1.xpose.msra.mxu0 0.0
    %4230 = vmatprep.subr.mxu0 0.0
    %4231 = vmatpush1.xpose.msra.mxu0 0.0
    %4232 = vmatprep.subr.mxu0 0.0
    %4233 = vmatpush1.xpose.msra.mxu0 0.0
    %4234 = vmatprep.subr.mxu0 0.0
    %4235 = vmatpush1.xpose.msra.mxu0 0.0
    %4236 = vmatprep.subr.mxu0 0.0
    %4237 = vmatpush1.xpose.msra.mxu0 0.0
    %4238 = vmatprep.subr.mxu0 0.0
    %4239 = vmatpush1.xpose.msra.mxu0 0.0
    %4240 = vmatprep.subr.mxu0 0.0
    %4241 = vmatpush1.xpose.msra.mxu0 0.0
    %4242 = vmatprep.subr.mxu0 0.0
    %4243 = vmatpush1.xpose.msra.mxu0 0.0
    %4244 = vmatprep.mubr.f32.mxu0 %v4084
    %4245 = vmatmul.mubr.f32.gmra.mrb[0].mxu0 %v4083
    %v4246 = vpop.f32.mrb[0].mxu0
    %v4247 = vadd.f32 %v4172, %v4246
    %v4248 = vpop.f32.mrb[0].mxu0
    %4249 = vmatprep.mubr.f32.mxu0 %v4088
    %4250 = vmatmul.mubr.f32.gmra.mrb[0].mxu0 %v4087
    %v4251 = vpop.f32.mrb[0].mxu0
    %v4252 = vadd.f32 %v4177, %v4251
    %v4253 = vpop.f32.mrb[0].mxu0
    %4254 = vdwg.mxu0
    %v4255 = vmul.f32 %v4247, 0.044194173
    %v4256 = vmul.f32 %v4252, 0.044194173
    %v4257 = vsel %vm3497, %v4255, -inf
    %4258 = vmax.xlane.f32.xlu0 %v4257
    %v4259 = vpop.xlane.xlu0 %4258
    %v4260 = vsel %vm3501, %v4256, -inf
    %4261 = vmax.xlane.f32.xlu0 %v4260
    %v4262 = vpop.xlane.xlu0 %4261
    %v4263 = vsub.f32 %v4255, %v4259
    %v4264 = vsub.f32 %v4256, %v4262
    %v4265 = vmul.f32 %v4263, 1.442695
    %v4266 = vpow.pop %v4265
    %v4267 = vmul.f32 %v4264, 1.442695
    %v4268 = vpow.pop %v4267
    %v4269 = vsel %vm3497, %v4266, 0.0
    %4270 = vadd.xlane.f32.xlu0 %v4269
    %v4271 = vpop.xlane.xlu0 %4270
    %v4272 = vsel %vm3501, %v4268, 0.0
    %4273 = vadd.xlane.f32.xlu0 %v4272
    %v4274 = vpop.xlane.xlu0 %4273
    %v4275 = vrcp.pop %v4271
    %v4276 = vrcp.pop %v4274
    %v4277 = vmul.f32 %v4266, %v4275
    %v4278 = vmul.f32 %v4268, %v4276
    %v4280 = vsel %vm3497, %v4277, 0
    %v4283 = vsel %vm3497, %v4278, 0
    %v4286 = vsel %vm3527, %v4101, 0
    %v4289 = vsel %vm3527, %v4102, 0
    %v4292 = vsel %vm3527, %v4103, 0
    %v4295 = vsel %vm3527, %v4104, 0
    %4297 = vmatprep.subr.mxu0 %v4098
    %4298 = vmatpush1.msra.mxu0 %v4097
    %4299 = vmatprep.subr.mxu0 %v4289
    %4300 = vmatpush1.msra.mxu0 %v4286
    %4301 = vmatprep.subr.mxu0 0.0
    %4302 = vmatpush1.msra.mxu0 0.0
    %4303 = vmatprep.subr.mxu0 0.0
    %4304 = vmatpush1.msra.mxu0 0.0
    %4305 = vmatprep.subr.mxu0 0.0
    %4306 = vmatpush1.msra.mxu0 0.0
    %4307 = vmatprep.subr.mxu0 0.0
    %4308 = vmatpush1.msra.mxu0 0.0
    %4309 = vmatprep.subr.mxu0 0.0
    %4310 = vmatpush1.msra.mxu0 0.0
    %4311 = vmatprep.subr.mxu0 0.0
    %4312 = vmatpush1.msra.mxu0 0.0
    %4313 = vmatprep.subr.mxu0 0.0
    %4314 = vmatpush1.msra.mxu0 0.0
    %4315 = vmatprep.subr.mxu0 0.0
    %4316 = vmatpush1.msra.mxu0 0.0
    %4317 = vmatprep.subr.mxu0 0.0
    %4318 = vmatpush1.msra.mxu0 0.0
    %4319 = vmatprep.subr.mxu0 0.0
    %4320 = vmatpush1.msra.mxu0 0.0
    %4321 = vmatprep.subr.mxu0 0.0
    %4322 = vmatpush1.msra.mxu0 0.0
    %4323 = vmatprep.subr.mxu0 0.0
    %4324 = vmatpush1.msra.mxu0 0.0
    %4325 = vmatprep.subr.mxu0 0.0
    %4326 = vmatpush1.msra.mxu0 0.0
    %4327 = vmatprep.subr.mxu0 0.0
    %4328 = vmatpush1.msra.mxu0 0.0
    %4329 = vmatprep.subr.mxu0 0.0
    %4330 = vmatpush1.msra.mxu0 0.0
    %4331 = vmatprep.subr.mxu0 0.0
    %4332 = vmatpush1.msra.mxu0 0.0
    %4333 = vmatprep.subr.mxu0 0.0
    %4334 = vmatpush1.msra.mxu0 0.0
    %4335 = vmatprep.subr.mxu0 0.0
    %4336 = vmatpush1.msra.mxu0 0.0
    %4337 = vmatprep.subr.mxu0 0.0
    %4338 = vmatpush1.msra.mxu0 0.0
    %4339 = vmatprep.subr.mxu0 0.0
    %4340 = vmatpush1.msra.mxu0 0.0
    %4341 = vmatprep.subr.mxu0 0.0
    %4342 = vmatpush1.msra.mxu0 0.0
    %4343 = vmatprep.subr.mxu0 0.0
    %4344 = vmatpush1.msra.mxu0 0.0
    %4345 = vmatprep.subr.mxu0 0.0
    %4346 = vmatpush1.msra.mxu0 0.0
    %4347 = vmatprep.subr.mxu0 0.0
    %4348 = vmatpush1.msra.mxu0 0.0
    %4349 = vmatprep.subr.mxu0 0.0
    %4350 = vmatpush1.msra.mxu0 0.0
    %4351 = vmatprep.subr.mxu0 0.0
    %4352 = vmatpush1.msra.mxu0 0.0
    %4353 = vmatprep.subr.mxu0 0.0
    %4354 = vmatpush1.msra.mxu0 0.0
    %4355 = vmatprep.subr.mxu0 0.0
    %4356 = vmatpush1.msra.mxu0 0.0
    %4357 = vmatprep.subr.mxu0 0.0
    %4358 = vmatpush1.msra.mxu0 0.0
    %4359 = vmatprep.subr.mxu0 0.0
    %4360 = vmatpush1.msra.mxu0 0.0
    %4361 = vmatprep.mubr.f32.mxu0 0.0
    %4362 = vmatmul.mubr.f32.gmra.mrb[0].mxu0 %v4280
    %v4363 = vpop.f32.mrb[0].mxu0
    %v4364 = vadd.f32 0.0, %v4363
    %v4365 = vpop.f32.mrb[0].mxu0
    %v4366 = vadd.f32 0.0, %v4365
    %4367 = vmatprep.mubr.f32.mxu0 0.0
    %4368 = vmatmul.mubr.f32.gmra.mrb[0].mxu0 %v4283
    %v4369 = vpop.f32.mrb[0].mxu0
    %v4370 = vadd.f32 0.0, %v4369
    %v4371 = vpop.f32.mrb[0].mxu0
    %v4372 = vadd.f32 0.0, %v4371
    %4373 = vdwg.mxu0
    %4374 = vmatprep.subr.mxu0 %v4100
    %4375 = vmatpush1.msra.mxu0 %v4099
    %4376 = vmatprep.subr.mxu0 %v4295
    %4377 = vmatpush1.msra.mxu0 %v4292
    %4378 = vmatprep.subr.mxu0 0.0
    %4379 = vmatpush1.msra.mxu0 0.0
    %4380 = vmatprep.subr.mxu0 0.0
    %4381 = vmatpush1.msra.mxu0 0.0
    %4382 = vmatprep.subr.mxu0 0.0
    %4383 = vmatpush1.msra.mxu0 0.0
    %4384 = vmatprep.subr.mxu0 0.0
    %4385 = vmatpush1.msra.mxu0 0.0
    %4386 = vmatprep.subr.mxu0 0.0
    %4387 = vmatpush1.msra.mxu0 0.0
    %4388 = vmatprep.subr.mxu0 0.0
    %4389 = vmatpush1.msra.mxu0 0.0
    %4390 = vmatprep.subr.mxu0 0.0
    %4391 = vmatpush1.msra.mxu0 0.0
    %4392 = vmatprep.subr.mxu0 0.0
    %4393 = vmatpush1.msra.mxu0 0.0
    %4394 = vmatprep.subr.mxu0 0.0
    %4395 = vmatpush1.msra.mxu0 0.0
    %4396 = vmatprep.subr.mxu0 0.0
    %4397 = vmatpush1.msra.mxu0 0.0
    %4398 = vmatprep.subr.mxu0 0.0
    %4399 = vmatpush1.msra.mxu0 0.0
    %4400 = vmatprep.subr.mxu0 0.0
    %4401 = vmatpush1.msra.mxu0 0.0
    %4402 = vmatprep.subr.mxu0 0.0
    %4403 = vmatpush1.msra.mxu0 0.0
    %4404 = vmatprep.subr.mxu0 0.0
    %4405 = vmatpush1.msra.mxu0 0.0
    %4406 = vmatprep.subr.mxu0 0.0
    %4407 = vmatpush1.msra.mxu0 0.0
    %4408 = vmatprep.subr.mxu0 0.0
    %4409 = vmatpush1.msra.mxu0 0.0
    %4410 = vmatprep.subr.mxu0 0.0
    %4411 = vmatpush1.msra.mxu0 0.0
    %4412 = vmatprep.subr.mxu0 0.0
    %4413 = vmatpush1.msra.mxu0 0.0
    %4414 = vmatprep.subr.mxu0 0.0
    %4415 = vmatpush1.msra.mxu0 0.0
    %4416 = vmatprep.subr.mxu0 0.0
    %4417 = vmatpush1.msra.mxu0 0.0
    %4418 = vmatprep.subr.mxu0 0.0
    %4419 = vmatpush1.msra.mxu0 0.0
    %4420 = vmatprep.subr.mxu0 0.0
    %4421 = vmatpush1.msra.mxu0 0.0
    %4422 = vmatprep.subr.mxu0 0.0
    %4423 = vmatpush1.msra.mxu0 0.0
    %4424 = vmatprep.subr.mxu0 0.0
    %4425 = vmatpush1.msra.mxu0 0.0
    %4426 = vmatprep.subr.mxu0 0.0
    %4427 = vmatpush1.msra.mxu0 0.0
    %4428 = vmatprep.subr.mxu0 0.0
    %4429 = vmatpush1.msra.mxu0 0.0
    %4430 = vmatprep.subr.mxu0 0.0
    %4431 = vmatpush1.msra.mxu0 0.0
    %4432 = vmatprep.subr.mxu0 0.0
    %4433 = vmatpush1.msra.mxu0 0.0
    %4434 = vmatprep.subr.mxu0 0.0
    %4435 = vmatpush1.msra.mxu0 0.0
    %4436 = vmatprep.subr.mxu0 0.0
    %4437 = vmatpush1.msra.mxu0 0.0
    %4438 = vmatprep.mubr.f32.mxu0 0.0
    %4439 = vmatmul.mubr.f32.gmra.mrb[0].mxu0 %v4280
    %v4440 = vpop.f32.mrb[0].mxu0
    %v4441 = vadd.f32 0.0, %v4440
    %v4442 = vpop.f32.mrb[0].mxu0
    %v4443 = vadd.f32 0.0, %v4442
    %4444 = vmatprep.mubr.f32.mxu0 0.0
    %4445 = vmatmul.mubr.f32.gmra.mrb[0].mxu0 %v4283
    %v4446 = vpop.f32.mrb[0].mxu0
    %v4447 = vadd.f32 0.0, %v4446
    %v4448 = vpop.f32.mrb[0].mxu0
    %v4449 = vadd.f32 0.0, %v4448
    %4450 = vdwg.mxu0
    %s4451 = scalar_lea.vmem %s3, 128
    %4452 = vst [vmem:[%s4451] sm:$0xff] %v4364
    %4453 = vst [vmem:[%s4451 + $0x8] sm:$0xff] %v4366
    %4454 = vst [vmem:[%s4451 + $0x10] sm:$0xff] %v4441
    %4455 = vst [vmem:[%s4451 + $0x18] sm:$0xff] %v4443
    %4456 = vst [vmem:[%s4451 + $0x20] sm:$0x3] %v4370
    %4457 = vst [vmem:[%s4451 + $0x28] sm:$0x3] %v4372
    %4458 = vst [vmem:[%s4451 + $0x30] sm:$0x3] %v4447
    %4459 = vst [vmem:[%s4451 + $0x38] sm:$0x3] %v4449
    // Predicated region
    $region26: #{tpu_custom_call.1} parent=1 // pred_check
      _
    $region27: #{tpu_custom_call.1} parent=1 // pred_check_branch
      %4461 = sbr.rel (0) target = $region29
    $region28: #{tpu_custom_call.1} parent=1 // pred_region
      _
    $region29: #{tpu_custom_call.1} parent=1 // pred_fallthru
      _
    // Predicated region
    $region30: #{tpu_custom_call.1} parent=1 // pred_check
      _
    $region31: #{tpu_custom_call.1} parent=1 // pred_check_branch
      %4463 = sbr.rel (0) target = $region33
    $region32: #{tpu_custom_call.1} parent=1 // pred_region
      _
    $region33: #{tpu_custom_call.1} parent=1 // pred_fallthru
      _
    %4464 = vsyncpa [#allocation4], 1
    %4465 = vsyncpa [#allocation6], 1

</llo_original>
